<compile_context>
chip_gen: v7x
topology: tpu7x:2x2x1
jax: 0.10.0
libtpu: 0.0.40
codegen_flags: <defaults>
</compile_context>

<pallas_src>
import functools

import jax
import jax.numpy as jnp
from jax.experimental import pallas as pl
from jax.experimental.pallas import tpu as pltpu


def mlp_kernel(x_ref, w1_ref, b1_ref, w2_ref, b2_ref, w3_ref, b3_ref,
               w4_ref, b4_ref, o_ref, *, chunk):
    """Feature-major fused MLP.

    x_ref : (3, tile_n)   bf16  -- batch on the 128-lane axis
    wK_ref: (out, in)     bf16  -- MXU operands (w4_ref is a (W, 1) f32 column)
    bK_ref: (out, 1)      f32
    o_ref : (1, tile_n)   f32   -- lane-dense output slab
    """
    mxu_dtype = w2_ref.dtype
    tile_n = x_ref.shape[1]
    n_chunks = tile_n // chunk

    # Bounded 512-lane sub-slabs: each chunk's (W, chunk) f32 intermediate is
    # only ~16 vregs, keeping live ranges small so the MXU push cadence stays
    # the sole limiter.  Static offsets => zero-cost ref views (no dynamic
    # lane slicing to lower).
    for c in range(n_chunks):
        lo = c * chunk
        xc = x_ref[:, lo:lo + chunk]                               # (3, chunk) bf16

        # Dense(3 -> W) + ReLU   (bf16 MXU, f32 accumulate, f32 epilogue)
        h = jnp.dot(w1_ref[...], xc, preferred_element_type=jnp.float32)
        h = jnp.maximum(h + b1_ref[...], 0.0)                      # (W, chunk) f32

        # Dense(W -> W) + ReLU  (middle layer 1)
        h = jnp.dot(w2_ref[...], h.astype(mxu_dtype),
                    preferred_element_type=jnp.float32)
        h = jnp.maximum(h + b2_ref[...], 0.0)

        # Dense(W -> W) + ReLU  (middle layer 2)
        h = jnp.dot(w3_ref[...], h.astype(mxu_dtype),
                    preferred_element_type=jnp.float32)
        h = jnp.maximum(h + b3_ref[...], 0.0)

        # Dense(W -> 1): VPU multiply + sublane (XLU) reduction instead of an
        # M=1 MXU matmul; rides otherwise-idle slots.  Squeeze is wrapper glue.
        out = jnp.sum(w4_ref[...] * h, axis=0, keepdims=True) + b4_ref[...]
        o_ref[:, lo:lo + chunk] = out.astype(o_ref.dtype)          # (1, chunk)


def mlp_forward(x, params, *, tile_n=2048, chunk=512, mxu_dtype=jnp.bfloat16):
    """x: (N, 3).  Returns (N,) float32 — mirrors the trailing SqueezeLayer.

    tile_n / chunk must be multiples of the 128-lane width; tile_n must be a
    multiple of chunk.  N need NOT divide tile_n: the partial last block is
    handled by Pallas boundary clamping and sliced off at the end.
    """
    assert chunk % 128 == 0, "chunk must be a multiple of the 128-lane width"
    assert tile_n % chunk == 0, "tile_n must be a multiple of chunk"

    N = x.shape[0]
    (w1, b1), (w2, b2), (w3, b3), (w4, b4) = params
    W = w1.shape[1]

    n_blocks = pl.cdiv(N, tile_n)

    # Single fused transpose + cast pass over x (no separate pad pass).
    xt = x.T.astype(mxu_dtype)                                     # (3, N) bf16

    # Transposed weights (out, in) in the MXU dtype, column biases (out,1) f32.
    w1t = w1.T.astype(mxu_dtype)
    w2t = w2.T.astype(mxu_dtype)
    w3t = w3.T.astype(mxu_dtype)
    b1c = b1.reshape(W, 1).astype(jnp.float32)
    b2c = b2.reshape(W, 1).astype(jnp.float32)
    b3c = b3.reshape(W, 1).astype(jnp.float32)
    # Last layer stays f32 on the VPU/XLU path.
    w4c = w4.reshape(W, 1).astype(jnp.float32)
    b4c = b4.reshape(1, 1).astype(jnp.float32)

    # Whole-array VMEM operands (tiny; fetched once, not per grid step).
    vmem_whole = pl.BlockSpec(memory_space=pltpu.MemorySpace.VMEM)

    flops = 2 * N * (3 * W + W * W + W * W + W)
    weight_bytes = sum(int(a.size) * a.dtype.itemsize
                       for a in (w1t, b1c, w2t, b2c, w3t, b3c, w4c, b4c))
    bytes_accessed = int(xt.size) * xt.dtype.itemsize + N * 4 + weight_bytes

    kernel = functools.partial(mlp_kernel, chunk=chunk)

    out2d = pl.pallas_call(
        kernel,
        out_shape=jax.ShapeDtypeStruct((1, N), jnp.float32),
        grid=(n_blocks,),
        in_specs=[
            pl.BlockSpec((3, tile_n), lambda i: (0, i)),   # x tile (lane-dense)
            vmem_whole, vmem_whole,                        # layer 1 (W,3)/(W,1)
            vmem_whole, vmem_whole,                        # layer 2 (W,W)/(W,1)
            vmem_whole, vmem_whole,                        # layer 3 (W,W)/(W,1)
            vmem_whole, vmem_whole,                        # layer 4 (W,1)/(1,1)
        ],
        out_specs=pl.BlockSpec((1, tile_n), lambda i: (0, i)),
        compiler_params=pltpu.CompilerParams(
            dimension_semantics=("parallel",)),
        cost_estimate=pl.CostEstimate(flops=flops, transcendentals=0,
                                      bytes_accessed=bytes_accessed),
    )(xt, w1t, b1c, w2t, b2c, w3t, b3c, w4c, b4c)

    # SqueezeLayer + drop any boundary-block padding columns.
    return out2d[0, :N]


def init_params(key, layer_width=32):
    """Deterministic random init matching the module topology:
       Dense(3->W), ReLU, Dense(W->W), ReLU, Dense(W->W), ReLU, Dense(W->1), Squeeze
       (i.e. num_hidden_layers=3 -> num_middle_layers=2). Weights stored (in, out)
       as in the PyTorch DenseLayer (A.shape == (in, out))."""
    W = layer_width
    shapes = [(3, W), (W, W), (W, W), (W, 1)]
    params = []
    for shp in shapes:
        key, k_w, k_b = jax.random.split(key, 3)
        fan_in = shp[0]
        scale = (2.0 / fan_in) ** 0.5
        w = jax.random.normal(k_w, shp, dtype=jnp.float32) * scale
        b = jax.random.normal(k_b, (1, shp[1]), dtype=jnp.float32) * 0.01
        params.append((w, b))
    return params


def mlp_reference(x, params, mxu_dtype=None):
    """Pure-JAX reference.  If mxu_dtype is given, matmul operands are rounded
    to it (like the kernel) while accumulation / bias / ReLU stay f32; the
    last layer always runs in f32 (as in the kernel)."""
    def rnd(a):
        if mxu_dtype is None:
            return a
        return a.astype(mxu_dtype).astype(jnp.float32)

    (w1, b1), (w2, b2), (w3, b3), (w4, b4) = params
    h = x.astype(jnp.float32)
    h = jnp.maximum(rnd(h) @ rnd(w1) + b1, 0.0)
    h = jnp.maximum(rnd(h) @ rnd(w2) + b2, 0.0)
    h = jnp.maximum(rnd(h) @ rnd(w3) + b3, 0.0)
    out = h @ w4 + b4
    return out[:, 0]


if __name__ == "__main__":
    key = jax.random.PRNGKey(0)
    k_params, k_x = jax.random.split(key)

    layer_width = 32
    params = init_params(k_params, layer_width=layer_width)

    # N points in 3D (inside/outside query points). N deliberately NOT a
    # multiple of tile_n to exercise the partial-boundary block; grid depth 5
    # so pipelining / dual-TC splitting is exercised.  Production batches on
    # v7x should use n_blocks >= 16 for full dual-TC steady state.
    N = 10000
    x = jax.random.uniform(k_x, (N, 3), dtype=jnp.float32,
                           minval=-1.0, maxval=1.0)

    out = mlp_forward(x, params, tile_n=2048, chunk=512)
    out = jax.block_until_ready(out)
    assert out.shape == (N,)

    # Tight check against a reference that rounds matmul operands to bf16 the
    # same way the kernel does (f32 accumulation everywhere).
    ref_bf16 = mlp_reference(x, params, mxu_dtype=jnp.bfloat16)
    assert jnp.allclose(out, ref_bf16, atol=1e-4, rtol=1e-4), \
        "mismatch vs bf16-operand reference"

    # Loose sanity check against the pure-f32 reference (bf16 operand rounding
    # is the only source of deviation).
    ref_f32 = mlp_reference(x, params, mxu_dtype=None)
    assert jnp.allclose(out, ref_f32, atol=5e-2, rtol=5e-2), \
        "mismatch vs f32 reference"

    print("KERNEL_OK")
</pallas_src>

<mosaic_0001>
module attributes {stable_mosaic.version = 11 : i64} {
  func.func @mlp_kernel(%arg0: i32, %arg1: memref<3x2048xbf16, #tpu.memory_space<vmem>>, %arg2: memref<32x3xbf16, #tpu.memory_space<vmem>>, %arg3: memref<32x1xf32, #tpu.memory_space<vmem>>, %arg4: memref<32x32xbf16, #tpu.memory_space<vmem>>, %arg5: memref<32x1xf32, #tpu.memory_space<vmem>>, %arg6: memref<32x32xbf16, #tpu.memory_space<vmem>>, %arg7: memref<32x1xf32, #tpu.memory_space<vmem>>, %arg8: memref<32x1xf32, #tpu.memory_space<vmem>>, %arg9: memref<1x1xf32, #tpu.memory_space<vmem>>, %arg10: memref<1x2048xf32, #tpu.memory_space<vmem>>) attributes {dimension_semantics = [#tpu.dimension_semantics<parallel>], iteration_bounds = array<i64: 5>, scalar_prefetch = 0 : i64, scratch_operands = 0 : i64, tpu.core_type = #tpu.core_type<tc>, window_params = [{transform_indices = @transform_0, window_bounds = array<i64: 3, 2048>}, {pipeline_mode = #tpu.pipeline_mode<synchronous>, transform_indices = @transform_1, window_bounds = array<i64: 32, 3>}, {pipeline_mode = #tpu.pipeline_mode<synchronous>, transform_indices = @transform_2, window_bounds = array<i64: 32, 1>}, {pipeline_mode = #tpu.pipeline_mode<synchronous>, transform_indices = @transform_3, window_bounds = array<i64: 32, 32>}, {pipeline_mode = #tpu.pipeline_mode<synchronous>, transform_indices = @transform_4, window_bounds = array<i64: 32, 1>}, {pipeline_mode = #tpu.pipeline_mode<synchronous>, transform_indices = @transform_5, window_bounds = array<i64: 32, 32>}, {pipeline_mode = #tpu.pipeline_mode<synchronous>, transform_indices = @transform_6, window_bounds = array<i64: 32, 1>}, {pipeline_mode = #tpu.pipeline_mode<synchronous>, transform_indices = @transform_7, window_bounds = array<i64: 32, 1>}, {pipeline_mode = #tpu.pipeline_mode<synchronous>, transform_indices = @transform_8, window_bounds = array<i64: 1, 1>}, {transform_indices = @transform_9, window_bounds = array<i64: 1, 2048>}]} {
    %c0 = arith.constant 0 : index
    %c0_0 = arith.constant 0 : index
    %0 = vector.load %arg1[%c0, %c0_0] : memref<3x2048xbf16, #tpu.memory_space<vmem>>, vector<3x512xbf16>
    %c0_1 = arith.constant 0 : index
    %c0_2 = arith.constant 0 : index
    %1 = vector.load %arg2[%c0_1, %c0_2] : memref<32x3xbf16, #tpu.memory_space<vmem>>, vector<32x3xbf16>
    %cst = arith.constant dense<0.000000e+00> : vector<32x512xf32>
    %2 = tpu.matmul %1, %0, %cst {dimension_numbers = #tpu.dot_dimension_numbers<[1], [0], [0], [1], [0, 0, 1, 1], [], []>} : vector<32x3xbf16>, vector<3x512xbf16>, vector<32x512xf32> -> vector<32x512xf32>
    %c0_3 = arith.constant 0 : index
    %c0_4 = arith.constant 0 : index
    %3 = vector.load %arg3[%c0_3, %c0_4] : memref<32x1xf32, #tpu.memory_space<vmem>>, vector<32x1xf32>
    %4 = vector.broadcast %3 : vector<32x1xf32> to vector<32x512xf32>
    %5 = arith.addf %2, %4 : vector<32x512xf32>
    %cst_5 = arith.constant 0.000000e+00 : f32
    %6 = vector.broadcast %cst_5 : f32 to vector<32x512xf32>
    %7 = arith.maximumf %5, %6 : vector<32x512xf32>
    %c0_6 = arith.constant 0 : index
    %c0_7 = arith.constant 0 : index
    %8 = vector.load %arg4[%c0_6, %c0_7] : memref<32x32xbf16, #tpu.memory_space<vmem>>, vector<32x32xbf16>
    %9 = arith.truncf %7 : vector<32x512xf32> to vector<32x512xbf16>
    %cst_8 = arith.constant dense<0.000000e+00> : vector<32x512xf32>
    %10 = tpu.matmul %8, %9, %cst_8 {dimension_numbers = #tpu.dot_dimension_numbers<[1], [0], [0], [1], [0, 0, 1, 1], [], []>} : vector<32x32xbf16>, vector<32x512xbf16>, vector<32x512xf32> -> vector<32x512xf32>
    %c0_9 = arith.constant 0 : index
    %c0_10 = arith.constant 0 : index
    %11 = vector.load %arg5[%c0_9, %c0_10] : memref<32x1xf32, #tpu.memory_space<vmem>>, vector<32x1xf32>
    %12 = vector.broadcast %11 : vector<32x1xf32> to vector<32x512xf32>
    %13 = arith.addf %10, %12 : vector<32x512xf32>
    %cst_11 = arith.constant 0.000000e+00 : f32
    %14 = vector.broadcast %cst_11 : f32 to vector<32x512xf32>
    %15 = arith.maximumf %13, %14 : vector<32x512xf32>
    %c0_12 = arith.constant 0 : index
    %c0_13 = arith.constant 0 : index
    %16 = vector.load %arg6[%c0_12, %c0_13] : memref<32x32xbf16, #tpu.memory_space<vmem>>, vector<32x32xbf16>
    %17 = arith.truncf %15 : vector<32x512xf32> to vector<32x512xbf16>
    %cst_14 = arith.constant dense<0.000000e+00> : vector<32x512xf32>
    %18 = tpu.matmul %16, %17, %cst_14 {dimension_numbers = #tpu.dot_dimension_numbers<[1], [0], [0], [1], [0, 0, 1, 1], [], []>} : vector<32x32xbf16>, vector<32x512xbf16>, vector<32x512xf32> -> vector<32x512xf32>
    %c0_15 = arith.constant 0 : index
    %c0_16 = arith.constant 0 : index
    %19 = vector.load %arg7[%c0_15, %c0_16] : memref<32x1xf32, #tpu.memory_space<vmem>>, vector<32x1xf32>
    %20 = vector.broadcast %19 : vector<32x1xf32> to vector<32x512xf32>
    %21 = arith.addf %18, %20 : vector<32x512xf32>
    %cst_17 = arith.constant 0.000000e+00 : f32
    %22 = vector.broadcast %cst_17 : f32 to vector<32x512xf32>
    %23 = arith.maximumf %21, %22 : vector<32x512xf32>
    %c0_18 = arith.constant 0 : index
    %c0_19 = arith.constant 0 : index
    %24 = vector.load %arg8[%c0_18, %c0_19] : memref<32x1xf32, #tpu.memory_space<vmem>>, vector<32x1xf32>
    %25 = vector.broadcast %24 : vector<32x1xf32> to vector<32x512xf32>
    %26 = arith.mulf %25, %23 : vector<32x512xf32>
    %cst_20 = arith.constant dense<0.000000e+00> : vector<512xf32>
    %27 = vector.multi_reduction <add>, %26, %cst_20 [0] : vector<32x512xf32> to vector<512xf32>
    %28 = vector.shape_cast %27 : vector<512xf32> to vector<1x512xf32>
    %c0_21 = arith.constant 0 : index
    %c0_22 = arith.constant 0 : index
    %29 = vector.load %arg9[%c0_21, %c0_22] : memref<1x1xf32, #tpu.memory_space<vmem>>, vector<1x1xf32>
    %30 = vector.broadcast %29 : vector<1x1xf32> to vector<1x512xf32>
    %31 = arith.addf %28, %30 : vector<1x512xf32>
    %c0_23 = arith.constant 0 : index
    %c0_24 = arith.constant 0 : index
    %32 = vector.load %arg10[%c0_23, %c0_24] : memref<1x2048xf32, #tpu.memory_space<vmem>>, vector<1x512xf32>
    tpu.vector_store %arg10[%c0_23, %c0_24], %31 {strides = array<i32>} : memref<1x2048xf32, #tpu.memory_space<vmem>>, vector<1x512xf32>,
    %c0_25 = arith.constant 0 : index
    %c512 = arith.constant 512 : index
    %33 = vector.load %arg1[%c0_25, %c512] : memref<3x2048xbf16, #tpu.memory_space<vmem>>, vector<3x512xbf16>
    %c0_26 = arith.constant 0 : index
    %c0_27 = arith.constant 0 : index
    %34 = vector.load %arg2[%c0_26, %c0_27] : memref<32x3xbf16, #tpu.memory_space<vmem>>, vector<32x3xbf16>
    %cst_28 = arith.constant dense<0.000000e+00> : vector<32x512xf32>
    %35 = tpu.matmul %34, %33, %cst_28 {dimension_numbers = #tpu.dot_dimension_numbers<[1], [0], [0], [1], [0, 0, 1, 1], [], []>} : vector<32x3xbf16>, vector<3x512xbf16>, vector<32x512xf32> -> vector<32x512xf32>
    %c0_29 = arith.constant 0 : index
    %c0_30 = arith.constant 0 : index
    %36 = vector.load %arg3[%c0_29, %c0_30] : memref<32x1xf32, #tpu.memory_space<vmem>>, vector<32x1xf32>
    %37 = vector.broadcast %36 : vector<32x1xf32> to vector<32x512xf32>
    %38 = arith.addf %35, %37 : vector<32x512xf32>
    %cst_31 = arith.constant 0.000000e+00 : f32
    %39 = vector.broadcast %cst_31 : f32 to vector<32x512xf32>
    %40 = arith.maximumf %38, %39 : vector<32x512xf32>
    %c0_32 = arith.constant 0 : index
    %c0_33 = arith.constant 0 : index
    %41 = vector.load %arg4[%c0_32, %c0_33] : memref<32x32xbf16, #tpu.memory_space<vmem>>, vector<32x32xbf16>
    %42 = arith.truncf %40 : vector<32x512xf32> to vector<32x512xbf16>
    %cst_34 = arith.constant dense<0.000000e+00> : vector<32x512xf32>
    %43 = tpu.matmul %41, %42, %cst_34 {dimension_numbers = #tpu.dot_dimension_numbers<[1], [0], [0], [1], [0, 0, 1, 1], [], []>} : vector<32x32xbf16>, vector<32x512xbf16>, vector<32x512xf32> -> vector<32x512xf32>
    %c0_35 = arith.constant 0 : index
    %c0_36 = arith.constant 0 : index
    %44 = vector.load %arg5[%c0_35, %c0_36] : memref<32x1xf32, #tpu.memory_space<vmem>>, vector<32x1xf32>
    %45 = vector.broadcast %44 : vector<32x1xf32> to vector<32x512xf32>
    %46 = arith.addf %43, %45 : vector<32x512xf32>
    %cst_37 = arith.constant 0.000000e+00 : f32
    %47 = vector.broadcast %cst_37 : f32 to vector<32x512xf32>
    %48 = arith.maximumf %46, %47 : vector<32x512xf32>
    %c0_38 = arith.constant 0 : index
    %c0_39 = arith.constant 0 : index
    %49 = vector.load %arg6[%c0_38, %c0_39] : memref<32x32xbf16, #tpu.memory_space<vmem>>, vector<32x32xbf16>
    %50 = arith.truncf %48 : vector<32x512xf32> to vector<32x512xbf16>
    %cst_40 = arith.constant dense<0.000000e+00> : vector<32x512xf32>
    %51 = tpu.matmul %49, %50, %cst_40 {dimension_numbers = #tpu.dot_dimension_numbers<[1], [0], [0], [1], [0, 0, 1, 1], [], []>} : vector<32x32xbf16>, vector<32x512xbf16>, vector<32x512xf32> -> vector<32x512xf32>
    %c0_41 = arith.constant 0 : index
    %c0_42 = arith.constant 0 : index
    %52 = vector.load %arg7[%c0_41, %c0_42] : memref<32x1xf32, #tpu.memory_space<vmem>>, vector<32x1xf32>
    %53 = vector.broadcast %52 : vector<32x1xf32> to vector<32x512xf32>
    %54 = arith.addf %51, %53 : vector<32x512xf32>
    %cst_43 = arith.constant 0.000000e+00 : f32
    %55 = vector.broadcast %cst_43 : f32 to vector<32x512xf32>
    %56 = arith.maximumf %54, %55 : vector<32x512xf32>
    %c0_44 = arith.constant 0 : index
    %c0_45 = arith.constant 0 : index
    %57 = vector.load %arg8[%c0_44, %c0_45] : memref<32x1xf32, #tpu.memory_space<vmem>>, vector<32x1xf32>
    %58 = vector.broadcast %57 : vector<32x1xf32> to vector<32x512xf32>
    %59 = arith.mulf %58, %56 : vector<32x512xf32>
    %cst_46 = arith.constant dense<0.000000e+00> : vector<512xf32>
    %60 = vector.multi_reduction <add>, %59, %cst_46 [0] : vector<32x512xf32> to vector<512xf32>
    %61 = vector.shape_cast %60 : vector<512xf32> to vector<1x512xf32>
    %c0_47 = arith.constant 0 : index
    %c0_48 = arith.constant 0 : index
    %62 = vector.load %arg9[%c0_47, %c0_48] : memref<1x1xf32, #tpu.memory_space<vmem>>, vector<1x1xf32>
    %63 = vector.broadcast %62 : vector<1x1xf32> to vector<1x512xf32>
    %64 = arith.addf %61, %63 : vector<1x512xf32>
    %c0_49 = arith.constant 0 : index
    %c512_50 = arith.constant 512 : index
    %65 = vector.load %arg10[%c0_49, %c512_50] : memref<1x2048xf32, #tpu.memory_space<vmem>>, vector<1x512xf32>
    tpu.vector_store %arg10[%c0_49, %c512_50], %64 {strides = array<i32>} : memref<1x2048xf32, #tpu.memory_space<vmem>>, vector<1x512xf32>,
    %c0_51 = arith.constant 0 : index
    %c1024 = arith.constant 1024 : index
    %66 = vector.load %arg1[%c0_51, %c1024] : memref<3x2048xbf16, #tpu.memory_space<vmem>>, vector<3x512xbf16>
    %c0_52 = arith.constant 0 : index
    %c0_53 = arith.constant 0 : index
    %67 = vector.load %arg2[%c0_52, %c0_53] : memref<32x3xbf16, #tpu.memory_space<vmem>>, vector<32x3xbf16>
    %cst_54 = arith.constant dense<0.000000e+00> : vector<32x512xf32>
    %68 = tpu.matmul %67, %66, %cst_54 {dimension_numbers = #tpu.dot_dimension_numbers<[1], [0], [0], [1], [0, 0, 1, 1], [], []>} : vector<32x3xbf16>, vector<3x512xbf16>, vector<32x512xf32> -> vector<32x512xf32>
    %c0_55 = arith.constant 0 : index
    %c0_56 = arith.constant 0 : index
    %69 = vector.load %arg3[%c0_55, %c0_56] : memref<32x1xf32, #tpu.memory_space<vmem>>, vector<32x1xf32>
    %70 = vector.broadcast %69 : vector<32x1xf32> to vector<32x512xf32>
    %71 = arith.addf %68, %70 : vector<32x512xf32>
    %cst_57 = arith.constant 0.000000e+00 : f32
    %72 = vector.broadcast %cst_57 : f32 to vector<32x512xf32>
    %73 = arith.maximumf %71, %72 : vector<32x512xf32>
    %c0_58 = arith.constant 0 : index
    %c0_59 = arith.constant 0 : index
    %74 = vector.load %arg4[%c0_58, %c0_59] : memref<32x32xbf16, #tpu.memory_space<vmem>>, vector<32x32xbf16>
    %75 = arith.truncf %73 : vector<32x512xf32> to vector<32x512xbf16>
    %cst_60 = arith.constant dense<0.000000e+00> : vector<32x512xf32>
    %76 = tpu.matmul %74, %75, %cst_60 {dimension_numbers = #tpu.dot_dimension_numbers<[1], [0], [0], [1], [0, 0, 1, 1], [], []>} : vector<32x32xbf16>, vector<32x512xbf16>, vector<32x512xf32> -> vector<32x512xf32>
    %c0_61 = arith.constant 0 : index
    %c0_62 = arith.constant 0 : index
    %77 = vector.load %arg5[%c0_61, %c0_62] : memref<32x1xf32, #tpu.memory_space<vmem>>, vector<32x1xf32>
    %78 = vector.broadcast %77 : vector<32x1xf32> to vector<32x512xf32>
    %79 = arith.addf %76, %78 : vector<32x512xf32>
    %cst_63 = arith.constant 0.000000e+00 : f32
    %80 = vector.broadcast %cst_63 : f32 to vector<32x512xf32>
    %81 = arith.maximumf %79, %80 : vector<32x512xf32>
    %c0_64 = arith.constant 0 : index
    %c0_65 = arith.constant 0 : index
    %82 = vector.load %arg6[%c0_64, %c0_65] : memref<32x32xbf16, #tpu.memory_space<vmem>>, vector<32x32xbf16>
    %83 = arith.truncf %81 : vector<32x512xf32> to vector<32x512xbf16>
    %cst_66 = arith.constant dense<0.000000e+00> : vector<32x512xf32>
    %84 = tpu.matmul %82, %83, %cst_66 {dimension_numbers = #tpu.dot_dimension_numbers<[1], [0], [0], [1], [0, 0, 1, 1], [], []>} : vector<32x32xbf16>, vector<32x512xbf16>, vector<32x512xf32> -> vector<32x512xf32>
    %c0_67 = arith.constant 0 : index
    %c0_68 = arith.constant 0 : index
    %85 = vector.load %arg7[%c0_67, %c0_68] : memref<32x1xf32, #tpu.memory_space<vmem>>, vector<32x1xf32>
    %86 = vector.broadcast %85 : vector<32x1xf32> to vector<32x512xf32>
    %87 = arith.addf %84, %86 : vector<32x512xf32>
    %cst_69 = arith.constant 0.000000e+00 : f32
    %88 = vector.broadcast %cst_69 : f32 to vector<32x512xf32>
    %89 = arith.maximumf %87, %88 : vector<32x512xf32>
    %c0_70 = arith.constant 0 : index
    %c0_71 = arith.constant 0 : index
    %90 = vector.load %arg8[%c0_70, %c0_71] : memref<32x1xf32, #tpu.memory_space<vmem>>, vector<32x1xf32>
    %91 = vector.broadcast %90 : vector<32x1xf32> to vector<32x512xf32>
    %92 = arith.mulf %91, %89 : vector<32x512xf32>
    %cst_72 = arith.constant dense<0.000000e+00> : vector<512xf32>
    %93 = vector.multi_reduction <add>, %92, %cst_72 [0] : vector<32x512xf32> to vector<512xf32>
    %94 = vector.shape_cast %93 : vector<512xf32> to vector<1x512xf32>
    %c0_73 = arith.constant 0 : index
    %c0_74 = arith.constant 0 : index
    %95 = vector.load %arg9[%c0_73, %c0_74] : memref<1x1xf32, #tpu.memory_space<vmem>>, vector<1x1xf32>
    %96 = vector.broadcast %95 : vector<1x1xf32> to vector<1x512xf32>
    %97 = arith.addf %94, %96 : vector<1x512xf32>
    %c0_75 = arith.constant 0 : index
    %c1024_76 = arith.constant 1024 : index
    %98 = vector.load %arg10[%c0_75, %c1024_76] : memref<1x2048xf32, #tpu.memory_space<vmem>>, vector<1x512xf32>
    tpu.vector_store %arg10[%c0_75, %c1024_76], %97 {strides = array<i32>} : memref<1x2048xf32, #tpu.memory_space<vmem>>, vector<1x512xf32>,
    %c0_77 = arith.constant 0 : index
    %c1536 = arith.constant 1536 : index
    %99 = vector.load %arg1[%c0_77, %c1536] : memref<3x2048xbf16, #tpu.memory_space<vmem>>, vector<3x512xbf16>
    %c0_78 = arith.constant 0 : index
    %c0_79 = arith.constant 0 : index
    %100 = vector.load %arg2[%c0_78, %c0_79] : memref<32x3xbf16, #tpu.memory_space<vmem>>, vector<32x3xbf16>
    %cst_80 = arith.constant dense<0.000000e+00> : vector<32x512xf32>
    %101 = tpu.matmul %100, %99, %cst_80 {dimension_numbers = #tpu.dot_dimension_numbers<[1], [0], [0], [1], [0, 0, 1, 1], [], []>} : vector<32x3xbf16>, vector<3x512xbf16>, vector<32x512xf32> -> vector<32x512xf32>
    %c0_81 = arith.constant 0 : index
    %c0_82 = arith.constant 0 : index
    %102 = vector.load %arg3[%c0_81, %c0_82] : memref<32x1xf32, #tpu.memory_space<vmem>>, vector<32x1xf32>
    %103 = vector.broadcast %102 : vector<32x1xf32> to vector<32x512xf32>
    %104 = arith.addf %101, %103 : vector<32x512xf32>
    %cst_83 = arith.constant 0.000000e+00 : f32
    %105 = vector.broadcast %cst_83 : f32 to vector<32x512xf32>
    %106 = arith.maximumf %104, %105 : vector<32x512xf32>
    %c0_84 = arith.constant 0 : index
    %c0_85 = arith.constant 0 : index
    %107 = vector.load %arg4[%c0_84, %c0_85] : memref<32x32xbf16, #tpu.memory_space<vmem>>, vector<32x32xbf16>
    %108 = arith.truncf %106 : vector<32x512xf32> to vector<32x512xbf16>
    %cst_86 = arith.constant dense<0.000000e+00> : vector<32x512xf32>
    %109 = tpu.matmul %107, %108, %cst_86 {dimension_numbers = #tpu.dot_dimension_numbers<[1], [0], [0], [1], [0, 0, 1, 1], [], []>} : vector<32x32xbf16>, vector<32x512xbf16>, vector<32x512xf32> -> vector<32x512xf32>
    %c0_87 = arith.constant 0 : index
    %c0_88 = arith.constant 0 : index
    %110 = vector.load %arg5[%c0_87, %c0_88] : memref<32x1xf32, #tpu.memory_space<vmem>>, vector<32x1xf32>
    %111 = vector.broadcast %110 : vector<32x1xf32> to vector<32x512xf32>
    %112 = arith.addf %109, %111 : vector<32x512xf32>
    %cst_89 = arith.constant 0.000000e+00 : f32
    %113 = vector.broadcast %cst_89 : f32 to vector<32x512xf32>
    %114 = arith.maximumf %112, %113 : vector<32x512xf32>
    %c0_90 = arith.constant 0 : index
    %c0_91 = arith.constant 0 : index
    %115 = vector.load %arg6[%c0_90, %c0_91] : memref<32x32xbf16, #tpu.memory_space<vmem>>, vector<32x32xbf16>
    %116 = arith.truncf %114 : vector<32x512xf32> to vector<32x512xbf16>
    %cst_92 = arith.constant dense<0.000000e+00> : vector<32x512xf32>
    %117 = tpu.matmul %115, %116, %cst_92 {dimension_numbers = #tpu.dot_dimension_numbers<[1], [0], [0], [1], [0, 0, 1, 1], [], []>} : vector<32x32xbf16>, vector<32x512xbf16>, vector<32x512xf32> -> vector<32x512xf32>
    %c0_93 = arith.constant 0 : index
    %c0_94 = arith.constant 0 : index
    %118 = vector.load %arg7[%c0_93, %c0_94] : memref<32x1xf32, #tpu.memory_space<vmem>>, vector<32x1xf32>
    %119 = vector.broadcast %118 : vector<32x1xf32> to vector<32x512xf32>
    %120 = arith.addf %117, %119 : vector<32x512xf32>
    %cst_95 = arith.constant 0.000000e+00 : f32
    %121 = vector.broadcast %cst_95 : f32 to vector<32x512xf32>
    %122 = arith.maximumf %120, %121 : vector<32x512xf32>
    %c0_96 = arith.constant 0 : index
    %c0_97 = arith.constant 0 : index
    %123 = vector.load %arg8[%c0_96, %c0_97] : memref<32x1xf32, #tpu.memory_space<vmem>>, vector<32x1xf32>
    %124 = vector.broadcast %123 : vector<32x1xf32> to vector<32x512xf32>
    %125 = arith.mulf %124, %122 : vector<32x512xf32>
    %cst_98 = arith.constant dense<0.000000e+00> : vector<512xf32>
    %126 = vector.multi_reduction <add>, %125, %cst_98 [0] : vector<32x512xf32> to vector<512xf32>
    %127 = vector.shape_cast %126 : vector<512xf32> to vector<1x512xf32>
    %c0_99 = arith.constant 0 : index
    %c0_100 = arith.constant 0 : index
    %128 = vector.load %arg9[%c0_99, %c0_100] : memref<1x1xf32, #tpu.memory_space<vmem>>, vector<1x1xf32>
    %129 = vector.broadcast %128 : vector<1x1xf32> to vector<1x512xf32>
    %130 = arith.addf %127, %129 : vector<1x512xf32>
    %c0_101 = arith.constant 0 : index
    %c1536_102 = arith.constant 1536 : index
    %131 = vector.load %arg10[%c0_101, %c1536_102] : memref<1x2048xf32, #tpu.memory_space<vmem>>, vector<1x512xf32>
    tpu.vector_store %arg10[%c0_101, %c1536_102], %130 {strides = array<i32>} : memref<1x2048xf32, #tpu.memory_space<vmem>>, vector<1x512xf32>,
    return
  }
  func.func @transform_0(%arg0: i32) -> (i32, i32) {
    %c0_i32 = arith.constant 0 : i32
    %c0_i32_0 = arith.constant 0 : i32
    return %c0_i32, %arg0 : i32, i32
  }
  func.func @transform_1(%arg0: i32) -> (i32, i32) {
    %c0_i32 = arith.constant 0 : i32
    %c0_i32_0 = arith.constant 0 : i32
    %c0_i32_1 = arith.constant 0 : i32
    return %c0_i32, %c0_i32_0 : i32, i32
  }
  func.func @transform_2(%arg0: i32) -> (i32, i32) {
    %c0_i32 = arith.constant 0 : i32
    %c0_i32_0 = arith.constant 0 : i32
    %c0_i32_1 = arith.constant 0 : i32
    return %c0_i32, %c0_i32_0 : i32, i32
  }
  func.func @transform_3(%arg0: i32) -> (i32, i32) {
    %c0_i32 = arith.constant 0 : i32
    %c0_i32_0 = arith.constant 0 : i32
    %c0_i32_1 = arith.constant 0 : i32
    return %c0_i32, %c0_i32_0 : i32, i32
  }
  func.func @transform_4(%arg0: i32) -> (i32, i32) {
    %c0_i32 = arith.constant 0 : i32
    %c0_i32_0 = arith.constant 0 : i32
    %c0_i32_1 = arith.constant 0 : i32
    return %c0_i32, %c0_i32_0 : i32, i32
  }
  func.func @transform_5(%arg0: i32) -> (i32, i32) {
    %c0_i32 = arith.constant 0 : i32
    %c0_i32_0 = arith.constant 0 : i32
    %c0_i32_1 = arith.constant 0 : i32
    return %c0_i32, %c0_i32_0 : i32, i32
  }
  func.func @transform_6(%arg0: i32) -> (i32, i32) {
    %c0_i32 = arith.constant 0 : i32
    %c0_i32_0 = arith.constant 0 : i32
    %c0_i32_1 = arith.constant 0 : i32
    return %c0_i32, %c0_i32_0 : i32, i32
  }
  func.func @transform_7(%arg0: i32) -> (i32, i32) {
    %c0_i32 = arith.constant 0 : i32
    %c0_i32_0 = arith.constant 0 : i32
    %c0_i32_1 = arith.constant 0 : i32
    return %c0_i32, %c0_i32_0 : i32, i32
  }
  func.func @transform_8(%arg0: i32) -> (i32, i32) {
    %c0_i32 = arith.constant 0 : i32
    %c0_i32_0 = arith.constant 0 : i32
    %c0_i32_1 = arith.constant 0 : i32
    return %c0_i32, %c0_i32_0 : i32, i32
  }
  func.func @transform_9(%arg0: i32) -> (i32, i32) {
    %c0_i32 = arith.constant 0 : i32
    %c0_i32_0 = arith.constant 0 : i32
    return %c0_i32, %arg0 : i32, i32
  }
}

</mosaic_0001>

<llo_original>
// kernel: tpu_custom_call.1
$region0: #{tpu_custom_call.1}
  #allocation0 [shape = 'u32[]', space=smem, size = 0x4, offset = 0x4, fixed_abs, tag = 'smem constant byte address 0x4 - core index']
  #allocation1 [shape = 'u32[144,128]{1,0:T(1,128)}', space=vmem, size = 0x12000, scoped, tag = 'internal scratch']
  #allocation2 [shape = 'f32[1,1]{1,0:T(1,128)S(1)}', space=vmem, size = 0x200, scoped, tag = 'scoped memory for tpu_custom_call.1']
  %s0 = inlined_call_operand.hbm [shape: bf16[3,10000], index: 0, kind: input, shape index: {}]
  %s1 = inlined_call_operand.vmem [shape: bf16[32,3], index: 1, kind: input, shape index: {}]
  %s2 = inlined_call_operand.vmem [shape: f32[32,1], index: 2, kind: input, shape index: {}]
  %s3 = inlined_call_operand.vmem [shape: bf16[32,32], index: 3, kind: input, shape index: {}]
  %s4 = inlined_call_operand.vmem [shape: f32[32,1], index: 4, kind: input, shape index: {}]
  %s5 = inlined_call_operand.vmem [shape: bf16[32,32], index: 5, kind: input, shape index: {}]
  %s6 = inlined_call_operand.vmem [shape: f32[32,1], index: 6, kind: input, shape index: {}]
  %s7 = inlined_call_operand.vmem [shape: f32[32,1], index: 7, kind: input, shape index: {}]
  %s8 = inlined_call_operand.<no memory space> [shape: f32[1,1], index: 8, kind: input, shape index: {}]
  %s9 = inlined_call_operand.hbm [shape: f32[1,10000], index: 9, kind: output, shape index: {}]
  %s10 = sld [smem:[#allocation0]]
  $region73: #{tpu_custom_call.1} parent=0
    _
  %s12 = ssub.s32 1, %s10
  %s13 = scalar_select 0, %s12, %s10
  %v14 = vstv %s8
  %15 = vst [vmem:[#allocation2] sm:$0x1] %v14
  $region1: #{tpu_custom_call.1} parent=0
    #allocation3 [shape = 'u8[32768]{0}', space=vmem, size = 0x8000, scoped, tag = 'input window, operand 0']
    #allocation4 [shape = 's32[2]{0}', space=sflag, size = 0x8, scoped, tag = 'scoped memory for tpu_custom_call.1']
    #allocation5 [shape = 's32[2]{0}', space=sflag, size = 0x8, scoped, tag = 'scoped memory for tpu_custom_call.1']
    #allocation6 [shape = 'u8[16384]{0}', space=vmem, size = 0x4000, scoped, tag = 'output window, operand 0']
    %16 = vsyncpa [#allocation4], 0
    %s17 = scalar_lea.sflag [#allocation4], 1
    %18 = vsyncpa %s17, 0
    %19 = vsyncpa [#allocation5], 0
    %s20 = scalar_lea.sflag [#allocation5], 1
    %21 = vsyncpa %s20, 0
    loop: start=0, step=1, limit=7
    $region2: #{tpu_custom_call.1} parent=1 // loop_pre_header
      _
    $region3: #{tpu_custom_call.1} parent=1 // loop_header
      %s23 = sphi 0, %s27
      %p24 = scmp.ge.s32.totalorder %s23, 7
      %s33 = sphi 0, %s35
      %s36 = sphi 0, %s33
      %s37 = sphi 0, %s36
      %s53 = sphi 0, %s37
      %s57 = sphi 0, %s57
      %s59 = sphi 0, %s57
      %s60 = sphi 0, %s59
      %s74 = sphi 0, %s60
      %s78 = sphi 0, %s78
      %s80 = sphi 0, %s78
      %s81 = sphi 0, %s80
      %s95 = sphi 0, %s81
      %s99 = sphi 0, %s99
      %s101 = sphi 0, %s99
      %s102 = sphi 0, %s101
      %s116 = sphi 0, %s102
      %s120 = sphi 0, %s120
      %s122 = sphi 0, %s120
      %s123 = sphi 0, %s122
      %s137 = sphi 0, %s123
      %s141 = sphi 0, %s141
      %s143 = sphi 0, %s141
      %s144 = sphi 0, %s143
      %s158 = sphi 0, %s144
      %s162 = sphi 0, %s162
      %s164 = sphi 0, %s162
      %s165 = sphi 0, %s164
      %s179 = sphi 0, %s165
      %s183 = sphi 0, %s183
      %s185 = sphi 0, %s183
      %s186 = sphi 0, %s185
      %s200 = sphi 0, %s186
      %s204 = sphi 0, %s204
      %s206 = sphi 0, %s204
      %s207 = sphi 0, %s206
      %s221 = sphi 0, %s207
      %s227 = sphi 0, %s229
      %s230 = sphi 0, %s227
      %s231 = sphi 0, %s230
      %s247 = sphi 0, %s231
    $region4: #{tpu_custom_call.1} parent=1 // loop_header_branch
      %26 = sbr.rel (%p24) target = $region8
    $region5: #{tpu_custom_call.1} parent=1 // loop_body
      %s28 = ssub.s32 %s23, 1
      %s29 = ssub.s32 %s23, 2
      %s30 = sadd.s32 %s23, 1
      %s31 = ssub.s32 %s23, %s30
      %p32 = scmp.eq.s32.totalorder %s31, 0
      %s34 = sadd.s32 %s33, 1
      %s35 = scalar_select %p32, %s33, %s34
      %p38 = pneg %p32
      %p39 = scmp.eq.s32.totalorder %s23, 4
      %p40 = por %p38, %p39
      %p41 = scmp.ne.s32.totalorder %s33, %s36
      %p42 = scmp.eq.s32.totalorder %s23, 0
      %p43 = por %p41, %p42
      %p44 = scmp.ne.s32.totalorder %s33, %s36
      %p45 = scmp.eq.s32.totalorder %s28, 4
      %p46 = por %p44, %p45
      %p47 = scmp.ne.s32.totalorder %s36, %s37
      %p48 = scmp.eq.s32.totalorder %s28, 0
      %p49 = por %p47, %p48
      %p50 = scmp.ne.s32.totalorder %s36, %s37
      %p51 = scmp.eq.s32.totalorder %s29, 4
      %p52 = por %p50, %p51
      %p54 = scmp.ne.s32.totalorder %s37, %s53
      %p55 = scmp.eq.s32.totalorder %s29, 0
      %p56 = por %p54, %p55
      %s58 = sadd.s32 %s57, 1
      %p61 = scmp.eq.s32.totalorder %s23, 4
      %p62 = scmp.ne.s32.totalorder %s57, %s59
      %p63 = scmp.eq.s32.totalorder %s23, 0
      %p64 = por %p62, %p63
      %p65 = scmp.ne.s32.totalorder %s57, %s59
      %p66 = scmp.eq.s32.totalorder %s28, 4
      %p67 = por %p65, %p66
      %p68 = scmp.ne.s32.totalorder %s59, %s60
      %p69 = scmp.eq.s32.totalorder %s28, 0
      %p70 = por %p68, %p69
      %p71 = scmp.ne.s32.totalorder %s59, %s60
      %p72 = scmp.eq.s32.totalorder %s29, 4
      %p73 = por %p71, %p72
      %p75 = scmp.ne.s32.totalorder %s60, %s74
      %p76 = scmp.eq.s32.totalorder %s29, 0
      %p77 = por %p75, %p76
      %s79 = sadd.s32 %s78, 1
      %p82 = scmp.eq.s32.totalorder %s23, 4
      %p83 = scmp.ne.s32.totalorder %s78, %s80
      %p84 = scmp.eq.s32.totalorder %s23, 0
      %p85 = por %p83, %p84
      %p86 = scmp.ne.s32.totalorder %s78, %s80
      %p87 = scmp.eq.s32.totalorder %s28, 4
      %p88 = por %p86, %p87
      %p89 = scmp.ne.s32.totalorder %s80, %s81
      %p90 = scmp.eq.s32.totalorder %s28, 0
      %p91 = por %p89, %p90
      %p92 = scmp.ne.s32.totalorder %s80, %s81
      %p93 = scmp.eq.s32.totalorder %s29, 4
      %p94 = por %p92, %p93
      %p96 = scmp.ne.s32.totalorder %s81, %s95
      %p97 = scmp.eq.s32.totalorder %s29, 0
      %p98 = por %p96, %p97
      %s100 = sadd.s32 %s99, 1
      %p103 = scmp.eq.s32.totalorder %s23, 4
      %p104 = scmp.ne.s32.totalorder %s99, %s101
      %p105 = scmp.eq.s32.totalorder %s23, 0
      %p106 = por %p104, %p105
      %p107 = scmp.ne.s32.totalorder %s99, %s101
      %p108 = scmp.eq.s32.totalorder %s28, 4
      %p109 = por %p107, %p108
      %p110 = scmp.ne.s32.totalorder %s101, %s102
      %p111 = scmp.eq.s32.totalorder %s28, 0
      %p112 = por %p110, %p111
      %p113 = scmp.ne.s32.totalorder %s101, %s102
      %p114 = scmp.eq.s32.totalorder %s29, 4
      %p115 = por %p113, %p114
      %p117 = scmp.ne.s32.totalorder %s102, %s116
      %p118 = scmp.eq.s32.totalorder %s29, 0
      %p119 = por %p117, %p118
      %s121 = sadd.s32 %s120, 1
      %p124 = scmp.eq.s32.totalorder %s23, 4
      %p125 = scmp.ne.s32.totalorder %s120, %s122
      %p126 = scmp.eq.s32.totalorder %s23, 0
      %p127 = por %p125, %p126
      %p128 = scmp.ne.s32.totalorder %s120, %s122
      %p129 = scmp.eq.s32.totalorder %s28, 4
      %p130 = por %p128, %p129
      %p131 = scmp.ne.s32.totalorder %s122, %s123
      %p132 = scmp.eq.s32.totalorder %s28, 0
      %p133 = por %p131, %p132
      %p134 = scmp.ne.s32.totalorder %s122, %s123
      %p135 = scmp.eq.s32.totalorder %s29, 4
      %p136 = por %p134, %p135
      %p138 = scmp.ne.s32.totalorder %s123, %s137
      %p139 = scmp.eq.s32.totalorder %s29, 0
      %p140 = por %p138, %p139
      %s142 = sadd.s32 %s141, 1
      %p145 = scmp.eq.s32.totalorder %s23, 4
      %p146 = scmp.ne.s32.totalorder %s141, %s143
      %p147 = scmp.eq.s32.totalorder %s23, 0
      %p148 = por %p146, %p147
      %p149 = scmp.ne.s32.totalorder %s141, %s143
      %p150 = scmp.eq.s32.totalorder %s28, 4
      %p151 = por %p149, %p150
      %p152 = scmp.ne.s32.totalorder %s143, %s144
      %p153 = scmp.eq.s32.totalorder %s28, 0
      %p154 = por %p152, %p153
      %p155 = scmp.ne.s32.totalorder %s143, %s144
      %p156 = scmp.eq.s32.totalorder %s29, 4
      %p157 = por %p155, %p156
      %p159 = scmp.ne.s32.totalorder %s144, %s158
      %p160 = scmp.eq.s32.totalorder %s29, 0
      %p161 = por %p159, %p160
      %s163 = sadd.s32 %s162, 1
      %p166 = scmp.eq.s32.totalorder %s23, 4
      %p167 = scmp.ne.s32.totalorder %s162, %s164
      %p168 = scmp.eq.s32.totalorder %s23, 0
      %p169 = por %p167, %p168
      %p170 = scmp.ne.s32.totalorder %s162, %s164
      %p171 = scmp.eq.s32.totalorder %s28, 4
      %p172 = por %p170, %p171
      %p173 = scmp.ne.s32.totalorder %s164, %s165
      %p174 = scmp.eq.s32.totalorder %s28, 0
      %p175 = por %p173, %p174
      %p176 = scmp.ne.s32.totalorder %s164, %s165
      %p177 = scmp.eq.s32.totalorder %s29, 4
      %p178 = por %p176, %p177
      %p180 = scmp.ne.s32.totalorder %s165, %s179
      %p181 = scmp.eq.s32.totalorder %s29, 0
      %p182 = por %p180, %p181
      %s184 = sadd.s32 %s183, 1
      %p187 = scmp.eq.s32.totalorder %s23, 4
      %p188 = scmp.ne.s32.totalorder %s183, %s185
      %p189 = scmp.eq.s32.totalorder %s23, 0
      %p190 = por %p188, %p189
      %p191 = scmp.ne.s32.totalorder %s183, %s185
      %p192 = scmp.eq.s32.totalorder %s28, 4
      %p193 = por %p191, %p192
      %p194 = scmp.ne.s32.totalorder %s185, %s186
      %p195 = scmp.eq.s32.totalorder %s28, 0
      %p196 = por %p194, %p195
      %p197 = scmp.ne.s32.totalorder %s185, %s186
      %p198 = scmp.eq.s32.totalorder %s29, 4
      %p199 = por %p197, %p198
      %p201 = scmp.ne.s32.totalorder %s186, %s200
      %p202 = scmp.eq.s32.totalorder %s29, 0
      %p203 = por %p201, %p202
      %s205 = sadd.s32 %s204, 1
      %p208 = scmp.eq.s32.totalorder %s23, 4
      %p209 = scmp.ne.s32.totalorder %s204, %s206
      %p210 = scmp.eq.s32.totalorder %s23, 0
      %p211 = por %p209, %p210
      %p212 = scmp.ne.s32.totalorder %s204, %s206
      %p213 = scmp.eq.s32.totalorder %s28, 4
      %p214 = por %p212, %p213
      %p215 = scmp.ne.s32.totalorder %s206, %s207
      %p216 = scmp.eq.s32.totalorder %s28, 0
      %p217 = por %p215, %p216
      %p218 = scmp.ne.s32.totalorder %s206, %s207
      %p219 = scmp.eq.s32.totalorder %s29, 4
      %p220 = por %p218, %p219
      %p222 = scmp.ne.s32.totalorder %s207, %s221
      %p223 = scmp.eq.s32.totalorder %s29, 0
      %p224 = por %p222, %p223
      %s225 = ssub.s32 %s23, %s30
      %p226 = scmp.eq.s32.totalorder %s225, 0
      %s228 = sadd.s32 %s227, 1
      %s229 = scalar_select %p226, %s227, %s228
      %p232 = pneg %p226
      %p233 = scmp.eq.s32.totalorder %s23, 4
      %p234 = por %p232, %p233
      %p235 = scmp.ne.s32.totalorder %s227, %s230
      %p236 = scmp.eq.s32.totalorder %s23, 0
      %p237 = por %p235, %p236
      %p238 = scmp.ne.s32.totalorder %s227, %s230
      %p239 = scmp.eq.s32.totalorder %s28, 4
      %p240 = por %p238, %p239
      %p241 = scmp.ne.s32.totalorder %s230, %s231
      %p242 = scmp.eq.s32.totalorder %s28, 0
      %p243 = por %p241, %p242
      %p244 = scmp.ne.s32.totalorder %s230, %s231
      %p245 = scmp.eq.s32.totalorder %s29, 4
      %p246 = por %p244, %p245
      %p248 = scmp.ne.s32.totalorder %s231, %s247
      %p249 = scmp.eq.s32.totalorder %s29, 0
      %p250 = por %p248, %p249
      %p251 = scmp.le.s32.totalorder 1, %s23
      %p252 = scmp.lt.s32.totalorder %s23, 6
      %p253 = pnand %p251, %p252
      %p254 = pneg %p253
      // Predicated region
      $region9: #{tpu_custom_call.1} parent=5 // pred_check
        _
      $region10: #{tpu_custom_call.1} parent=5 // pred_check_branch
        %256 = sbr.rel (%p253) target = $region12
      $region11: #{tpu_custom_call.1} parent=5 // pred_region
        %s257 = ssub.s32 %s23, 1
        // Predicated region
        $region13: #{tpu_custom_call.1} parent=11 // pred_check
          %p258 = pneg %p70
        $region14: #{tpu_custom_call.1} parent=11 // pred_check_branch
          %260 = sbr.rel (%p258) target = $region16
        $region15: #{tpu_custom_call.1} parent=11 // pred_region
          _
        $region16: #{tpu_custom_call.1} parent=11 // pred_fallthru
          _
        // Predicated region
        $region17: #{tpu_custom_call.1} parent=11 // pred_check
          %p261 = pneg %p91
        $region18: #{tpu_custom_call.1} parent=11 // pred_check_branch
          %263 = sbr.rel (%p261) target = $region20
        $region19: #{tpu_custom_call.1} parent=11 // pred_region
          _
        $region20: #{tpu_custom_call.1} parent=11 // pred_fallthru
          _
        // Predicated region
        $region21: #{tpu_custom_call.1} parent=11 // pred_check
          %p264 = pneg %p112
        $region22: #{tpu_custom_call.1} parent=11 // pred_check_branch
          %266 = sbr.rel (%p264) target = $region24
        $region23: #{tpu_custom_call.1} parent=11 // pred_region
          _
        $region24: #{tpu_custom_call.1} parent=11 // pred_fallthru
          _
        // Predicated region
        $region25: #{tpu_custom_call.1} parent=11 // pred_check
          %p267 = pneg %p133
        $region26: #{tpu_custom_call.1} parent=11 // pred_check_branch
          %269 = sbr.rel (%p267) target = $region28
        $region27: #{tpu_custom_call.1} parent=11 // pred_region
          _
        $region28: #{tpu_custom_call.1} parent=11 // pred_fallthru
          _
        // Predicated region
        $region29: #{tpu_custom_call.1} parent=11 // pred_check
          %p270 = pneg %p154
        $region30: #{tpu_custom_call.1} parent=11 // pred_check_branch
          %272 = sbr.rel (%p270) target = $region32
        $region31: #{tpu_custom_call.1} parent=11 // pred_region
          _
        $region32: #{tpu_custom_call.1} parent=11 // pred_fallthru
          _
        // Predicated region
        $region33: #{tpu_custom_call.1} parent=11 // pred_check
          %p273 = pneg %p175
        $region34: #{tpu_custom_call.1} parent=11 // pred_check_branch
          %275 = sbr.rel (%p273) target = $region36
        $region35: #{tpu_custom_call.1} parent=11 // pred_region
          _
        $region36: #{tpu_custom_call.1} parent=11 // pred_fallthru
          _
        // Predicated region
        $region37: #{tpu_custom_call.1} parent=11 // pred_check
          %p276 = pneg %p196
        $region38: #{tpu_custom_call.1} parent=11 // pred_check_branch
          %278 = sbr.rel (%p276) target = $region40
        $region39: #{tpu_custom_call.1} parent=11 // pred_region
          _
        $region40: #{tpu_custom_call.1} parent=11 // pred_fallthru
          _
        // Predicated region
        $region41: #{tpu_custom_call.1} parent=11 // pred_check
          %p279 = pneg %p217
        $region42: #{tpu_custom_call.1} parent=11 // pred_check_branch
          %281 = sbr.rel (%p279) target = $region44
        $region43: #{tpu_custom_call.1} parent=11 // pred_region
          _
        $region44: #{tpu_custom_call.1} parent=11 // pred_fallthru
          _
      $region12: #{tpu_custom_call.1} parent=5 // pred_fallthru
        _
      %p282 = scmp.lt.s32.totalorder %s23, 5
      // Predicated region
      $region45: #{tpu_custom_call.1} parent=5 // pred_check
        %p283 = pneg %p282
      $region46: #{tpu_custom_call.1} parent=5 // pred_check_branch
        %285 = sbr.rel (%p283) target = $region48
      $region47: #{tpu_custom_call.1} parent=5 // pred_region
        // Predicated region
        $region49: #{tpu_custom_call.1} parent=47 // pred_check
          %p286 = pneg %p43
        $region50: #{tpu_custom_call.1} parent=47 // pred_check_branch
          %288 = sbr.rel (%p286) target = $region52
        $region51: #{tpu_custom_call.1} parent=47 // pred_region
          %s289 = sand.u32 %s33, 1
          %s290 = scalar_lea.sflag [#allocation4], %s289
          %s291 = sand.u32 %s33, 1
          %s292 = smul.addr %s291, 32
          %s293 = scalar_lea.vmem [#allocation3], %s292
          %s294 = smul.u32 16, %s23
          %s295 = ssub.s32 79, %s294
          %p296 = scmp.lt.s32.totalorder %s295, 16
          %s297 = scalar_select %p296, %s295, 16
          %s298 = smul.u32 32, %s297
          %s300 = ssub.s32 512, %s298
          %301 = vsyncadd %s290, %s300
          %p302 = scmp.ne.s32.totalorder 0, %s298
          %s303 = smul.addr %s294, 32
          %s304 = scalar_lea.hbm %s0, %s303
          %s305 = smul.u32 %s297, 2
          %s306 = sshll.u32 %s305, 4
          %s307 = sshll.u32 %s293, 4
          %s308 = int_to_ptr.vmem [resolvable:$true] %s307
          %310 = dma.hbm_to_vmem [thread:$0]  (%p302), %s304, %s306, %s308, %s290
        $region52: #{tpu_custom_call.1} parent=47 // pred_fallthru
          _
      $region48: #{tpu_custom_call.1} parent=5 // pred_fallthru
        _
      %p311 = scmp.le.s32.totalorder 1, %s23
      %p312 = scmp.lt.s32.totalorder %s23, 6
      %p313 = pnand %p311, %p312
      %p314 = pneg %p313
      // Predicated region
      $region53: #{tpu_custom_call.1} parent=5 // pred_check
        _
      $region54: #{tpu_custom_call.1} parent=5 // pred_check_branch
        %316 = sbr.rel (%p313) target = $region56
      $region55: #{tpu_custom_call.1} parent=5 // pred_region
        %s317 = ssub.s32 %s23, 1
        %s318 = sand.u32 %s36, 1
        %s319 = scalar_lea.sflag [#allocation4], %s318
        %s320 = sand.u32 %s36, 1
        %s321 = smul.addr %s320, 32
        %s322 = scalar_lea.vmem [#allocation3], %s321
        // Predicated region
        $region57: #{tpu_custom_call.1} parent=55 // pred_check
          %p323 = pneg %p49
        $region58: #{tpu_custom_call.1} parent=55 // pred_check_branch
          %325 = sbr.rel (%p323) target = $region60
        $region59: #{tpu_custom_call.1} parent=55 // pred_region
          %326 = dma.done %s319, 512
        $region60: #{tpu_custom_call.1} parent=55 // pred_fallthru
          _
        %s327 = sand.u32 %s36, 1
        %s328 = scalar_lea.sflag [#allocation4], %s327
        %s329 = sand.u32 %s36, 1
        %s330 = smul.addr %s329, 32
        %s331 = scalar_lea.vmem [#allocation3], %s330
        %p332 = pneg %p49
        %p333 = pneg %p46
        %p334 = pneg %p70
        %p335 = pneg %p67
        %p336 = pneg %p91
        %p337 = pneg %p88
        %p338 = pneg %p112
        %p339 = pneg %p109
        %p340 = pneg %p133
        %p341 = pneg %p130
        %p342 = pneg %p154
        %p343 = pneg %p151
        %p344 = pneg %p175
        %p345 = pneg %p172
        %p346 = pneg %p196
        %p347 = pneg %p193
        %p348 = pneg %p217
        %p349 = pneg %p214
        %p350 = pneg %p243
        %p351 = pneg %p240
        %s352 = sand.u32 %s230, 1
        %s353 = scalar_lea.sflag [#allocation5], %s352
        %s354 = sand.u32 %s230, 1
        %s355 = smul.addr %s354, 16
        %s356 = scalar_lea.vmem [#allocation6], %s355
        %s357 = smul.u32 16, %s28
        %s358 = ssub.s32 79, %s357
        %p359 = scmp.lt.s32.totalorder %s358, 16
        %s360 = scalar_select %p359, %s358, 16
        %s361 = smul.u32 32, %s360
        %s362 = smul.u32 16, %s28
        %s363 = ssub.s32 79, %s362
        %p364 = scmp.lt.s32.totalorder %s363, 16
        %s365 = scalar_select %p364, %s363, 16
        %s366 = smul.u32 16, %s365
        %v368 = vld [vmem:[%s322] sm:$0xff]
        %v369 = vld [vmem:[%s1] sm:$0xf]
        %v370 = vld [vmem:[%s1 + $0x4] sm:$0xf]
        %v371 = vld [vmem:[%s1 + $0x8] sm:$0xf]
        %v372 = vld [vmem:[%s1 + $0xc] sm:$0xf]
        %v373 = vld [vmem:[%s2] sm:$0xff]
        %v374 = vld [vmem:[%s2 + $0x8] sm:$0xff]
        %v375 = vld [vmem:[%s2 + $0x10] sm:$0xff]
        %v376 = vld [vmem:[%s2 + $0x18] sm:$0xff]
        %378 = vset.pattern.permute.xlu0 0
        %379 = vperm.xlu0 %378, %v373
        %v380 = vpop.permute.xlu0 %379
        %383 = vset.pattern.permute.xlu0 0
        %384 = vperm.xlu0 %383, %v374
        %v385 = vpop.permute.xlu0 %384
        %388 = vset.pattern.permute.xlu0 0
        %389 = vperm.xlu0 %388, %v375
        %v390 = vpop.permute.xlu0 %389
        %393 = vset.pattern.permute.xlu0 0
        %394 = vperm.xlu0 %393, %v376
        %v395 = vpop.permute.xlu0 %394
        %v401 = vunpack.c.l.b16 %v369
        %v402 = vunpack.c.l.b16 %v370
        %v403 = vunpack.c.l.b16 %v371
        %v404 = vunpack.c.l.b16 %v372
        %v405 = vpack.c.b16 %v402, %v401
        %v406 = vpack.c.b16 %v404, %v403
        %v408 = vcombine.high %v368, %v368
        %v410 = vunpack.c.l.s4 1983009808
        %v411 = vunpack.c.0.s8 %v410
        %v412 = vlaneseq
        %v413 = vshrl.u32 %v412, 7
        %v414 = vsub.s32 %v411, %v413
        %v415 = vrot.slane %v368, %v414
        %v417 = vunpack.c.l.s4 1983009808
        %v418 = vunpack.c.0.s8 %v417
        %v419 = vlaneseq
        %v420 = vshrl.u32 %v419, 7
        %v421 = vsub.s32 %v418, %v420
        %v422 = vrot.slane %v408, %v421
        %v423 = vcombine.high %v415, %v415
        %v424 = vcombine.high %v422, %v422
        %vm425 = vcmask 23552
        %v427 = vsel %vm425, %v405, 0
        %v430 = vsel %vm425, %v406, 0
        %vm432 = vcmask 1040384
        %vm433 = vcmask 1041408
        %v434 = vsel %vm432, 4294967295, 65535
        %v435 = vsel %vm433, %v434, 0
        %v437 = vand.u32 %v415, %v435
        %v440 = vand.u32 %v423, %v435
        %v443 = vand.u32 %v422, %v435
        %v446 = vand.u32 %v424, %v435
        %448 = vmatprep.subr.bf16.mxu0 %v440
        %449 = vmatpush1.bf16.msra.mxu0 %v437
        %450 = vmatprep.subr.bf16.mxu0 0
        %451 = vmatpush1.bf16.msra.mxu0 0
        %452 = vmatprep.subr.bf16.mxu0 0
        %453 = vmatpush1.bf16.msra.mxu0 0
        %454 = vmatprep.subr.bf16.mxu0 0
        %455 = vmatpush1.bf16.msra.mxu0 0
        %456 = vmatprep.subr.bf16.mxu0 0
        %457 = vmatpush1.bf16.msra.mxu0 0
        %458 = vmatprep.subr.bf16.mxu0 0
        %459 = vmatpush1.bf16.msra.mxu0 0
        %460 = vmatprep.subr.bf16.mxu0 0
        %461 = vmatpush1.bf16.msra.mxu0 0
        %462 = vmatprep.subr.bf16.mxu0 0
        %463 = vmatpush1.bf16.msra.mxu0 0
        %464 = vmatprep.subr.bf16.mxu0 0
        %465 = vmatpush1.bf16.msra.mxu0 0
        %466 = vmatprep.subr.bf16.mxu0 0
        %467 = vmatpush1.bf16.msra.mxu0 0
        %468 = vmatprep.subr.bf16.mxu0 0
        %469 = vmatpush1.bf16.msra.mxu0 0
        %470 = vmatprep.subr.bf16.mxu0 0
        %471 = vmatpush1.bf16.msra.mxu0 0
        %472 = vmatprep.subr.bf16.mxu0 0
        %473 = vmatpush1.bf16.msra.mxu0 0
        %474 = vmatprep.subr.bf16.mxu0 0
        %475 = vmatpush1.bf16.msra.mxu0 0
        %476 = vmatprep.subr.bf16.mxu0 0
        %477 = vmatpush1.bf16.msra.mxu0 0
        %478 = vmatprep.subr.bf16.mxu0 0
        %479 = vmatpush1.bf16.msra.mxu0 0
        %480 = vmatprep.mubr.bf16.mxu0 0
        %481 = vmatmul.mubr.bf16.gmra.mrb[0].mxu0 %v427
        %v482 = vpop.f32.mrb[0].mxu0
        %v483 = vadd.f32 %v380, %v482
        %v484 = vpop.f32.mrb[0].mxu0
        %v485 = vadd.f32 %v380, %v484
        %v486 = vpop.f32.mrb[0].mxu0
        %v487 = vadd.f32 %v385, %v486
        %v488 = vpop.f32.mrb[0].mxu0
        %v489 = vadd.f32 %v385, %v488
        %490 = vmatprep.mubr.bf16.mxu0 0
        %491 = vmatmul.mubr.bf16.gmra.mrb[0].mxu0 %v430
        %v492 = vpop.f32.mrb[0].mxu0
        %v493 = vadd.f32 %v390, %v492
        %v494 = vpop.f32.mrb[0].mxu0
        %v495 = vadd.f32 %v390, %v494
        %v496 = vpop.f32.mrb[0].mxu0
        %v497 = vadd.f32 %v395, %v496
        %v498 = vpop.f32.mrb[0].mxu0
        %v499 = vadd.f32 %v395, %v498
        %500 = vdwg.mxu0
        %501 = vmatprep.subr.bf16.mxu0 %v446
        %502 = vmatpush1.bf16.msra.mxu0 %v443
        %503 = vmatprep.subr.bf16.mxu0 0
        %504 = vmatpush1.bf16.msra.mxu0 0
        %505 = vmatprep.subr.bf16.mxu0 0
        %506 = vmatpush1.bf16.msra.mxu0 0
        %507 = vmatprep.subr.bf16.mxu0 0
        %508 = vmatpush1.bf16.msra.mxu0 0
        %509 = vmatprep.subr.bf16.mxu0 0
        %510 = vmatpush1.bf16.msra.mxu0 0
        %511 = vmatprep.subr.bf16.mxu0 0
        %512 = vmatpush1.bf16.msra.mxu0 0
        %513 = vmatprep.subr.bf16.mxu0 0
        %514 = vmatpush1.bf16.msra.mxu0 0
        %515 = vmatprep.subr.bf16.mxu0 0
        %516 = vmatpush1.bf16.msra.mxu0 0
        %517 = vmatprep.subr.bf16.mxu0 0
        %518 = vmatpush1.bf16.msra.mxu0 0
        %519 = vmatprep.subr.bf16.mxu0 0
        %520 = vmatpush1.bf16.msra.mxu0 0
        %521 = vmatprep.subr.bf16.mxu0 0
        %522 = vmatpush1.bf16.msra.mxu0 0
        %523 = vmatprep.subr.bf16.mxu0 0
        %524 = vmatpush1.bf16.msra.mxu0 0
        %525 = vmatprep.subr.bf16.mxu0 0
        %526 = vmatpush1.bf16.msra.mxu0 0
        %527 = vmatprep.subr.bf16.mxu0 0
        %528 = vmatpush1.bf16.msra.mxu0 0
        %529 = vmatprep.subr.bf16.mxu0 0
        %530 = vmatpush1.bf16.msra.mxu0 0
        %531 = vmatprep.subr.bf16.mxu0 0
        %532 = vmatpush1.bf16.msra.mxu0 0
        %533 = vmatprep.mubr.bf16.mxu0 0
        %534 = vmatmul.mubr.bf16.gmra.mrb[0].mxu0 %v427
        %v535 = vpop.f32.mrb[0].mxu0
        %v536 = vadd.f32 %v380, %v535
        %v537 = vpop.f32.mrb[0].mxu0
        %v538 = vadd.f32 %v380, %v537
        %v539 = vpop.f32.mrb[0].mxu0
        %v540 = vadd.f32 %v385, %v539
        %v541 = vpop.f32.mrb[0].mxu0
        %v542 = vadd.f32 %v385, %v541
        %543 = vmatprep.mubr.bf16.mxu0 0
        %544 = vmatmul.mubr.bf16.gmra.mrb[0].mxu0 %v430
        %v545 = vpop.f32.mrb[0].mxu0
        %v546 = vadd.f32 %v390, %v545
        %v547 = vpop.f32.mrb[0].mxu0
        %v548 = vadd.f32 %v390, %v547
        %v549 = vpop.f32.mrb[0].mxu0
        %v550 = vadd.f32 %v395, %v549
        %v551 = vpop.f32.mrb[0].mxu0
        %v552 = vadd.f32 %v395, %v551
        %553 = vdwg.mxu0
        %v554 = vmax.f32 %v483, 0.0
        %v555 = vmax.f32 %v485, 0.0
        %v556 = vmax.f32 %v536, 0.0
        %v557 = vmax.f32 %v538, 0.0
        %v558 = vmax.f32 %v487, 0.0
        %v559 = vmax.f32 %v489, 0.0
        %v560 = vmax.f32 %v540, 0.0
        %v561 = vmax.f32 %v542, 0.0
        %v562 = vmax.f32 %v493, 0.0
        %v563 = vmax.f32 %v495, 0.0
        %v564 = vmax.f32 %v546, 0.0
        %v565 = vmax.f32 %v548, 0.0
        %v566 = vmax.f32 %v497, 0.0
        %v567 = vmax.f32 %v499, 0.0
        %v568 = vmax.f32 %v550, 0.0
        %v569 = vmax.f32 %v552, 0.0
        %v570 = vld [vmem:[%s3] sm:$0xf]
        %v571 = vld [vmem:[%s3 + $0x4] sm:$0xf]
        %v572 = vld [vmem:[%s3 + $0x8] sm:$0xf]
        %v573 = vld [vmem:[%s3 + $0xc] sm:$0xf]
        %v574 = vpack.c.bf16 %v558, %v554
        %v575 = vpack.c.bf16 %v559, %v555
        %v576 = vpack.c.bf16 %v560, %v556
        %v577 = vpack.c.bf16 %v561, %v557
        %v578 = vpack.c.bf16 %v566, %v562
        %v579 = vpack.c.bf16 %v567, %v563
        %v580 = vpack.c.bf16 %v568, %v564
        %v581 = vpack.c.bf16 %v569, %v565
        %v582 = vld [vmem:[%s4] sm:$0xff]
        %v583 = vld [vmem:[%s4 + $0x8] sm:$0xff]
        %v584 = vld [vmem:[%s4 + $0x10] sm:$0xff]
        %v585 = vld [vmem:[%s4 + $0x18] sm:$0xff]
        %587 = vset.pattern.permute.xlu0 0
        %588 = vperm.xlu0 %587, %v582
        %v589 = vpop.permute.xlu0 %588
        %592 = vset.pattern.permute.xlu0 0
        %593 = vperm.xlu0 %592, %v583
        %v594 = vpop.permute.xlu0 %593
        %597 = vset.pattern.permute.xlu0 0
        %598 = vperm.xlu0 %597, %v584
        %v599 = vpop.permute.xlu0 %598
        %602 = vset.pattern.permute.xlu0 0
        %603 = vperm.xlu0 %602, %v585
        %v604 = vpop.permute.xlu0 %603
        %v610 = vunpack.c.l.b16 %v570
        %v611 = vunpack.c.l.b16 %v571
        %v612 = vunpack.c.l.b16 %v572
        %v613 = vunpack.c.l.b16 %v573
        %v614 = vpack.c.b16 %v611, %v610
        %v615 = vpack.c.b16 %v613, %v612
        %vm616 = vcmask 261120
        %v618 = vsel %vm616, %v614, 0
        %v621 = vsel %vm616, %v615, 0
        %623 = vmatprep.subr.bf16.mxu0 %v575
        %624 = vmatpush1.bf16.msra.mxu0 %v574
        %625 = vmatprep.subr.bf16.mxu0 %v579
        %626 = vmatpush1.bf16.msra.mxu0 %v578
        %627 = vmatprep.subr.bf16.mxu0 0
        %628 = vmatpush1.bf16.msra.mxu0 0
        %629 = vmatprep.subr.bf16.mxu0 0
        %630 = vmatpush1.bf16.msra.mxu0 0
        %631 = vmatprep.subr.bf16.mxu0 0
        %632 = vmatpush1.bf16.msra.mxu0 0
        %633 = vmatprep.subr.bf16.mxu0 0
        %634 = vmatpush1.bf16.msra.mxu0 0
        %635 = vmatprep.subr.bf16.mxu0 0
        %636 = vmatpush1.bf16.msra.mxu0 0
        %637 = vmatprep.subr.bf16.mxu0 0
        %638 = vmatpush1.bf16.msra.mxu0 0
        %639 = vmatprep.subr.bf16.mxu0 0
        %640 = vmatpush1.bf16.msra.mxu0 0
        %641 = vmatprep.subr.bf16.mxu0 0
        %642 = vmatpush1.bf16.msra.mxu0 0
        %643 = vmatprep.subr.bf16.mxu0 0
        %644 = vmatpush1.bf16.msra.mxu0 0
        %645 = vmatprep.subr.bf16.mxu0 0
        %646 = vmatpush1.bf16.msra.mxu0 0
        %647 = vmatprep.subr.bf16.mxu0 0
        %648 = vmatpush1.bf16.msra.mxu0 0
        %649 = vmatprep.subr.bf16.mxu0 0
        %650 = vmatpush1.bf16.msra.mxu0 0
        %651 = vmatprep.subr.bf16.mxu0 0
        %652 = vmatpush1.bf16.msra.mxu0 0
        %653 = vmatprep.subr.bf16.mxu0 0
        %654 = vmatpush1.bf16.msra.mxu0 0
        %655 = vmatprep.mubr.bf16.mxu0 0
        %656 = vmatmul.mubr.bf16.gmra.mrb[0].mxu0 %v618
        %v657 = vpop.f32.mrb[0].mxu0
        %v658 = vadd.f32 %v589, %v657
        %v659 = vpop.f32.mrb[0].mxu0
        %v660 = vadd.f32 %v589, %v659
        %v661 = vpop.f32.mrb[0].mxu0
        %v662 = vadd.f32 %v594, %v661
        %v663 = vpop.f32.mrb[0].mxu0
        %v664 = vadd.f32 %v594, %v663
        %665 = vmatprep.mubr.bf16.mxu0 0
        %666 = vmatmul.mubr.bf16.gmra.mrb[0].mxu0 %v621
        %v667 = vpop.f32.mrb[0].mxu0
        %v668 = vadd.f32 %v599, %v667
        %v669 = vpop.f32.mrb[0].mxu0
        %v670 = vadd.f32 %v599, %v669
        %v671 = vpop.f32.mrb[0].mxu0
        %v672 = vadd.f32 %v604, %v671
        %v673 = vpop.f32.mrb[0].mxu0
        %v674 = vadd.f32 %v604, %v673
        %675 = vdwg.mxu0
        %676 = vmatprep.subr.bf16.mxu0 %v577
        %677 = vmatpush1.bf16.msra.mxu0 %v576
        %678 = vmatprep.subr.bf16.mxu0 %v581
        %679 = vmatpush1.bf16.msra.mxu0 %v580
        %680 = vmatprep.subr.bf16.mxu0 0
        %681 = vmatpush1.bf16.msra.mxu0 0
        %682 = vmatprep.subr.bf16.mxu0 0
        %683 = vmatpush1.bf16.msra.mxu0 0
        %684 = vmatprep.subr.bf16.mxu0 0
        %685 = vmatpush1.bf16.msra.mxu0 0
        %686 = vmatprep.subr.bf16.mxu0 0
        %687 = vmatpush1.bf16.msra.mxu0 0
        %688 = vmatprep.subr.bf16.mxu0 0
        %689 = vmatpush1.bf16.msra.mxu0 0
        %690 = vmatprep.subr.bf16.mxu0 0
        %691 = vmatpush1.bf16.msra.mxu0 0
        %692 = vmatprep.subr.bf16.mxu0 0
        %693 = vmatpush1.bf16.msra.mxu0 0
        %694 = vmatprep.subr.bf16.mxu0 0
        %695 = vmatpush1.bf16.msra.mxu0 0
        %696 = vmatprep.subr.bf16.mxu0 0
        %697 = vmatpush1.bf16.msra.mxu0 0
        %698 = vmatprep.subr.bf16.mxu0 0
        %699 = vmatpush1.bf16.msra.mxu0 0
        %700 = vmatprep.subr.bf16.mxu0 0
        %701 = vmatpush1.bf16.msra.mxu0 0
        %702 = vmatprep.subr.bf16.mxu0 0
        %703 = vmatpush1.bf16.msra.mxu0 0
        %704 = vmatprep.subr.bf16.mxu0 0
        %705 = vmatpush1.bf16.msra.mxu0 0
        %706 = vmatprep.subr.bf16.mxu0 0
        %707 = vmatpush1.bf16.msra.mxu0 0
        %708 = vmatprep.mubr.bf16.mxu0 0
        %709 = vmatmul.mubr.bf16.gmra.mrb[0].mxu0 %v618
        %v710 = vpop.f32.mrb[0].mxu0
        %v711 = vadd.f32 %v589, %v710
        %v712 = vpop.f32.mrb[0].mxu0
        %v713 = vadd.f32 %v589, %v712
        %v714 = vpop.f32.mrb[0].mxu0
        %v715 = vadd.f32 %v594, %v714
        %v716 = vpop.f32.mrb[0].mxu0
        %v717 = vadd.f32 %v594, %v716
        %718 = vmatprep.mubr.bf16.mxu0 0
        %719 = vmatmul.mubr.bf16.gmra.mrb[0].mxu0 %v621
        %v720 = vpop.f32.mrb[0].mxu0
        %v721 = vadd.f32 %v599, %v720
        %v722 = vpop.f32.mrb[0].mxu0
        %v723 = vadd.f32 %v599, %v722
        %v724 = vpop.f32.mrb[0].mxu0
        %v725 = vadd.f32 %v604, %v724
        %v726 = vpop.f32.mrb[0].mxu0
        %v727 = vadd.f32 %v604, %v726
        %728 = vdwg.mxu0
        %v729 = vmax.f32 %v658, 0.0
        %v730 = vmax.f32 %v660, 0.0
        %v731 = vmax.f32 %v711, 0.0
        %v732 = vmax.f32 %v713, 0.0
        %v733 = vmax.f32 %v662, 0.0
        %v734 = vmax.f32 %v664, 0.0
        %v735 = vmax.f32 %v715, 0.0
        %v736 = vmax.f32 %v717, 0.0
        %v737 = vmax.f32 %v668, 0.0
        %v738 = vmax.f32 %v670, 0.0
        %v739 = vmax.f32 %v721, 0.0
        %v740 = vmax.f32 %v723, 0.0
        %v741 = vmax.f32 %v672, 0.0
        %v742 = vmax.f32 %v674, 0.0
        %v743 = vmax.f32 %v725, 0.0
        %v744 = vmax.f32 %v727, 0.0
        %v745 = vld [vmem:[%s5] sm:$0xf]
        %v746 = vld [vmem:[%s5 + $0x4] sm:$0xf]
        %v747 = vld [vmem:[%s5 + $0x8] sm:$0xf]
        %v748 = vld [vmem:[%s5 + $0xc] sm:$0xf]
        %v749 = vpack.c.bf16 %v733, %v729
        %v750 = vpack.c.bf16 %v734, %v730
        %v751 = vpack.c.bf16 %v735, %v731
        %v752 = vpack.c.bf16 %v736, %v732
        %v753 = vpack.c.bf16 %v741, %v737
        %v754 = vpack.c.bf16 %v742, %v738
        %v755 = vpack.c.bf16 %v743, %v739
        %v756 = vpack.c.bf16 %v744, %v740
        %v757 = vld [vmem:[%s6] sm:$0xff]
        %v758 = vld [vmem:[%s6 + $0x8] sm:$0xff]
        %v759 = vld [vmem:[%s6 + $0x10] sm:$0xff]
        %v760 = vld [vmem:[%s6 + $0x18] sm:$0xff]
        %762 = vset.pattern.permute.xlu0 0
        %763 = vperm.xlu0 %762, %v757
        %v764 = vpop.permute.xlu0 %763
        %767 = vset.pattern.permute.xlu0 0
        %768 = vperm.xlu0 %767, %v758
        %v769 = vpop.permute.xlu0 %768
        %772 = vset.pattern.permute.xlu0 0
        %773 = vperm.xlu0 %772, %v759
        %v774 = vpop.permute.xlu0 %773
        %777 = vset.pattern.permute.xlu0 0
        %778 = vperm.xlu0 %777, %v760
        %v779 = vpop.permute.xlu0 %778
        %v785 = vunpack.c.l.b16 %v745
        %v786 = vunpack.c.l.b16 %v746
        %v787 = vunpack.c.l.b16 %v747
        %v788 = vunpack.c.l.b16 %v748
        %v789 = vpack.c.b16 %v786, %v785
        %v790 = vpack.c.b16 %v788, %v787
        %v792 = vsel %vm616, %v789, 0
        %v795 = vsel %vm616, %v790, 0
        %797 = vmatprep.subr.bf16.mxu0 %v750
        %798 = vmatpush1.bf16.msra.mxu0 %v749
        %799 = vmatprep.subr.bf16.mxu0 %v754
        %800 = vmatpush1.bf16.msra.mxu0 %v753
        %801 = vmatprep.subr.bf16.mxu0 0
        %802 = vmatpush1.bf16.msra.mxu0 0
        %803 = vmatprep.subr.bf16.mxu0 0
        %804 = vmatpush1.bf16.msra.mxu0 0
        %805 = vmatprep.subr.bf16.mxu0 0
        %806 = vmatpush1.bf16.msra.mxu0 0
        %807 = vmatprep.subr.bf16.mxu0 0
        %808 = vmatpush1.bf16.msra.mxu0 0
        %809 = vmatprep.subr.bf16.mxu0 0
        %810 = vmatpush1.bf16.msra.mxu0 0
        %811 = vmatprep.subr.bf16.mxu0 0
        %812 = vmatpush1.bf16.msra.mxu0 0
        %813 = vmatprep.subr.bf16.mxu0 0
        %814 = vmatpush1.bf16.msra.mxu0 0
        %815 = vmatprep.subr.bf16.mxu0 0
        %816 = vmatpush1.bf16.msra.mxu0 0
        %817 = vmatprep.subr.bf16.mxu0 0
        %818 = vmatpush1.bf16.msra.mxu0 0
        %819 = vmatprep.subr.bf16.mxu0 0
        %820 = vmatpush1.bf16.msra.mxu0 0
        %821 = vmatprep.subr.bf16.mxu0 0
        %822 = vmatpush1.bf16.msra.mxu0 0
        %823 = vmatprep.subr.bf16.mxu0 0
        %824 = vmatpush1.bf16.msra.mxu0 0
        %825 = vmatprep.subr.bf16.mxu0 0
        %826 = vmatpush1.bf16.msra.mxu0 0
        %827 = vmatprep.subr.bf16.mxu0 0
        %828 = vmatpush1.bf16.msra.mxu0 0
        %829 = vmatprep.mubr.bf16.mxu0 0
        %830 = vmatmul.mubr.bf16.gmra.mrb[0].mxu0 %v792
        %v831 = vpop.f32.mrb[0].mxu0
        %v832 = vadd.f32 %v764, %v831
        %v833 = vpop.f32.mrb[0].mxu0
        %v834 = vadd.f32 %v764, %v833
        %v835 = vpop.f32.mrb[0].mxu0
        %v836 = vadd.f32 %v769, %v835
        %v837 = vpop.f32.mrb[0].mxu0
        %v838 = vadd.f32 %v769, %v837
        %839 = vmatprep.mubr.bf16.mxu0 0
        %840 = vmatmul.mubr.bf16.gmra.mrb[0].mxu0 %v795
        %v841 = vpop.f32.mrb[0].mxu0
        %v842 = vadd.f32 %v774, %v841
        %v843 = vpop.f32.mrb[0].mxu0
        %v844 = vadd.f32 %v774, %v843
        %v845 = vpop.f32.mrb[0].mxu0
        %v846 = vadd.f32 %v779, %v845
        %v847 = vpop.f32.mrb[0].mxu0
        %v848 = vadd.f32 %v779, %v847
        %849 = vdwg.mxu0
        %850 = vmatprep.subr.bf16.mxu0 %v752
        %851 = vmatpush1.bf16.msra.mxu0 %v751
        %852 = vmatprep.subr.bf16.mxu0 %v756
        %853 = vmatpush1.bf16.msra.mxu0 %v755
        %854 = vmatprep.subr.bf16.mxu0 0
        %855 = vmatpush1.bf16.msra.mxu0 0
        %856 = vmatprep.subr.bf16.mxu0 0
        %857 = vmatpush1.bf16.msra.mxu0 0
        %858 = vmatprep.subr.bf16.mxu0 0
        %859 = vmatpush1.bf16.msra.mxu0 0
        %860 = vmatprep.subr.bf16.mxu0 0
        %861 = vmatpush1.bf16.msra.mxu0 0
        %862 = vmatprep.subr.bf16.mxu0 0
        %863 = vmatpush1.bf16.msra.mxu0 0
        %864 = vmatprep.subr.bf16.mxu0 0
        %865 = vmatpush1.bf16.msra.mxu0 0
        %866 = vmatprep.subr.bf16.mxu0 0
        %867 = vmatpush1.bf16.msra.mxu0 0
        %868 = vmatprep.subr.bf16.mxu0 0
        %869 = vmatpush1.bf16.msra.mxu0 0
        %870 = vmatprep.subr.bf16.mxu0 0
        %871 = vmatpush1.bf16.msra.mxu0 0
        %872 = vmatprep.subr.bf16.mxu0 0
        %873 = vmatpush1.bf16.msra.mxu0 0
        %874 = vmatprep.subr.bf16.mxu0 0
        %875 = vmatpush1.bf16.msra.mxu0 0
        %876 = vmatprep.subr.bf16.mxu0 0
        %877 = vmatpush1.bf16.msra.mxu0 0
        %878 = vmatprep.subr.bf16.mxu0 0
        %879 = vmatpush1.bf16.msra.mxu0 0
        %880 = vmatprep.subr.bf16.mxu0 0
        %881 = vmatpush1.bf16.msra.mxu0 0
        %882 = vmatprep.mubr.bf16.mxu0 0
        %883 = vmatmul.mubr.bf16.gmra.mrb[0].mxu0 %v792
        %v884 = vpop.f32.mrb[0].mxu0
        %v885 = vadd.f32 %v764, %v884
        %v886 = vpop.f32.mrb[0].mxu0
        %v887 = vadd.f32 %v764, %v886
        %v888 = vpop.f32.mrb[0].mxu0
        %v889 = vadd.f32 %v769, %v888
        %v890 = vpop.f32.mrb[0].mxu0
        %v891 = vadd.f32 %v769, %v890
        %892 = vmatprep.mubr.bf16.mxu0 0
        %893 = vmatmul.mubr.bf16.gmra.mrb[0].mxu0 %v795
        %v894 = vpop.f32.mrb[0].mxu0
        %v895 = vadd.f32 %v774, %v894
        %v896 = vpop.f32.mrb[0].mxu0
        %v897 = vadd.f32 %v774, %v896
        %v898 = vpop.f32.mrb[0].mxu0
        %v899 = vadd.f32 %v779, %v898
        %v900 = vpop.f32.mrb[0].mxu0
        %v901 = vadd.f32 %v779, %v900
        %902 = vdwg.mxu0
        %v903 = vmax.f32 %v832, 0.0
        %v904 = vmax.f32 %v834, 0.0
        %v905 = vmax.f32 %v885, 0.0
        %v906 = vmax.f32 %v887, 0.0
        %v907 = vmax.f32 %v836, 0.0
        %v908 = vmax.f32 %v838, 0.0
        %v909 = vmax.f32 %v889, 0.0
        %v910 = vmax.f32 %v891, 0.0
        %v911 = vmax.f32 %v842, 0.0
        %v912 = vmax.f32 %v844, 0.0
        %v913 = vmax.f32 %v895, 0.0
        %v914 = vmax.f32 %v897, 0.0
        %v915 = vmax.f32 %v846, 0.0
        %v916 = vmax.f32 %v848, 0.0
        %v917 = vmax.f32 %v899, 0.0
        %v918 = vmax.f32 %v901, 0.0
        %v919 = vld [vmem:[%s7] sm:$0xff]
        %v920 = vld [vmem:[%s7 + $0x8] sm:$0xff]
        %v921 = vld [vmem:[%s7 + $0x10] sm:$0xff]
        %v922 = vld [vmem:[%s7 + $0x18] sm:$0xff]
        %924 = vset.pattern.permute.xlu0 0
        %925 = vperm.xlu0 %924, %v919
        %v926 = vpop.permute.xlu0 %925
        %929 = vset.pattern.permute.xlu0 0
        %930 = vperm.xlu0 %929, %v920
        %v931 = vpop.permute.xlu0 %930
        %934 = vset.pattern.permute.xlu0 0
        %935 = vperm.xlu0 %934, %v921
        %v936 = vpop.permute.xlu0 %935
        %939 = vset.pattern.permute.xlu0 0
        %940 = vperm.xlu0 %939, %v922
        %v941 = vpop.permute.xlu0 %940
        %v943 = vmul.f32 %v926, %v903
        %v944 = vmul.f32 %v926, %v904
        %v945 = vmul.f32 %v926, %v905
        %v946 = vmul.f32 %v926, %v906
        %v947 = vmul.f32 %v931, %v907
        %v948 = vmul.f32 %v931, %v908
        %v949 = vmul.f32 %v931, %v909
        %v950 = vmul.f32 %v931, %v910
        %v951 = vmul.f32 %v936, %v911
        %v952 = vmul.f32 %v936, %v912
        %v953 = vmul.f32 %v936, %v913
        %v954 = vmul.f32 %v936, %v914
        %v955 = vmul.f32 %v941, %v915
        %v956 = vmul.f32 %v941, %v916
        %v957 = vmul.f32 %v941, %v917
        %v958 = vmul.f32 %v941, %v918
        %v959 = vadd.f32 %v943, %v947
        %v960 = vadd.f32 %v959, %v951
        %v961 = vadd.f32 %v960, %v955
        %v962 = vrot.slane %v961, 4
        %v963 = vadd.f32 %v961, %v962
        %v964 = vrot.slane %v963, 2
        %v965 = vadd.f32 %v963, %v964
        %v966 = vrot.slane %v965, 1
        %v967 = vadd.f32 %v965, %v966
        %v968 = vadd.f32 %v944, %v948
        %v969 = vadd.f32 %v968, %v952
        %v970 = vadd.f32 %v969, %v956
        %v971 = vrot.slane %v970, 4
        %v972 = vadd.f32 %v970, %v971
        %v973 = vrot.slane %v972, 2
        %v974 = vadd.f32 %v972, %v973
        %v975 = vrot.slane %v974, 1
        %v976 = vadd.f32 %v974, %v975
        %v977 = vadd.f32 %v945, %v949
        %v978 = vadd.f32 %v977, %v953
        %v979 = vadd.f32 %v978, %v957
        %v980 = vrot.slane %v979, 4
        %v981 = vadd.f32 %v979, %v980
        %v982 = vrot.slane %v981, 2
        %v983 = vadd.f32 %v981, %v982
        %v984 = vrot.slane %v983, 1
        %v985 = vadd.f32 %v983, %v984
        %v986 = vadd.f32 %v946, %v950
        %v987 = vadd.f32 %v986, %v954
        %v988 = vadd.f32 %v987, %v958
        %v989 = vrot.slane %v988, 4
        %v990 = vadd.f32 %v988, %v989
        %v991 = vrot.slane %v990, 2
        %v992 = vadd.f32 %v990, %v991
        %v993 = vrot.slane %v992, 1
        %v994 = vadd.f32 %v992, %v993
        %v995 = vld [vmem:[#allocation2] sm:$0x1]
        %997 = vset.pattern.permute.xlu0 0
        %998 = vperm.xlu0 %997, %v995
        %v999 = vpop.permute.xlu0 %998
        %v1001 = vlaneseq
        %v1002 = vshrl.u32 %v1001, 7
        %v1003 = vsub.s32 0, %v1002
        %v1004 = vrot.slane %v999, %v1003
        %v1005 = vadd.f32 %v967, %v1004
        %v1006 = vadd.f32 %v976, %v1004
        %v1007 = vadd.f32 %v985, %v1004
        %v1008 = vadd.f32 %v994, %v1004
        %v1013 = vcombine.low %v1005, %v1006
        %v1014 = vcombine.low %v1007, %v1008
        %v1016 = vunpack.c.l.s4 1966171168
        %v1017 = vunpack.c.0.s8 %v1016
        %v1018 = vlaneseq
        %v1019 = vshrl.u32 %v1018, 7
        %v1020 = vsub.s32 %v1017, %v1019
        %v1021 = vrot.slane %v1013, %v1020
        %v1023 = vunpack.c.l.s4 1966171168
        %v1024 = vunpack.c.0.s8 %v1023
        %v1025 = vlaneseq
        %v1026 = vshrl.u32 %v1025, 7
        %v1027 = vsub.s32 %v1024, %v1026
        %v1028 = vrot.slane %v1014, %v1027
        %v1029 = vcombine.low %v1021, %v1028
        %v1031 = vunpack.c.l.s4 1966171168
        %v1032 = vunpack.c.0.s8 %v1031
        %v1033 = vlaneseq
        %v1034 = vshrl.u32 %v1033, 7
        %v1035 = vsub.s32 %v1032, %v1034
        %v1036 = vrot.slane %v1029, %v1035
        %v1038 = vlaneseq
        %vm1039 = vcmp.ge.s32.totalorder %v1038, 0
        %vm1040 = vcmp.lt.s32.totalorder %v1038, 512
        %vm1041 = vmand %vm1039, %vm1040
        %1042 = vst.msk [vmem:[%s356] sm:$0xf] %vm1041, %v1036
        %v1043 = vld [vmem:[%s322 + $0x8] sm:$0xff]
        %v1044 = vld [vmem:[%s1] sm:$0xf]
        %v1045 = vld [vmem:[%s1 + $0x4] sm:$0xf]
        %v1046 = vld [vmem:[%s1 + $0x8] sm:$0xf]
        %v1047 = vld [vmem:[%s1 + $0xc] sm:$0xf]
        %v1048 = vld [vmem:[%s2] sm:$0xff]
        %v1049 = vld [vmem:[%s2 + $0x8] sm:$0xff]
        %v1050 = vld [vmem:[%s2 + $0x10] sm:$0xff]
        %v1051 = vld [vmem:[%s2 + $0x18] sm:$0xff]
        %1053 = vset.pattern.permute.xlu0 0
        %1054 = vperm.xlu0 %1053, %v1048
        %v1055 = vpop.permute.xlu0 %1054
        %1058 = vset.pattern.permute.xlu0 0
        %1059 = vperm.xlu0 %1058, %v1049
        %v1060 = vpop.permute.xlu0 %1059
        %1063 = vset.pattern.permute.xlu0 0
        %1064 = vperm.xlu0 %1063, %v1050
        %v1065 = vpop.permute.xlu0 %1064
        %1068 = vset.pattern.permute.xlu0 0
        %1069 = vperm.xlu0 %1068, %v1051
        %v1070 = vpop.permute.xlu0 %1069
        %v1076 = vunpack.c.l.b16 %v1044
        %v1077 = vunpack.c.l.b16 %v1045
        %v1078 = vunpack.c.l.b16 %v1046
        %v1079 = vunpack.c.l.b16 %v1047
        %v1080 = vpack.c.b16 %v1077, %v1076
        %v1081 = vpack.c.b16 %v1079, %v1078
        %v1083 = vcombine.high %v1043, %v1043
        %v1085 = vunpack.c.l.s4 1983009808
        %v1086 = vunpack.c.0.s8 %v1085
        %v1087 = vlaneseq
        %v1088 = vshrl.u32 %v1087, 7
        %v1089 = vsub.s32 %v1086, %v1088
        %v1090 = vrot.slane %v1043, %v1089
        %v1092 = vunpack.c.l.s4 1983009808
        %v1093 = vunpack.c.0.s8 %v1092
        %v1094 = vlaneseq
        %v1095 = vshrl.u32 %v1094, 7
        %v1096 = vsub.s32 %v1093, %v1095
        %v1097 = vrot.slane %v1083, %v1096
        %v1098 = vcombine.high %v1090, %v1090
        %v1099 = vcombine.high %v1097, %v1097
        %v1101 = vsel %vm425, %v1080, 0
        %v1104 = vsel %vm425, %v1081, 0
        %v1107 = vand.u32 %v1090, %v435
        %v1110 = vand.u32 %v1098, %v435
        %v1113 = vand.u32 %v1097, %v435
        %v1116 = vand.u32 %v1099, %v435
        %1118 = vmatprep.subr.bf16.mxu0 %v1110
        %1119 = vmatpush1.bf16.msra.mxu0 %v1107
        %1120 = vmatprep.subr.bf16.mxu0 0
        %1121 = vmatpush1.bf16.msra.mxu0 0
        %1122 = vmatprep.subr.bf16.mxu0 0
        %1123 = vmatpush1.bf16.msra.mxu0 0
        %1124 = vmatprep.subr.bf16.mxu0 0
        %1125 = vmatpush1.bf16.msra.mxu0 0
        %1126 = vmatprep.subr.bf16.mxu0 0
        %1127 = vmatpush1.bf16.msra.mxu0 0
        %1128 = vmatprep.subr.bf16.mxu0 0
        %1129 = vmatpush1.bf16.msra.mxu0 0
        %1130 = vmatprep.subr.bf16.mxu0 0
        %1131 = vmatpush1.bf16.msra.mxu0 0
        %1132 = vmatprep.subr.bf16.mxu0 0
        %1133 = vmatpush1.bf16.msra.mxu0 0
        %1134 = vmatprep.subr.bf16.mxu0 0
        %1135 = vmatpush1.bf16.msra.mxu0 0
        %1136 = vmatprep.subr.bf16.mxu0 0
        %1137 = vmatpush1.bf16.msra.mxu0 0
        %1138 = vmatprep.subr.bf16.mxu0 0
        %1139 = vmatpush1.bf16.msra.mxu0 0
        %1140 = vmatprep.subr.bf16.mxu0 0
        %1141 = vmatpush1.bf16.msra.mxu0 0
        %1142 = vmatprep.subr.bf16.mxu0 0
        %1143 = vmatpush1.bf16.msra.mxu0 0
        %1144 = vmatprep.subr.bf16.mxu0 0
        %1145 = vmatpush1.bf16.msra.mxu0 0
        %1146 = vmatprep.subr.bf16.mxu0 0
        %1147 = vmatpush1.bf16.msra.mxu0 0
        %1148 = vmatprep.subr.bf16.mxu0 0
        %1149 = vmatpush1.bf16.msra.mxu0 0
        %1150 = vmatprep.mubr.bf16.mxu0 0
        %1151 = vmatmul.mubr.bf16.gmra.mrb[0].mxu0 %v1101
        %v1152 = vpop.f32.mrb[0].mxu0
        %v1153 = vadd.f32 %v1055, %v1152
        %v1154 = vpop.f32.mrb[0].mxu0
        %v1155 = vadd.f32 %v1055, %v1154
        %v1156 = vpop.f32.mrb[0].mxu0
        %v1157 = vadd.f32 %v1060, %v1156
        %v1158 = vpop.f32.mrb[0].mxu0
        %v1159 = vadd.f32 %v1060, %v1158
        %1160 = vmatprep.mubr.bf16.mxu0 0
        %1161 = vmatmul.mubr.bf16.gmra.mrb[0].mxu0 %v1104
        %v1162 = vpop.f32.mrb[0].mxu0
        %v1163 = vadd.f32 %v1065, %v1162
        %v1164 = vpop.f32.mrb[0].mxu0
        %v1165 = vadd.f32 %v1065, %v1164
        %v1166 = vpop.f32.mrb[0].mxu0
        %v1167 = vadd.f32 %v1070, %v1166
        %v1168 = vpop.f32.mrb[0].mxu0
        %v1169 = vadd.f32 %v1070, %v1168
        %1170 = vdwg.mxu0
        %1171 = vmatprep.subr.bf16.mxu0 %v1116
        %1172 = vmatpush1.bf16.msra.mxu0 %v1113
        %1173 = vmatprep.subr.bf16.mxu0 0
        %1174 = vmatpush1.bf16.msra.mxu0 0
        %1175 = vmatprep.subr.bf16.mxu0 0
        %1176 = vmatpush1.bf16.msra.mxu0 0
        %1177 = vmatprep.subr.bf16.mxu0 0
        %1178 = vmatpush1.bf16.msra.mxu0 0
        %1179 = vmatprep.subr.bf16.mxu0 0
        %1180 = vmatpush1.bf16.msra.mxu0 0
        %1181 = vmatprep.subr.bf16.mxu0 0
        %1182 = vmatpush1.bf16.msra.mxu0 0
        %1183 = vmatprep.subr.bf16.mxu0 0
        %1184 = vmatpush1.bf16.msra.mxu0 0
        %1185 = vmatprep.subr.bf16.mxu0 0
        %1186 = vmatpush1.bf16.msra.mxu0 0
        %1187 = vmatprep.subr.bf16.mxu0 0
        %1188 = vmatpush1.bf16.msra.mxu0 0
        %1189 = vmatprep.subr.bf16.mxu0 0
        %1190 = vmatpush1.bf16.msra.mxu0 0
        %1191 = vmatprep.subr.bf16.mxu0 0
        %1192 = vmatpush1.bf16.msra.mxu0 0
        %1193 = vmatprep.subr.bf16.mxu0 0
        %1194 = vmatpush1.bf16.msra.mxu0 0
        %1195 = vmatprep.subr.bf16.mxu0 0
        %1196 = vmatpush1.bf16.msra.mxu0 0
        %1197 = vmatprep.subr.bf16.mxu0 0
        %1198 = vmatpush1.bf16.msra.mxu0 0
        %1199 = vmatprep.subr.bf16.mxu0 0
        %1200 = vmatpush1.bf16.msra.mxu0 0
        %1201 = vmatprep.subr.bf16.mxu0 0
        %1202 = vmatpush1.bf16.msra.mxu0 0
        %1203 = vmatprep.mubr.bf16.mxu0 0
        %1204 = vmatmul.mubr.bf16.gmra.mrb[0].mxu0 %v1101
        %v1205 = vpop.f32.mrb[0].mxu0
        %v1206 = vadd.f32 %v1055, %v1205
        %v1207 = vpop.f32.mrb[0].mxu0
        %v1208 = vadd.f32 %v1055, %v1207
        %v1209 = vpop.f32.mrb[0].mxu0
        %v1210 = vadd.f32 %v1060, %v1209
        %v1211 = vpop.f32.mrb[0].mxu0
        %v1212 = vadd.f32 %v1060, %v1211
        %1213 = vmatprep.mubr.bf16.mxu0 0
        %1214 = vmatmul.mubr.bf16.gmra.mrb[0].mxu0 %v1104
        %v1215 = vpop.f32.mrb[0].mxu0
        %v1216 = vadd.f32 %v1065, %v1215
        %v1217 = vpop.f32.mrb[0].mxu0
        %v1218 = vadd.f32 %v1065, %v1217
        %v1219 = vpop.f32.mrb[0].mxu0
        %v1220 = vadd.f32 %v1070, %v1219
        %v1221 = vpop.f32.mrb[0].mxu0
        %v1222 = vadd.f32 %v1070, %v1221
        %1223 = vdwg.mxu0
        %v1224 = vmax.f32 %v1153, 0.0
        %v1225 = vmax.f32 %v1155, 0.0
        %v1226 = vmax.f32 %v1206, 0.0
        %v1227 = vmax.f32 %v1208, 0.0
        %v1228 = vmax.f32 %v1157, 0.0
        %v1229 = vmax.f32 %v1159, 0.0
        %v1230 = vmax.f32 %v1210, 0.0
        %v1231 = vmax.f32 %v1212, 0.0
        %v1232 = vmax.f32 %v1163, 0.0
        %v1233 = vmax.f32 %v1165, 0.0
        %v1234 = vmax.f32 %v1216, 0.0
        %v1235 = vmax.f32 %v1218, 0.0
        %v1236 = vmax.f32 %v1167, 0.0
        %v1237 = vmax.f32 %v1169, 0.0
        %v1238 = vmax.f32 %v1220, 0.0
        %v1239 = vmax.f32 %v1222, 0.0
        %v1240 = vld [vmem:[%s3] sm:$0xf]
        %v1241 = vld [vmem:[%s3 + $0x4] sm:$0xf]
        %v1242 = vld [vmem:[%s3 + $0x8] sm:$0xf]
        %v1243 = vld [vmem:[%s3 + $0xc] sm:$0xf]
        %v1244 = vpack.c.bf16 %v1228, %v1224
        %v1245 = vpack.c.bf16 %v1229, %v1225
        %v1246 = vpack.c.bf16 %v1230, %v1226
        %v1247 = vpack.c.bf16 %v1231, %v1227
        %v1248 = vpack.c.bf16 %v1236, %v1232
        %v1249 = vpack.c.bf16 %v1237, %v1233
        %v1250 = vpack.c.bf16 %v1238, %v1234
        %v1251 = vpack.c.bf16 %v1239, %v1235
        %v1252 = vld [vmem:[%s4] sm:$0xff]
        %v1253 = vld [vmem:[%s4 + $0x8] sm:$0xff]
        %v1254 = vld [vmem:[%s4 + $0x10] sm:$0xff]
        %v1255 = vld [vmem:[%s4 + $0x18] sm:$0xff]
        %1257 = vset.pattern.permute.xlu0 0
        %1258 = vperm.xlu0 %1257, %v1252
        %v1259 = vpop.permute.xlu0 %1258
        %1262 = vset.pattern.permute.xlu0 0
        %1263 = vperm.xlu0 %1262, %v1253
        %v1264 = vpop.permute.xlu0 %1263
        %1267 = vset.pattern.permute.xlu0 0
        %1268 = vperm.xlu0 %1267, %v1254
        %v1269 = vpop.permute.xlu0 %1268
        %1272 = vset.pattern.permute.xlu0 0
        %1273 = vperm.xlu0 %1272, %v1255
        %v1274 = vpop.permute.xlu0 %1273
        %v1280 = vunpack.c.l.b16 %v1240
        %v1281 = vunpack.c.l.b16 %v1241
        %v1282 = vunpack.c.l.b16 %v1242
        %v1283 = vunpack.c.l.b16 %v1243
        %v1284 = vpack.c.b16 %v1281, %v1280
        %v1285 = vpack.c.b16 %v1283, %v1282
        %v1287 = vsel %vm616, %v1284, 0
        %v1290 = vsel %vm616, %v1285, 0
        %1292 = vmatprep.subr.bf16.mxu0 %v1245
        %1293 = vmatpush1.bf16.msra.mxu0 %v1244
        %1294 = vmatprep.subr.bf16.mxu0 %v1249
        %1295 = vmatpush1.bf16.msra.mxu0 %v1248
        %1296 = vmatprep.subr.bf16.mxu0 0
        %1297 = vmatpush1.bf16.msra.mxu0 0
        %1298 = vmatprep.subr.bf16.mxu0 0
        %1299 = vmatpush1.bf16.msra.mxu0 0
        %1300 = vmatprep.subr.bf16.mxu0 0
        %1301 = vmatpush1.bf16.msra.mxu0 0
        %1302 = vmatprep.subr.bf16.mxu0 0
        %1303 = vmatpush1.bf16.msra.mxu0 0
        %1304 = vmatprep.subr.bf16.mxu0 0
        %1305 = vmatpush1.bf16.msra.mxu0 0
        %1306 = vmatprep.subr.bf16.mxu0 0
        %1307 = vmatpush1.bf16.msra.mxu0 0
        %1308 = vmatprep.subr.bf16.mxu0 0
        %1309 = vmatpush1.bf16.msra.mxu0 0
        %1310 = vmatprep.subr.bf16.mxu0 0
        %1311 = vmatpush1.bf16.msra.mxu0 0
        %1312 = vmatprep.subr.bf16.mxu0 0
        %1313 = vmatpush1.bf16.msra.mxu0 0
        %1314 = vmatprep.subr.bf16.mxu0 0
        %1315 = vmatpush1.bf16.msra.mxu0 0
        %1316 = vmatprep.subr.bf16.mxu0 0
        %1317 = vmatpush1.bf16.msra.mxu0 0
        %1318 = vmatprep.subr.bf16.mxu0 0
        %1319 = vmatpush1.bf16.msra.mxu0 0
        %1320 = vmatprep.subr.bf16.mxu0 0
        %1321 = vmatpush1.bf16.msra.mxu0 0
        %1322 = vmatprep.subr.bf16.mxu0 0
        %1323 = vmatpush1.bf16.msra.mxu0 0
        %1324 = vmatprep.mubr.bf16.mxu0 0
        %1325 = vmatmul.mubr.bf16.gmra.mrb[0].mxu0 %v1287
        %v1326 = vpop.f32.mrb[0].mxu0
        %v1327 = vadd.f32 %v1259, %v1326
        %v1328 = vpop.f32.mrb[0].mxu0
        %v1329 = vadd.f32 %v1259, %v1328
        %v1330 = vpop.f32.mrb[0].mxu0
        %v1331 = vadd.f32 %v1264, %v1330
        %v1332 = vpop.f32.mrb[0].mxu0
        %v1333 = vadd.f32 %v1264, %v1332
        %1334 = vmatprep.mubr.bf16.mxu0 0
        %1335 = vmatmul.mubr.bf16.gmra.mrb[0].mxu0 %v1290
        %v1336 = vpop.f32.mrb[0].mxu0
        %v1337 = vadd.f32 %v1269, %v1336
        %v1338 = vpop.f32.mrb[0].mxu0
        %v1339 = vadd.f32 %v1269, %v1338
        %v1340 = vpop.f32.mrb[0].mxu0
        %v1341 = vadd.f32 %v1274, %v1340
        %v1342 = vpop.f32.mrb[0].mxu0
        %v1343 = vadd.f32 %v1274, %v1342
        %1344 = vdwg.mxu0
        %1345 = vmatprep.subr.bf16.mxu0 %v1247
        %1346 = vmatpush1.bf16.msra.mxu0 %v1246
        %1347 = vmatprep.subr.bf16.mxu0 %v1251
        %1348 = vmatpush1.bf16.msra.mxu0 %v1250
        %1349 = vmatprep.subr.bf16.mxu0 0
        %1350 = vmatpush1.bf16.msra.mxu0 0
        %1351 = vmatprep.subr.bf16.mxu0 0
        %1352 = vmatpush1.bf16.msra.mxu0 0
        %1353 = vmatprep.subr.bf16.mxu0 0
        %1354 = vmatpush1.bf16.msra.mxu0 0
        %1355 = vmatprep.subr.bf16.mxu0 0
        %1356 = vmatpush1.bf16.msra.mxu0 0
        %1357 = vmatprep.subr.bf16.mxu0 0
        %1358 = vmatpush1.bf16.msra.mxu0 0
        %1359 = vmatprep.subr.bf16.mxu0 0
        %1360 = vmatpush1.bf16.msra.mxu0 0
        %1361 = vmatprep.subr.bf16.mxu0 0
        %1362 = vmatpush1.bf16.msra.mxu0 0
        %1363 = vmatprep.subr.bf16.mxu0 0
        %1364 = vmatpush1.bf16.msra.mxu0 0
        %1365 = vmatprep.subr.bf16.mxu0 0
        %1366 = vmatpush1.bf16.msra.mxu0 0
        %1367 = vmatprep.subr.bf16.mxu0 0
        %1368 = vmatpush1.bf16.msra.mxu0 0
        %1369 = vmatprep.subr.bf16.mxu0 0
        %1370 = vmatpush1.bf16.msra.mxu0 0
        %1371 = vmatprep.subr.bf16.mxu0 0
        %1372 = vmatpush1.bf16.msra.mxu0 0
        %1373 = vmatprep.subr.bf16.mxu0 0
        %1374 = vmatpush1.bf16.msra.mxu0 0
        %1375 = vmatprep.subr.bf16.mxu0 0
        %1376 = vmatpush1.bf16.msra.mxu0 0
        %1377 = vmatprep.mubr.bf16.mxu0 0
        %1378 = vmatmul.mubr.bf16.gmra.mrb[0].mxu0 %v1287
        %v1379 = vpop.f32.mrb[0].mxu0
        %v1380 = vadd.f32 %v1259, %v1379
        %v1381 = vpop.f32.mrb[0].mxu0
        %v1382 = vadd.f32 %v1259, %v1381
        %v1383 = vpop.f32.mrb[0].mxu0
        %v1384 = vadd.f32 %v1264, %v1383
        %v1385 = vpop.f32.mrb[0].mxu0
        %v1386 = vadd.f32 %v1264, %v1385
        %1387 = vmatprep.mubr.bf16.mxu0 0
        %1388 = vmatmul.mubr.bf16.gmra.mrb[0].mxu0 %v1290
        %v1389 = vpop.f32.mrb[0].mxu0
        %v1390 = vadd.f32 %v1269, %v1389
        %v1391 = vpop.f32.mrb[0].mxu0
        %v1392 = vadd.f32 %v1269, %v1391
        %v1393 = vpop.f32.mrb[0].mxu0
        %v1394 = vadd.f32 %v1274, %v1393
        %v1395 = vpop.f32.mrb[0].mxu0
        %v1396 = vadd.f32 %v1274, %v1395
        %1397 = vdwg.mxu0
        %v1398 = vmax.f32 %v1327, 0.0
        %v1399 = vmax.f32 %v1329, 0.0
        %v1400 = vmax.f32 %v1380, 0.0
        %v1401 = vmax.f32 %v1382, 0.0
        %v1402 = vmax.f32 %v1331, 0.0
        %v1403 = vmax.f32 %v1333, 0.0
        %v1404 = vmax.f32 %v1384, 0.0
        %v1405 = vmax.f32 %v1386, 0.0
        %v1406 = vmax.f32 %v1337, 0.0
        %v1407 = vmax.f32 %v1339, 0.0
        %v1408 = vmax.f32 %v1390, 0.0
        %v1409 = vmax.f32 %v1392, 0.0
        %v1410 = vmax.f32 %v1341, 0.0
        %v1411 = vmax.f32 %v1343, 0.0
        %v1412 = vmax.f32 %v1394, 0.0
        %v1413 = vmax.f32 %v1396, 0.0
        %v1414 = vld [vmem:[%s5] sm:$0xf]
        %v1415 = vld [vmem:[%s5 + $0x4] sm:$0xf]
        %v1416 = vld [vmem:[%s5 + $0x8] sm:$0xf]
        %v1417 = vld [vmem:[%s5 + $0xc] sm:$0xf]
        %v1418 = vpack.c.bf16 %v1402, %v1398
        %v1419 = vpack.c.bf16 %v1403, %v1399
        %v1420 = vpack.c.bf16 %v1404, %v1400
        %v1421 = vpack.c.bf16 %v1405, %v1401
        %v1422 = vpack.c.bf16 %v1410, %v1406
        %v1423 = vpack.c.bf16 %v1411, %v1407
        %v1424 = vpack.c.bf16 %v1412, %v1408
        %v1425 = vpack.c.bf16 %v1413, %v1409
        %v1426 = vld [vmem:[%s6] sm:$0xff]
        %v1427 = vld [vmem:[%s6 + $0x8] sm:$0xff]
        %v1428 = vld [vmem:[%s6 + $0x10] sm:$0xff]
        %v1429 = vld [vmem:[%s6 + $0x18] sm:$0xff]
        %1431 = vset.pattern.permute.xlu0 0
        %1432 = vperm.xlu0 %1431, %v1426
        %v1433 = vpop.permute.xlu0 %1432
        %1436 = vset.pattern.permute.xlu0 0
        %1437 = vperm.xlu0 %1436, %v1427
        %v1438 = vpop.permute.xlu0 %1437
        %1441 = vset.pattern.permute.xlu0 0
        %1442 = vperm.xlu0 %1441, %v1428
        %v1443 = vpop.permute.xlu0 %1442
        %1446 = vset.pattern.permute.xlu0 0
        %1447 = vperm.xlu0 %1446, %v1429
        %v1448 = vpop.permute.xlu0 %1447
        %v1454 = vunpack.c.l.b16 %v1414
        %v1455 = vunpack.c.l.b16 %v1415
        %v1456 = vunpack.c.l.b16 %v1416
        %v1457 = vunpack.c.l.b16 %v1417
        %v1458 = vpack.c.b16 %v1455, %v1454
        %v1459 = vpack.c.b16 %v1457, %v1456
        %v1461 = vsel %vm616, %v1458, 0
        %v1464 = vsel %vm616, %v1459, 0
        %1466 = vmatprep.subr.bf16.mxu0 %v1419
        %1467 = vmatpush1.bf16.msra.mxu0 %v1418
        %1468 = vmatprep.subr.bf16.mxu0 %v1423
        %1469 = vmatpush1.bf16.msra.mxu0 %v1422
        %1470 = vmatprep.subr.bf16.mxu0 0
        %1471 = vmatpush1.bf16.msra.mxu0 0
        %1472 = vmatprep.subr.bf16.mxu0 0
        %1473 = vmatpush1.bf16.msra.mxu0 0
        %1474 = vmatprep.subr.bf16.mxu0 0
        %1475 = vmatpush1.bf16.msra.mxu0 0
        %1476 = vmatprep.subr.bf16.mxu0 0
        %1477 = vmatpush1.bf16.msra.mxu0 0
        %1478 = vmatprep.subr.bf16.mxu0 0
        %1479 = vmatpush1.bf16.msra.mxu0 0
        %1480 = vmatprep.subr.bf16.mxu0 0
        %1481 = vmatpush1.bf16.msra.mxu0 0
        %1482 = vmatprep.subr.bf16.mxu0 0
        %1483 = vmatpush1.bf16.msra.mxu0 0
        %1484 = vmatprep.subr.bf16.mxu0 0
        %1485 = vmatpush1.bf16.msra.mxu0 0
        %1486 = vmatprep.subr.bf16.mxu0 0
        %1487 = vmatpush1.bf16.msra.mxu0 0
        %1488 = vmatprep.subr.bf16.mxu0 0
        %1489 = vmatpush1.bf16.msra.mxu0 0
        %1490 = vmatprep.subr.bf16.mxu0 0
        %1491 = vmatpush1.bf16.msra.mxu0 0
        %1492 = vmatprep.subr.bf16.mxu0 0
        %1493 = vmatpush1.bf16.msra.mxu0 0
        %1494 = vmatprep.subr.bf16.mxu0 0
        %1495 = vmatpush1.bf16.msra.mxu0 0
        %1496 = vmatprep.subr.bf16.mxu0 0
        %1497 = vmatpush1.bf16.msra.mxu0 0
        %1498 = vmatprep.mubr.bf16.mxu0 0
        %1499 = vmatmul.mubr.bf16.gmra.mrb[0].mxu0 %v1461
        %v1500 = vpop.f32.mrb[0].mxu0
        %v1501 = vadd.f32 %v1433, %v1500
        %v1502 = vpop.f32.mrb[0].mxu0
        %v1503 = vadd.f32 %v1433, %v1502
        %v1504 = vpop.f32.mrb[0].mxu0
        %v1505 = vadd.f32 %v1438, %v1504
        %v1506 = vpop.f32.mrb[0].mxu0
        %v1507 = vadd.f32 %v1438, %v1506
        %1508 = vmatprep.mubr.bf16.mxu0 0
        %1509 = vmatmul.mubr.bf16.gmra.mrb[0].mxu0 %v1464
        %v1510 = vpop.f32.mrb[0].mxu0
        %v1511 = vadd.f32 %v1443, %v1510
        %v1512 = vpop.f32.mrb[0].mxu0
        %v1513 = vadd.f32 %v1443, %v1512
        %v1514 = vpop.f32.mrb[0].mxu0
        %v1515 = vadd.f32 %v1448, %v1514
        %v1516 = vpop.f32.mrb[0].mxu0
        %v1517 = vadd.f32 %v1448, %v1516
        %1518 = vdwg.mxu0
        %1519 = vmatprep.subr.bf16.mxu0 %v1421
        %1520 = vmatpush1.bf16.msra.mxu0 %v1420
        %1521 = vmatprep.subr.bf16.mxu0 %v1425
        %1522 = vmatpush1.bf16.msra.mxu0 %v1424
        %1523 = vmatprep.subr.bf16.mxu0 0
        %1524 = vmatpush1.bf16.msra.mxu0 0
        %1525 = vmatprep.subr.bf16.mxu0 0
        %1526 = vmatpush1.bf16.msra.mxu0 0
        %1527 = vmatprep.subr.bf16.mxu0 0
        %1528 = vmatpush1.bf16.msra.mxu0 0
        %1529 = vmatprep.subr.bf16.mxu0 0
        %1530 = vmatpush1.bf16.msra.mxu0 0
        %1531 = vmatprep.subr.bf16.mxu0 0
        %1532 = vmatpush1.bf16.msra.mxu0 0
        %1533 = vmatprep.subr.bf16.mxu0 0
        %1534 = vmatpush1.bf16.msra.mxu0 0
        %1535 = vmatprep.subr.bf16.mxu0 0
        %1536 = vmatpush1.bf16.msra.mxu0 0
        %1537 = vmatprep.subr.bf16.mxu0 0
        %1538 = vmatpush1.bf16.msra.mxu0 0
        %1539 = vmatprep.subr.bf16.mxu0 0
        %1540 = vmatpush1.bf16.msra.mxu0 0
        %1541 = vmatprep.subr.bf16.mxu0 0
        %1542 = vmatpush1.bf16.msra.mxu0 0
        %1543 = vmatprep.subr.bf16.mxu0 0
        %1544 = vmatpush1.bf16.msra.mxu0 0
        %1545 = vmatprep.subr.bf16.mxu0 0
        %1546 = vmatpush1.bf16.msra.mxu0 0
        %1547 = vmatprep.subr.bf16.mxu0 0
        %1548 = vmatpush1.bf16.msra.mxu0 0
        %1549 = vmatprep.subr.bf16.mxu0 0
        %1550 = vmatpush1.bf16.msra.mxu0 0
        %1551 = vmatprep.mubr.bf16.mxu0 0
        %1552 = vmatmul.mubr.bf16.gmra.mrb[0].mxu0 %v1461
        %v1553 = vpop.f32.mrb[0].mxu0
        %v1554 = vadd.f32 %v1433, %v1553
        %v1555 = vpop.f32.mrb[0].mxu0
        %v1556 = vadd.f32 %v1433, %v1555
        %v1557 = vpop.f32.mrb[0].mxu0
        %v1558 = vadd.f32 %v1438, %v1557
        %v1559 = vpop.f32.mrb[0].mxu0
        %v1560 = vadd.f32 %v1438, %v1559
        %1561 = vmatprep.mubr.bf16.mxu0 0
        %1562 = vmatmul.mubr.bf16.gmra.mrb[0].mxu0 %v1464
        %v1563 = vpop.f32.mrb[0].mxu0
        %v1564 = vadd.f32 %v1443, %v1563
        %v1565 = vpop.f32.mrb[0].mxu0
        %v1566 = vadd.f32 %v1443, %v1565
        %v1567 = vpop.f32.mrb[0].mxu0
        %v1568 = vadd.f32 %v1448, %v1567
        %v1569 = vpop.f32.mrb[0].mxu0
        %v1570 = vadd.f32 %v1448, %v1569
        %1571 = vdwg.mxu0
        %v1572 = vmax.f32 %v1501, 0.0
        %v1573 = vmax.f32 %v1503, 0.0
        %v1574 = vmax.f32 %v1554, 0.0
        %v1575 = vmax.f32 %v1556, 0.0
        %v1576 = vmax.f32 %v1505, 0.0
        %v1577 = vmax.f32 %v1507, 0.0
        %v1578 = vmax.f32 %v1558, 0.0
        %v1579 = vmax.f32 %v1560, 0.0
        %v1580 = vmax.f32 %v1511, 0.0
        %v1581 = vmax.f32 %v1513, 0.0
        %v1582 = vmax.f32 %v1564, 0.0
        %v1583 = vmax.f32 %v1566, 0.0
        %v1584 = vmax.f32 %v1515, 0.0
        %v1585 = vmax.f32 %v1517, 0.0
        %v1586 = vmax.f32 %v1568, 0.0
        %v1587 = vmax.f32 %v1570, 0.0
        %v1588 = vld [vmem:[%s7] sm:$0xff]
        %v1589 = vld [vmem:[%s7 + $0x8] sm:$0xff]
        %v1590 = vld [vmem:[%s7 + $0x10] sm:$0xff]
        %v1591 = vld [vmem:[%s7 + $0x18] sm:$0xff]
        %1593 = vset.pattern.permute.xlu0 0
        %1594 = vperm.xlu0 %1593, %v1588
        %v1595 = vpop.permute.xlu0 %1594
        %1598 = vset.pattern.permute.xlu0 0
        %1599 = vperm.xlu0 %1598, %v1589
        %v1600 = vpop.permute.xlu0 %1599
        %1603 = vset.pattern.permute.xlu0 0
        %1604 = vperm.xlu0 %1603, %v1590
        %v1605 = vpop.permute.xlu0 %1604
        %1608 = vset.pattern.permute.xlu0 0
        %1609 = vperm.xlu0 %1608, %v1591
        %v1610 = vpop.permute.xlu0 %1609
        %v1612 = vmul.f32 %v1595, %v1572
        %v1613 = vmul.f32 %v1595, %v1573
        %v1614 = vmul.f32 %v1595, %v1574
        %v1615 = vmul.f32 %v1595, %v1575
        %v1616 = vmul.f32 %v1600, %v1576
        %v1617 = vmul.f32 %v1600, %v1577
        %v1618 = vmul.f32 %v1600, %v1578
        %v1619 = vmul.f32 %v1600, %v1579
        %v1620 = vmul.f32 %v1605, %v1580
        %v1621 = vmul.f32 %v1605, %v1581
        %v1622 = vmul.f32 %v1605, %v1582
        %v1623 = vmul.f32 %v1605, %v1583
        %v1624 = vmul.f32 %v1610, %v1584
        %v1625 = vmul.f32 %v1610, %v1585
        %v1626 = vmul.f32 %v1610, %v1586
        %v1627 = vmul.f32 %v1610, %v1587
        %v1628 = vadd.f32 %v1612, %v1616
        %v1629 = vadd.f32 %v1628, %v1620
        %v1630 = vadd.f32 %v1629, %v1624
        %v1631 = vrot.slane %v1630, 4
        %v1632 = vadd.f32 %v1630, %v1631
        %v1633 = vrot.slane %v1632, 2
        %v1634 = vadd.f32 %v1632, %v1633
        %v1635 = vrot.slane %v1634, 1
        %v1636 = vadd.f32 %v1634, %v1635
        %v1637 = vadd.f32 %v1613, %v1617
        %v1638 = vadd.f32 %v1637, %v1621
        %v1639 = vadd.f32 %v1638, %v1625
        %v1640 = vrot.slane %v1639, 4
        %v1641 = vadd.f32 %v1639, %v1640
        %v1642 = vrot.slane %v1641, 2
        %v1643 = vadd.f32 %v1641, %v1642
        %v1644 = vrot.slane %v1643, 1
        %v1645 = vadd.f32 %v1643, %v1644
        %v1646 = vadd.f32 %v1614, %v1618
        %v1647 = vadd.f32 %v1646, %v1622
        %v1648 = vadd.f32 %v1647, %v1626
        %v1649 = vrot.slane %v1648, 4
        %v1650 = vadd.f32 %v1648, %v1649
        %v1651 = vrot.slane %v1650, 2
        %v1652 = vadd.f32 %v1650, %v1651
        %v1653 = vrot.slane %v1652, 1
        %v1654 = vadd.f32 %v1652, %v1653
        %v1655 = vadd.f32 %v1615, %v1619
        %v1656 = vadd.f32 %v1655, %v1623
        %v1657 = vadd.f32 %v1656, %v1627
        %v1658 = vrot.slane %v1657, 4
        %v1659 = vadd.f32 %v1657, %v1658
        %v1660 = vrot.slane %v1659, 2
        %v1661 = vadd.f32 %v1659, %v1660
        %v1662 = vrot.slane %v1661, 1
        %v1663 = vadd.f32 %v1661, %v1662
        %v1664 = vld [vmem:[#allocation2] sm:$0x1]
        %1666 = vset.pattern.permute.xlu0 0
        %1667 = vperm.xlu0 %1666, %v1664
        %v1668 = vpop.permute.xlu0 %1667
        %v1670 = vlaneseq
        %v1671 = vshrl.u32 %v1670, 7
        %v1672 = vsub.s32 0, %v1671
        %v1673 = vrot.slane %v1668, %v1672
        %v1674 = vadd.f32 %v1636, %v1673
        %v1675 = vadd.f32 %v1645, %v1673
        %v1676 = vadd.f32 %v1654, %v1673
        %v1677 = vadd.f32 %v1663, %v1673
        %v1682 = vcombine.low %v1674, %v1675
        %v1683 = vcombine.low %v1676, %v1677
        %v1685 = vunpack.c.l.s4 1966171168
        %v1686 = vunpack.c.0.s8 %v1685
        %v1687 = vlaneseq
        %v1688 = vshrl.u32 %v1687, 7
        %v1689 = vsub.s32 %v1686, %v1688
        %v1690 = vrot.slane %v1682, %v1689
        %v1692 = vunpack.c.l.s4 1966171168
        %v1693 = vunpack.c.0.s8 %v1692
        %v1694 = vlaneseq
        %v1695 = vshrl.u32 %v1694, 7
        %v1696 = vsub.s32 %v1693, %v1695
        %v1697 = vrot.slane %v1683, %v1696
        %v1698 = vcombine.low %v1690, %v1697
        %v1700 = vunpack.c.l.s4 1966171168
        %v1701 = vunpack.c.0.s8 %v1700
        %v1702 = vlaneseq
        %v1703 = vshrl.u32 %v1702, 7
        %v1704 = vsub.s32 %v1701, %v1703
        %v1705 = vrot.slane %v1698, %v1704
        %1707 = vst.msk [vmem:[%s356 + $0x4] sm:$0xf] %vm1041, %v1705
        %v1708 = vld [vmem:[%s322 + $0x10] sm:$0xff]
        %v1709 = vld [vmem:[%s1] sm:$0xf]
        %v1710 = vld [vmem:[%s1 + $0x4] sm:$0xf]
        %v1711 = vld [vmem:[%s1 + $0x8] sm:$0xf]
        %v1712 = vld [vmem:[%s1 + $0xc] sm:$0xf]
        %v1713 = vld [vmem:[%s2] sm:$0xff]
        %v1714 = vld [vmem:[%s2 + $0x8] sm:$0xff]
        %v1715 = vld [vmem:[%s2 + $0x10] sm:$0xff]
        %v1716 = vld [vmem:[%s2 + $0x18] sm:$0xff]
        %1718 = vset.pattern.permute.xlu0 0
        %1719 = vperm.xlu0 %1718, %v1713
        %v1720 = vpop.permute.xlu0 %1719
        %1723 = vset.pattern.permute.xlu0 0
        %1724 = vperm.xlu0 %1723, %v1714
        %v1725 = vpop.permute.xlu0 %1724
        %1728 = vset.pattern.permute.xlu0 0
        %1729 = vperm.xlu0 %1728, %v1715
        %v1730 = vpop.permute.xlu0 %1729
        %1733 = vset.pattern.permute.xlu0 0
        %1734 = vperm.xlu0 %1733, %v1716
        %v1735 = vpop.permute.xlu0 %1734
        %v1741 = vunpack.c.l.b16 %v1709
        %v1742 = vunpack.c.l.b16 %v1710
        %v1743 = vunpack.c.l.b16 %v1711
        %v1744 = vunpack.c.l.b16 %v1712
        %v1745 = vpack.c.b16 %v1742, %v1741
        %v1746 = vpack.c.b16 %v1744, %v1743
        %v1748 = vcombine.high %v1708, %v1708
        %v1750 = vunpack.c.l.s4 1983009808
        %v1751 = vunpack.c.0.s8 %v1750
        %v1752 = vlaneseq
        %v1753 = vshrl.u32 %v1752, 7
        %v1754 = vsub.s32 %v1751, %v1753
        %v1755 = vrot.slane %v1708, %v1754
        %v1757 = vunpack.c.l.s4 1983009808
        %v1758 = vunpack.c.0.s8 %v1757
        %v1759 = vlaneseq
        %v1760 = vshrl.u32 %v1759, 7
        %v1761 = vsub.s32 %v1758, %v1760
        %v1762 = vrot.slane %v1748, %v1761
        %v1763 = vcombine.high %v1755, %v1755
        %v1764 = vcombine.high %v1762, %v1762
        %v1766 = vsel %vm425, %v1745, 0
        %v1769 = vsel %vm425, %v1746, 0
        %v1772 = vand.u32 %v1755, %v435
        %v1775 = vand.u32 %v1763, %v435
        %v1778 = vand.u32 %v1762, %v435
        %v1781 = vand.u32 %v1764, %v435
        %1783 = vmatprep.subr.bf16.mxu0 %v1775
        %1784 = vmatpush1.bf16.msra.mxu0 %v1772
        %1785 = vmatprep.subr.bf16.mxu0 0
        %1786 = vmatpush1.bf16.msra.mxu0 0
        %1787 = vmatprep.subr.bf16.mxu0 0
        %1788 = vmatpush1.bf16.msra.mxu0 0
        %1789 = vmatprep.subr.bf16.mxu0 0
        %1790 = vmatpush1.bf16.msra.mxu0 0
        %1791 = vmatprep.subr.bf16.mxu0 0
        %1792 = vmatpush1.bf16.msra.mxu0 0
        %1793 = vmatprep.subr.bf16.mxu0 0
        %1794 = vmatpush1.bf16.msra.mxu0 0
        %1795 = vmatprep.subr.bf16.mxu0 0
        %1796 = vmatpush1.bf16.msra.mxu0 0
        %1797 = vmatprep.subr.bf16.mxu0 0
        %1798 = vmatpush1.bf16.msra.mxu0 0
        %1799 = vmatprep.subr.bf16.mxu0 0
        %1800 = vmatpush1.bf16.msra.mxu0 0
        %1801 = vmatprep.subr.bf16.mxu0 0
        %1802 = vmatpush1.bf16.msra.mxu0 0
        %1803 = vmatprep.subr.bf16.mxu0 0
        %1804 = vmatpush1.bf16.msra.mxu0 0
        %1805 = vmatprep.subr.bf16.mxu0 0
        %1806 = vmatpush1.bf16.msra.mxu0 0
        %1807 = vmatprep.subr.bf16.mxu0 0
        %1808 = vmatpush1.bf16.msra.mxu0 0
        %1809 = vmatprep.subr.bf16.mxu0 0
        %1810 = vmatpush1.bf16.msra.mxu0 0
        %1811 = vmatprep.subr.bf16.mxu0 0
        %1812 = vmatpush1.bf16.msra.mxu0 0
        %1813 = vmatprep.subr.bf16.mxu0 0
        %1814 = vmatpush1.bf16.msra.mxu0 0
        %1815 = vmatprep.mubr.bf16.mxu0 0
        %1816 = vmatmul.mubr.bf16.gmra.mrb[0].mxu0 %v1766
        %v1817 = vpop.f32.mrb[0].mxu0
        %v1818 = vadd.f32 %v1720, %v1817
        %v1819 = vpop.f32.mrb[0].mxu0
        %v1820 = vadd.f32 %v1720, %v1819
        %v1821 = vpop.f32.mrb[0].mxu0
        %v1822 = vadd.f32 %v1725, %v1821
        %v1823 = vpop.f32.mrb[0].mxu0
        %v1824 = vadd.f32 %v1725, %v1823
        %1825 = vmatprep.mubr.bf16.mxu0 0
        %1826 = vmatmul.mubr.bf16.gmra.mrb[0].mxu0 %v1769
        %v1827 = vpop.f32.mrb[0].mxu0
        %v1828 = vadd.f32 %v1730, %v1827
        %v1829 = vpop.f32.mrb[0].mxu0
        %v1830 = vadd.f32 %v1730, %v1829
        %v1831 = vpop.f32.mrb[0].mxu0
        %v1832 = vadd.f32 %v1735, %v1831
        %v1833 = vpop.f32.mrb[0].mxu0
        %v1834 = vadd.f32 %v1735, %v1833
        %1835 = vdwg.mxu0
        %1836 = vmatprep.subr.bf16.mxu0 %v1781
        %1837 = vmatpush1.bf16.msra.mxu0 %v1778
        %1838 = vmatprep.subr.bf16.mxu0 0
        %1839 = vmatpush1.bf16.msra.mxu0 0
        %1840 = vmatprep.subr.bf16.mxu0 0
        %1841 = vmatpush1.bf16.msra.mxu0 0
        %1842 = vmatprep.subr.bf16.mxu0 0
        %1843 = vmatpush1.bf16.msra.mxu0 0
        %1844 = vmatprep.subr.bf16.mxu0 0
        %1845 = vmatpush1.bf16.msra.mxu0 0
        %1846 = vmatprep.subr.bf16.mxu0 0
        %1847 = vmatpush1.bf16.msra.mxu0 0
        %1848 = vmatprep.subr.bf16.mxu0 0
        %1849 = vmatpush1.bf16.msra.mxu0 0
        %1850 = vmatprep.subr.bf16.mxu0 0
        %1851 = vmatpush1.bf16.msra.mxu0 0
        %1852 = vmatprep.subr.bf16.mxu0 0
        %1853 = vmatpush1.bf16.msra.mxu0 0
        %1854 = vmatprep.subr.bf16.mxu0 0
        %1855 = vmatpush1.bf16.msra.mxu0 0
        %1856 = vmatprep.subr.bf16.mxu0 0
        %1857 = vmatpush1.bf16.msra.mxu0 0
        %1858 = vmatprep.subr.bf16.mxu0 0
        %1859 = vmatpush1.bf16.msra.mxu0 0
        %1860 = vmatprep.subr.bf16.mxu0 0
        %1861 = vmatpush1.bf16.msra.mxu0 0
        %1862 = vmatprep.subr.bf16.mxu0 0
        %1863 = vmatpush1.bf16.msra.mxu0 0
        %1864 = vmatprep.subr.bf16.mxu0 0
        %1865 = vmatpush1.bf16.msra.mxu0 0
        %1866 = vmatprep.subr.bf16.mxu0 0
        %1867 = vmatpush1.bf16.msra.mxu0 0
        %1868 = vmatprep.mubr.bf16.mxu0 0
        %1869 = vmatmul.mubr.bf16.gmra.mrb[0].mxu0 %v1766
        %v1870 = vpop.f32.mrb[0].mxu0
        %v1871 = vadd.f32 %v1720, %v1870
        %v1872 = vpop.f32.mrb[0].mxu0
        %v1873 = vadd.f32 %v1720, %v1872
        %v1874 = vpop.f32.mrb[0].mxu0
        %v1875 = vadd.f32 %v1725, %v1874
        %v1876 = vpop.f32.mrb[0].mxu0
        %v1877 = vadd.f32 %v1725, %v1876
        %1878 = vmatprep.mubr.bf16.mxu0 0
        %1879 = vmatmul.mubr.bf16.gmra.mrb[0].mxu0 %v1769
        %v1880 = vpop.f32.mrb[0].mxu0
        %v1881 = vadd.f32 %v1730, %v1880
        %v1882 = vpop.f32.mrb[0].mxu0
        %v1883 = vadd.f32 %v1730, %v1882
        %v1884 = vpop.f32.mrb[0].mxu0
        %v1885 = vadd.f32 %v1735, %v1884
        %v1886 = vpop.f32.mrb[0].mxu0
        %v1887 = vadd.f32 %v1735, %v1886
        %1888 = vdwg.mxu0
        %v1889 = vmax.f32 %v1818, 0.0
        %v1890 = vmax.f32 %v1820, 0.0
        %v1891 = vmax.f32 %v1871, 0.0
        %v1892 = vmax.f32 %v1873, 0.0
        %v1893 = vmax.f32 %v1822, 0.0
        %v1894 = vmax.f32 %v1824, 0.0
        %v1895 = vmax.f32 %v1875, 0.0
        %v1896 = vmax.f32 %v1877, 0.0
        %v1897 = vmax.f32 %v1828, 0.0
        %v1898 = vmax.f32 %v1830, 0.0
        %v1899 = vmax.f32 %v1881, 0.0
        %v1900 = vmax.f32 %v1883, 0.0
        %v1901 = vmax.f32 %v1832, 0.0
        %v1902 = vmax.f32 %v1834, 0.0
        %v1903 = vmax.f32 %v1885, 0.0
        %v1904 = vmax.f32 %v1887, 0.0
        %v1905 = vld [vmem:[%s3] sm:$0xf]
        %v1906 = vld [vmem:[%s3 + $0x4] sm:$0xf]
        %v1907 = vld [vmem:[%s3 + $0x8] sm:$0xf]
        %v1908 = vld [vmem:[%s3 + $0xc] sm:$0xf]
        %v1909 = vpack.c.bf16 %v1893, %v1889
        %v1910 = vpack.c.bf16 %v1894, %v1890
        %v1911 = vpack.c.bf16 %v1895, %v1891
        %v1912 = vpack.c.bf16 %v1896, %v1892
        %v1913 = vpack.c.bf16 %v1901, %v1897
        %v1914 = vpack.c.bf16 %v1902, %v1898
        %v1915 = vpack.c.bf16 %v1903, %v1899
        %v1916 = vpack.c.bf16 %v1904, %v1900
        %v1917 = vld [vmem:[%s4] sm:$0xff]
        %v1918 = vld [vmem:[%s4 + $0x8] sm:$0xff]
        %v1919 = vld [vmem:[%s4 + $0x10] sm:$0xff]
        %v1920 = vld [vmem:[%s4 + $0x18] sm:$0xff]
        %1922 = vset.pattern.permute.xlu0 0
        %1923 = vperm.xlu0 %1922, %v1917
        %v1924 = vpop.permute.xlu0 %1923
        %1927 = vset.pattern.permute.xlu0 0
        %1928 = vperm.xlu0 %1927, %v1918
        %v1929 = vpop.permute.xlu0 %1928
        %1932 = vset.pattern.permute.xlu0 0
        %1933 = vperm.xlu0 %1932, %v1919
        %v1934 = vpop.permute.xlu0 %1933
        %1937 = vset.pattern.permute.xlu0 0
        %1938 = vperm.xlu0 %1937, %v1920
        %v1939 = vpop.permute.xlu0 %1938
        %v1945 = vunpack.c.l.b16 %v1905
        %v1946 = vunpack.c.l.b16 %v1906
        %v1947 = vunpack.c.l.b16 %v1907
        %v1948 = vunpack.c.l.b16 %v1908
        %v1949 = vpack.c.b16 %v1946, %v1945
        %v1950 = vpack.c.b16 %v1948, %v1947
        %v1952 = vsel %vm616, %v1949, 0
        %v1955 = vsel %vm616, %v1950, 0
        %1957 = vmatprep.subr.bf16.mxu0 %v1910
        %1958 = vmatpush1.bf16.msra.mxu0 %v1909
        %1959 = vmatprep.subr.bf16.mxu0 %v1914
        %1960 = vmatpush1.bf16.msra.mxu0 %v1913
        %1961 = vmatprep.subr.bf16.mxu0 0
        %1962 = vmatpush1.bf16.msra.mxu0 0
        %1963 = vmatprep.subr.bf16.mxu0 0
        %1964 = vmatpush1.bf16.msra.mxu0 0
        %1965 = vmatprep.subr.bf16.mxu0 0
        %1966 = vmatpush1.bf16.msra.mxu0 0
        %1967 = vmatprep.subr.bf16.mxu0 0
        %1968 = vmatpush1.bf16.msra.mxu0 0
        %1969 = vmatprep.subr.bf16.mxu0 0
        %1970 = vmatpush1.bf16.msra.mxu0 0
        %1971 = vmatprep.subr.bf16.mxu0 0
        %1972 = vmatpush1.bf16.msra.mxu0 0
        %1973 = vmatprep.subr.bf16.mxu0 0
        %1974 = vmatpush1.bf16.msra.mxu0 0
        %1975 = vmatprep.subr.bf16.mxu0 0
        %1976 = vmatpush1.bf16.msra.mxu0 0
        %1977 = vmatprep.subr.bf16.mxu0 0
        %1978 = vmatpush1.bf16.msra.mxu0 0
        %1979 = vmatprep.subr.bf16.mxu0 0
        %1980 = vmatpush1.bf16.msra.mxu0 0
        %1981 = vmatprep.subr.bf16.mxu0 0
        %1982 = vmatpush1.bf16.msra.mxu0 0
        %1983 = vmatprep.subr.bf16.mxu0 0
        %1984 = vmatpush1.bf16.msra.mxu0 0
        %1985 = vmatprep.subr.bf16.mxu0 0
        %1986 = vmatpush1.bf16.msra.mxu0 0
        %1987 = vmatprep.subr.bf16.mxu0 0
        %1988 = vmatpush1.bf16.msra.mxu0 0
        %1989 = vmatprep.mubr.bf16.mxu0 0
        %1990 = vmatmul.mubr.bf16.gmra.mrb[0].mxu0 %v1952
        %v1991 = vpop.f32.mrb[0].mxu0
        %v1992 = vadd.f32 %v1924, %v1991
        %v1993 = vpop.f32.mrb[0].mxu0
        %v1994 = vadd.f32 %v1924, %v1993
        %v1995 = vpop.f32.mrb[0].mxu0
        %v1996 = vadd.f32 %v1929, %v1995
        %v1997 = vpop.f32.mrb[0].mxu0
        %v1998 = vadd.f32 %v1929, %v1997
        %1999 = vmatprep.mubr.bf16.mxu0 0
        %2000 = vmatmul.mubr.bf16.gmra.mrb[0].mxu0 %v1955
        %v2001 = vpop.f32.mrb[0].mxu0
        %v2002 = vadd.f32 %v1934, %v2001
        %v2003 = vpop.f32.mrb[0].mxu0
        %v2004 = vadd.f32 %v1934, %v2003
        %v2005 = vpop.f32.mrb[0].mxu0
        %v2006 = vadd.f32 %v1939, %v2005
        %v2007 = vpop.f32.mrb[0].mxu0
        %v2008 = vadd.f32 %v1939, %v2007
        %2009 = vdwg.mxu0
        %2010 = vmatprep.subr.bf16.mxu0 %v1912
        %2011 = vmatpush1.bf16.msra.mxu0 %v1911
        %2012 = vmatprep.subr.bf16.mxu0 %v1916
        %2013 = vmatpush1.bf16.msra.mxu0 %v1915
        %2014 = vmatprep.subr.bf16.mxu0 0
        %2015 = vmatpush1.bf16.msra.mxu0 0
        %2016 = vmatprep.subr.bf16.mxu0 0
        %2017 = vmatpush1.bf16.msra.mxu0 0
        %2018 = vmatprep.subr.bf16.mxu0 0
        %2019 = vmatpush1.bf16.msra.mxu0 0
        %2020 = vmatprep.subr.bf16.mxu0 0
        %2021 = vmatpush1.bf16.msra.mxu0 0
        %2022 = vmatprep.subr.bf16.mxu0 0
        %2023 = vmatpush1.bf16.msra.mxu0 0
        %2024 = vmatprep.subr.bf16.mxu0 0
        %2025 = vmatpush1.bf16.msra.mxu0 0
        %2026 = vmatprep.subr.bf16.mxu0 0
        %2027 = vmatpush1.bf16.msra.mxu0 0
        %2028 = vmatprep.subr.bf16.mxu0 0
        %2029 = vmatpush1.bf16.msra.mxu0 0
        %2030 = vmatprep.subr.bf16.mxu0 0
        %2031 = vmatpush1.bf16.msra.mxu0 0
        %2032 = vmatprep.subr.bf16.mxu0 0
        %2033 = vmatpush1.bf16.msra.mxu0 0
        %2034 = vmatprep.subr.bf16.mxu0 0
        %2035 = vmatpush1.bf16.msra.mxu0 0
        %2036 = vmatprep.subr.bf16.mxu0 0
        %2037 = vmatpush1.bf16.msra.mxu0 0
        %2038 = vmatprep.subr.bf16.mxu0 0
        %2039 = vmatpush1.bf16.msra.mxu0 0
        %2040 = vmatprep.subr.bf16.mxu0 0
        %2041 = vmatpush1.bf16.msra.mxu0 0
        %2042 = vmatprep.mubr.bf16.mxu0 0
        %2043 = vmatmul.mubr.bf16.gmra.mrb[0].mxu0 %v1952
        %v2044 = vpop.f32.mrb[0].mxu0
        %v2045 = vadd.f32 %v1924, %v2044
        %v2046 = vpop.f32.mrb[0].mxu0
        %v2047 = vadd.f32 %v1924, %v2046
        %v2048 = vpop.f32.mrb[0].mxu0
        %v2049 = vadd.f32 %v1929, %v2048
        %v2050 = vpop.f32.mrb[0].mxu0
        %v2051 = vadd.f32 %v1929, %v2050
        %2052 = vmatprep.mubr.bf16.mxu0 0
        %2053 = vmatmul.mubr.bf16.gmra.mrb[0].mxu0 %v1955
        %v2054 = vpop.f32.mrb[0].mxu0
        %v2055 = vadd.f32 %v1934, %v2054
        %v2056 = vpop.f32.mrb[0].mxu0
        %v2057 = vadd.f32 %v1934, %v2056
        %v2058 = vpop.f32.mrb[0].mxu0
        %v2059 = vadd.f32 %v1939, %v2058
        %v2060 = vpop.f32.mrb[0].mxu0
        %v2061 = vadd.f32 %v1939, %v2060
        %2062 = vdwg.mxu0
        %v2063 = vmax.f32 %v1992, 0.0
        %v2064 = vmax.f32 %v1994, 0.0
        %v2065 = vmax.f32 %v2045, 0.0
        %v2066 = vmax.f32 %v2047, 0.0
        %v2067 = vmax.f32 %v1996, 0.0
        %v2068 = vmax.f32 %v1998, 0.0
        %v2069 = vmax.f32 %v2049, 0.0
        %v2070 = vmax.f32 %v2051, 0.0
        %v2071 = vmax.f32 %v2002, 0.0
        %v2072 = vmax.f32 %v2004, 0.0
        %v2073 = vmax.f32 %v2055, 0.0
        %v2074 = vmax.f32 %v2057, 0.0
        %v2075 = vmax.f32 %v2006, 0.0
        %v2076 = vmax.f32 %v2008, 0.0
        %v2077 = vmax.f32 %v2059, 0.0
        %v2078 = vmax.f32 %v2061, 0.0
        %v2079 = vld [vmem:[%s5] sm:$0xf]
        %v2080 = vld [vmem:[%s5 + $0x4] sm:$0xf]
        %v2081 = vld [vmem:[%s5 + $0x8] sm:$0xf]
        %v2082 = vld [vmem:[%s5 + $0xc] sm:$0xf]
        %v2083 = vpack.c.bf16 %v2067, %v2063
        %v2084 = vpack.c.bf16 %v2068, %v2064
        %v2085 = vpack.c.bf16 %v2069, %v2065
        %v2086 = vpack.c.bf16 %v2070, %v2066
        %v2087 = vpack.c.bf16 %v2075, %v2071
        %v2088 = vpack.c.bf16 %v2076, %v2072
        %v2089 = vpack.c.bf16 %v2077, %v2073
        %v2090 = vpack.c.bf16 %v2078, %v2074
        %v2091 = vld [vmem:[%s6] sm:$0xff]
        %v2092 = vld [vmem:[%s6 + $0x8] sm:$0xff]
        %v2093 = vld [vmem:[%s6 + $0x10] sm:$0xff]
        %v2094 = vld [vmem:[%s6 + $0x18] sm:$0xff]
        %2096 = vset.pattern.permute.xlu0 0
        %2097 = vperm.xlu0 %2096, %v2091
        %v2098 = vpop.permute.xlu0 %2097
        %2101 = vset.pattern.permute.xlu0 0
        %2102 = vperm.xlu0 %2101, %v2092
        %v2103 = vpop.permute.xlu0 %2102
        %2106 = vset.pattern.permute.xlu0 0
        %2107 = vperm.xlu0 %2106, %v2093
        %v2108 = vpop.permute.xlu0 %2107
        %2111 = vset.pattern.permute.xlu0 0
        %2112 = vperm.xlu0 %2111, %v2094
        %v2113 = vpop.permute.xlu0 %2112
        %v2119 = vunpack.c.l.b16 %v2079
        %v2120 = vunpack.c.l.b16 %v2080
        %v2121 = vunpack.c.l.b16 %v2081
        %v2122 = vunpack.c.l.b16 %v2082
        %v2123 = vpack.c.b16 %v2120, %v2119
        %v2124 = vpack.c.b16 %v2122, %v2121
        %v2126 = vsel %vm616, %v2123, 0
        %v2129 = vsel %vm616, %v2124, 0
        %2131 = vmatprep.subr.bf16.mxu0 %v2084
        %2132 = vmatpush1.bf16.msra.mxu0 %v2083
        %2133 = vmatprep.subr.bf16.mxu0 %v2088
        %2134 = vmatpush1.bf16.msra.mxu0 %v2087
        %2135 = vmatprep.subr.bf16.mxu0 0
        %2136 = vmatpush1.bf16.msra.mxu0 0
        %2137 = vmatprep.subr.bf16.mxu0 0
        %2138 = vmatpush1.bf16.msra.mxu0 0
        %2139 = vmatprep.subr.bf16.mxu0 0
        %2140 = vmatpush1.bf16.msra.mxu0 0
        %2141 = vmatprep.subr.bf16.mxu0 0
        %2142 = vmatpush1.bf16.msra.mxu0 0
        %2143 = vmatprep.subr.bf16.mxu0 0
        %2144 = vmatpush1.bf16.msra.mxu0 0
        %2145 = vmatprep.subr.bf16.mxu0 0
        %2146 = vmatpush1.bf16.msra.mxu0 0
        %2147 = vmatprep.subr.bf16.mxu0 0
        %2148 = vmatpush1.bf16.msra.mxu0 0
        %2149 = vmatprep.subr.bf16.mxu0 0
        %2150 = vmatpush1.bf16.msra.mxu0 0
        %2151 = vmatprep.subr.bf16.mxu0 0
        %2152 = vmatpush1.bf16.msra.mxu0 0
        %2153 = vmatprep.subr.bf16.mxu0 0
        %2154 = vmatpush1.bf16.msra.mxu0 0
        %2155 = vmatprep.subr.bf16.mxu0 0
        %2156 = vmatpush1.bf16.msra.mxu0 0
        %2157 = vmatprep.subr.bf16.mxu0 0
        %2158 = vmatpush1.bf16.msra.mxu0 0
        %2159 = vmatprep.subr.bf16.mxu0 0
        %2160 = vmatpush1.bf16.msra.mxu0 0
        %2161 = vmatprep.subr.bf16.mxu0 0
        %2162 = vmatpush1.bf16.msra.mxu0 0
        %2163 = vmatprep.mubr.bf16.mxu0 0
        %2164 = vmatmul.mubr.bf16.gmra.mrb[0].mxu0 %v2126
        %v2165 = vpop.f32.mrb[0].mxu0
        %v2166 = vadd.f32 %v2098, %v2165
        %v2167 = vpop.f32.mrb[0].mxu0
        %v2168 = vadd.f32 %v2098, %v2167
        %v2169 = vpop.f32.mrb[0].mxu0
        %v2170 = vadd.f32 %v2103, %v2169
        %v2171 = vpop.f32.mrb[0].mxu0
        %v2172 = vadd.f32 %v2103, %v2171
        %2173 = vmatprep.mubr.bf16.mxu0 0
        %2174 = vmatmul.mubr.bf16.gmra.mrb[0].mxu0 %v2129
        %v2175 = vpop.f32.mrb[0].mxu0
        %v2176 = vadd.f32 %v2108, %v2175
        %v2177 = vpop.f32.mrb[0].mxu0
        %v2178 = vadd.f32 %v2108, %v2177
        %v2179 = vpop.f32.mrb[0].mxu0
        %v2180 = vadd.f32 %v2113, %v2179
        %v2181 = vpop.f32.mrb[0].mxu0
        %v2182 = vadd.f32 %v2113, %v2181
        %2183 = vdwg.mxu0
        %2184 = vmatprep.subr.bf16.mxu0 %v2086
        %2185 = vmatpush1.bf16.msra.mxu0 %v2085
        %2186 = vmatprep.subr.bf16.mxu0 %v2090
        %2187 = vmatpush1.bf16.msra.mxu0 %v2089
        %2188 = vmatprep.subr.bf16.mxu0 0
        %2189 = vmatpush1.bf16.msra.mxu0 0
        %2190 = vmatprep.subr.bf16.mxu0 0
        %2191 = vmatpush1.bf16.msra.mxu0 0
        %2192 = vmatprep.subr.bf16.mxu0 0
        %2193 = vmatpush1.bf16.msra.mxu0 0
        %2194 = vmatprep.subr.bf16.mxu0 0
        %2195 = vmatpush1.bf16.msra.mxu0 0
        %2196 = vmatprep.subr.bf16.mxu0 0
        %2197 = vmatpush1.bf16.msra.mxu0 0
        %2198 = vmatprep.subr.bf16.mxu0 0
        %2199 = vmatpush1.bf16.msra.mxu0 0
        %2200 = vmatprep.subr.bf16.mxu0 0
        %2201 = vmatpush1.bf16.msra.mxu0 0
        %2202 = vmatprep.subr.bf16.mxu0 0
        %2203 = vmatpush1.bf16.msra.mxu0 0
        %2204 = vmatprep.subr.bf16.mxu0 0
        %2205 = vmatpush1.bf16.msra.mxu0 0
        %2206 = vmatprep.subr.bf16.mxu0 0
        %2207 = vmatpush1.bf16.msra.mxu0 0
        %2208 = vmatprep.subr.bf16.mxu0 0
        %2209 = vmatpush1.bf16.msra.mxu0 0
        %2210 = vmatprep.subr.bf16.mxu0 0
        %2211 = vmatpush1.bf16.msra.mxu0 0
        %2212 = vmatprep.subr.bf16.mxu0 0
        %2213 = vmatpush1.bf16.msra.mxu0 0
        %2214 = vmatprep.subr.bf16.mxu0 0
        %2215 = vmatpush1.bf16.msra.mxu0 0
        %2216 = vmatprep.mubr.bf16.mxu0 0
        %2217 = vmatmul.mubr.bf16.gmra.mrb[0].mxu0 %v2126
        %v2218 = vpop.f32.mrb[0].mxu0
        %v2219 = vadd.f32 %v2098, %v2218
        %v2220 = vpop.f32.mrb[0].mxu0
        %v2221 = vadd.f32 %v2098, %v2220
        %v2222 = vpop.f32.mrb[0].mxu0
        %v2223 = vadd.f32 %v2103, %v2222
        %v2224 = vpop.f32.mrb[0].mxu0
        %v2225 = vadd.f32 %v2103, %v2224
        %2226 = vmatprep.mubr.bf16.mxu0 0
        %2227 = vmatmul.mubr.bf16.gmra.mrb[0].mxu0 %v2129
        %v2228 = vpop.f32.mrb[0].mxu0
        %v2229 = vadd.f32 %v2108, %v2228
        %v2230 = vpop.f32.mrb[0].mxu0
        %v2231 = vadd.f32 %v2108, %v2230
        %v2232 = vpop.f32.mrb[0].mxu0
        %v2233 = vadd.f32 %v2113, %v2232
        %v2234 = vpop.f32.mrb[0].mxu0
        %v2235 = vadd.f32 %v2113, %v2234
        %2236 = vdwg.mxu0
        %v2237 = vmax.f32 %v2166, 0.0
        %v2238 = vmax.f32 %v2168, 0.0
        %v2239 = vmax.f32 %v2219, 0.0
        %v2240 = vmax.f32 %v2221, 0.0
        %v2241 = vmax.f32 %v2170, 0.0
        %v2242 = vmax.f32 %v2172, 0.0
        %v2243 = vmax.f32 %v2223, 0.0
        %v2244 = vmax.f32 %v2225, 0.0
        %v2245 = vmax.f32 %v2176, 0.0
        %v2246 = vmax.f32 %v2178, 0.0
        %v2247 = vmax.f32 %v2229, 0.0
        %v2248 = vmax.f32 %v2231, 0.0
        %v2249 = vmax.f32 %v2180, 0.0
        %v2250 = vmax.f32 %v2182, 0.0
        %v2251 = vmax.f32 %v2233, 0.0
        %v2252 = vmax.f32 %v2235, 0.0
        %v2253 = vld [vmem:[%s7] sm:$0xff]
        %v2254 = vld [vmem:[%s7 + $0x8] sm:$0xff]
        %v2255 = vld [vmem:[%s7 + $0x10] sm:$0xff]
        %v2256 = vld [vmem:[%s7 + $0x18] sm:$0xff]
        %2258 = vset.pattern.permute.xlu0 0
        %2259 = vperm.xlu0 %2258, %v2253
        %v2260 = vpop.permute.xlu0 %2259
        %2263 = vset.pattern.permute.xlu0 0
        %2264 = vperm.xlu0 %2263, %v2254
        %v2265 = vpop.permute.xlu0 %2264
        %2268 = vset.pattern.permute.xlu0 0
        %2269 = vperm.xlu0 %2268, %v2255
        %v2270 = vpop.permute.xlu0 %2269
        %2273 = vset.pattern.permute.xlu0 0
        %2274 = vperm.xlu0 %2273, %v2256
        %v2275 = vpop.permute.xlu0 %2274
        %v2277 = vmul.f32 %v2260, %v2237
        %v2278 = vmul.f32 %v2260, %v2238
        %v2279 = vmul.f32 %v2260, %v2239
        %v2280 = vmul.f32 %v2260, %v2240
        %v2281 = vmul.f32 %v2265, %v2241
        %v2282 = vmul.f32 %v2265, %v2242
        %v2283 = vmul.f32 %v2265, %v2243
        %v2284 = vmul.f32 %v2265, %v2244
        %v2285 = vmul.f32 %v2270, %v2245
        %v2286 = vmul.f32 %v2270, %v2246
        %v2287 = vmul.f32 %v2270, %v2247
        %v2288 = vmul.f32 %v2270, %v2248
        %v2289 = vmul.f32 %v2275, %v2249
        %v2290 = vmul.f32 %v2275, %v2250
        %v2291 = vmul.f32 %v2275, %v2251
        %v2292 = vmul.f32 %v2275, %v2252
        %v2293 = vadd.f32 %v2277, %v2281
        %v2294 = vadd.f32 %v2293, %v2285
        %v2295 = vadd.f32 %v2294, %v2289
        %v2296 = vrot.slane %v2295, 4
        %v2297 = vadd.f32 %v2295, %v2296
        %v2298 = vrot.slane %v2297, 2
        %v2299 = vadd.f32 %v2297, %v2298
        %v2300 = vrot.slane %v2299, 1
        %v2301 = vadd.f32 %v2299, %v2300
        %v2302 = vadd.f32 %v2278, %v2282
        %v2303 = vadd.f32 %v2302, %v2286
        %v2304 = vadd.f32 %v2303, %v2290
        %v2305 = vrot.slane %v2304, 4
        %v2306 = vadd.f32 %v2304, %v2305
        %v2307 = vrot.slane %v2306, 2
        %v2308 = vadd.f32 %v2306, %v2307
        %v2309 = vrot.slane %v2308, 1
        %v2310 = vadd.f32 %v2308, %v2309
        %v2311 = vadd.f32 %v2279, %v2283
        %v2312 = vadd.f32 %v2311, %v2287
        %v2313 = vadd.f32 %v2312, %v2291
        %v2314 = vrot.slane %v2313, 4
        %v2315 = vadd.f32 %v2313, %v2314
        %v2316 = vrot.slane %v2315, 2
        %v2317 = vadd.f32 %v2315, %v2316
        %v2318 = vrot.slane %v2317, 1
        %v2319 = vadd.f32 %v2317, %v2318
        %v2320 = vadd.f32 %v2280, %v2284
        %v2321 = vadd.f32 %v2320, %v2288
        %v2322 = vadd.f32 %v2321, %v2292
        %v2323 = vrot.slane %v2322, 4
        %v2324 = vadd.f32 %v2322, %v2323
        %v2325 = vrot.slane %v2324, 2
        %v2326 = vadd.f32 %v2324, %v2325
        %v2327 = vrot.slane %v2326, 1
        %v2328 = vadd.f32 %v2326, %v2327
        %v2329 = vld [vmem:[#allocation2] sm:$0x1]
        %2331 = vset.pattern.permute.xlu0 0
        %2332 = vperm.xlu0 %2331, %v2329
        %v2333 = vpop.permute.xlu0 %2332
        %v2335 = vlaneseq
        %v2336 = vshrl.u32 %v2335, 7
        %v2337 = vsub.s32 0, %v2336
        %v2338 = vrot.slane %v2333, %v2337
        %v2339 = vadd.f32 %v2301, %v2338
        %v2340 = vadd.f32 %v2310, %v2338
        %v2341 = vadd.f32 %v2319, %v2338
        %v2342 = vadd.f32 %v2328, %v2338
        %v2347 = vcombine.low %v2339, %v2340
        %v2348 = vcombine.low %v2341, %v2342
        %v2350 = vunpack.c.l.s4 1966171168
        %v2351 = vunpack.c.0.s8 %v2350
        %v2352 = vlaneseq
        %v2353 = vshrl.u32 %v2352, 7
        %v2354 = vsub.s32 %v2351, %v2353
        %v2355 = vrot.slane %v2347, %v2354
        %v2357 = vunpack.c.l.s4 1966171168
        %v2358 = vunpack.c.0.s8 %v2357
        %v2359 = vlaneseq
        %v2360 = vshrl.u32 %v2359, 7
        %v2361 = vsub.s32 %v2358, %v2360
        %v2362 = vrot.slane %v2348, %v2361
        %v2363 = vcombine.low %v2355, %v2362
        %v2365 = vunpack.c.l.s4 1966171168
        %v2366 = vunpack.c.0.s8 %v2365
        %v2367 = vlaneseq
        %v2368 = vshrl.u32 %v2367, 7
        %v2369 = vsub.s32 %v2366, %v2368
        %v2370 = vrot.slane %v2363, %v2369
        %2372 = vst.msk [vmem:[%s356 + $0x8] sm:$0xf] %vm1041, %v2370
        %v2373 = vld [vmem:[%s322 + $0x18] sm:$0xff]
        %v2374 = vld [vmem:[%s1] sm:$0xf]
        %v2375 = vld [vmem:[%s1 + $0x4] sm:$0xf]
        %v2376 = vld [vmem:[%s1 + $0x8] sm:$0xf]
        %v2377 = vld [vmem:[%s1 + $0xc] sm:$0xf]
        %v2378 = vld [vmem:[%s2] sm:$0xff]
        %v2379 = vld [vmem:[%s2 + $0x8] sm:$0xff]
        %v2380 = vld [vmem:[%s2 + $0x10] sm:$0xff]
        %v2381 = vld [vmem:[%s2 + $0x18] sm:$0xff]
        %2383 = vset.pattern.permute.xlu0 0
        %2384 = vperm.xlu0 %2383, %v2378
        %v2385 = vpop.permute.xlu0 %2384
        %2388 = vset.pattern.permute.xlu0 0
        %2389 = vperm.xlu0 %2388, %v2379
        %v2390 = vpop.permute.xlu0 %2389
        %2393 = vset.pattern.permute.xlu0 0
        %2394 = vperm.xlu0 %2393, %v2380
        %v2395 = vpop.permute.xlu0 %2394
        %2398 = vset.pattern.permute.xlu0 0
        %2399 = vperm.xlu0 %2398, %v2381
        %v2400 = vpop.permute.xlu0 %2399
        %v2406 = vunpack.c.l.b16 %v2374
        %v2407 = vunpack.c.l.b16 %v2375
        %v2408 = vunpack.c.l.b16 %v2376
        %v2409 = vunpack.c.l.b16 %v2377
        %v2410 = vpack.c.b16 %v2407, %v2406
        %v2411 = vpack.c.b16 %v2409, %v2408
        %v2413 = vcombine.high %v2373, %v2373
        %v2415 = vunpack.c.l.s4 1983009808
        %v2416 = vunpack.c.0.s8 %v2415
        %v2417 = vlaneseq
        %v2418 = vshrl.u32 %v2417, 7
        %v2419 = vsub.s32 %v2416, %v2418
        %v2420 = vrot.slane %v2373, %v2419
        %v2422 = vunpack.c.l.s4 1983009808
        %v2423 = vunpack.c.0.s8 %v2422
        %v2424 = vlaneseq
        %v2425 = vshrl.u32 %v2424, 7
        %v2426 = vsub.s32 %v2423, %v2425
        %v2427 = vrot.slane %v2413, %v2426
        %v2428 = vcombine.high %v2420, %v2420
        %v2429 = vcombine.high %v2427, %v2427
        %v2431 = vsel %vm425, %v2410, 0
        %v2434 = vsel %vm425, %v2411, 0
        %v2437 = vand.u32 %v2420, %v435
        %v2440 = vand.u32 %v2428, %v435
        %v2443 = vand.u32 %v2427, %v435
        %v2446 = vand.u32 %v2429, %v435
        %2448 = vmatprep.subr.bf16.mxu0 %v2440
        %2449 = vmatpush1.bf16.msra.mxu0 %v2437
        %2450 = vmatprep.subr.bf16.mxu0 0
        %2451 = vmatpush1.bf16.msra.mxu0 0
        %2452 = vmatprep.subr.bf16.mxu0 0
        %2453 = vmatpush1.bf16.msra.mxu0 0
        %2454 = vmatprep.subr.bf16.mxu0 0
        %2455 = vmatpush1.bf16.msra.mxu0 0
        %2456 = vmatprep.subr.bf16.mxu0 0
        %2457 = vmatpush1.bf16.msra.mxu0 0
        %2458 = vmatprep.subr.bf16.mxu0 0
        %2459 = vmatpush1.bf16.msra.mxu0 0
        %2460 = vmatprep.subr.bf16.mxu0 0
        %2461 = vmatpush1.bf16.msra.mxu0 0
        %2462 = vmatprep.subr.bf16.mxu0 0
        %2463 = vmatpush1.bf16.msra.mxu0 0
        %2464 = vmatprep.subr.bf16.mxu0 0
        %2465 = vmatpush1.bf16.msra.mxu0 0
        %2466 = vmatprep.subr.bf16.mxu0 0
        %2467 = vmatpush1.bf16.msra.mxu0 0
        %2468 = vmatprep.subr.bf16.mxu0 0
        %2469 = vmatpush1.bf16.msra.mxu0 0
        %2470 = vmatprep.subr.bf16.mxu0 0
        %2471 = vmatpush1.bf16.msra.mxu0 0
        %2472 = vmatprep.subr.bf16.mxu0 0
        %2473 = vmatpush1.bf16.msra.mxu0 0
        %2474 = vmatprep.subr.bf16.mxu0 0
        %2475 = vmatpush1.bf16.msra.mxu0 0
        %2476 = vmatprep.subr.bf16.mxu0 0
        %2477 = vmatpush1.bf16.msra.mxu0 0
        %2478 = vmatprep.subr.bf16.mxu0 0
        %2479 = vmatpush1.bf16.msra.mxu0 0
        %2480 = vmatprep.mubr.bf16.mxu0 0
        %2481 = vmatmul.mubr.bf16.gmra.mrb[0].mxu0 %v2431
        %v2482 = vpop.f32.mrb[0].mxu0
        %v2483 = vadd.f32 %v2385, %v2482
        %v2484 = vpop.f32.mrb[0].mxu0
        %v2485 = vadd.f32 %v2385, %v2484
        %v2486 = vpop.f32.mrb[0].mxu0
        %v2487 = vadd.f32 %v2390, %v2486
        %v2488 = vpop.f32.mrb[0].mxu0
        %v2489 = vadd.f32 %v2390, %v2488
        %2490 = vmatprep.mubr.bf16.mxu0 0
        %2491 = vmatmul.mubr.bf16.gmra.mrb[0].mxu0 %v2434
        %v2492 = vpop.f32.mrb[0].mxu0
        %v2493 = vadd.f32 %v2395, %v2492
        %v2494 = vpop.f32.mrb[0].mxu0
        %v2495 = vadd.f32 %v2395, %v2494
        %v2496 = vpop.f32.mrb[0].mxu0
        %v2497 = vadd.f32 %v2400, %v2496
        %v2498 = vpop.f32.mrb[0].mxu0
        %v2499 = vadd.f32 %v2400, %v2498
        %2500 = vdwg.mxu0
        %2501 = vmatprep.subr.bf16.mxu0 %v2446
        %2502 = vmatpush1.bf16.msra.mxu0 %v2443
        %2503 = vmatprep.subr.bf16.mxu0 0
        %2504 = vmatpush1.bf16.msra.mxu0 0
        %2505 = vmatprep.subr.bf16.mxu0 0
        %2506 = vmatpush1.bf16.msra.mxu0 0
        %2507 = vmatprep.subr.bf16.mxu0 0
        %2508 = vmatpush1.bf16.msra.mxu0 0
        %2509 = vmatprep.subr.bf16.mxu0 0
        %2510 = vmatpush1.bf16.msra.mxu0 0
        %2511 = vmatprep.subr.bf16.mxu0 0
        %2512 = vmatpush1.bf16.msra.mxu0 0
        %2513 = vmatprep.subr.bf16.mxu0 0
        %2514 = vmatpush1.bf16.msra.mxu0 0
        %2515 = vmatprep.subr.bf16.mxu0 0
        %2516 = vmatpush1.bf16.msra.mxu0 0
        %2517 = vmatprep.subr.bf16.mxu0 0
        %2518 = vmatpush1.bf16.msra.mxu0 0
        %2519 = vmatprep.subr.bf16.mxu0 0
        %2520 = vmatpush1.bf16.msra.mxu0 0
        %2521 = vmatprep.subr.bf16.mxu0 0
        %2522 = vmatpush1.bf16.msra.mxu0 0
        %2523 = vmatprep.subr.bf16.mxu0 0
        %2524 = vmatpush1.bf16.msra.mxu0 0
        %2525 = vmatprep.subr.bf16.mxu0 0
        %2526 = vmatpush1.bf16.msra.mxu0 0
        %2527 = vmatprep.subr.bf16.mxu0 0
        %2528 = vmatpush1.bf16.msra.mxu0 0
        %2529 = vmatprep.subr.bf16.mxu0 0
        %2530 = vmatpush1.bf16.msra.mxu0 0
        %2531 = vmatprep.subr.bf16.mxu0 0
        %2532 = vmatpush1.bf16.msra.mxu0 0
        %2533 = vmatprep.mubr.bf16.mxu0 0
        %2534 = vmatmul.mubr.bf16.gmra.mrb[0].mxu0 %v2431
        %v2535 = vpop.f32.mrb[0].mxu0
        %v2536 = vadd.f32 %v2385, %v2535
        %v2537 = vpop.f32.mrb[0].mxu0
        %v2538 = vadd.f32 %v2385, %v2537
        %v2539 = vpop.f32.mrb[0].mxu0
        %v2540 = vadd.f32 %v2390, %v2539
        %v2541 = vpop.f32.mrb[0].mxu0
        %v2542 = vadd.f32 %v2390, %v2541
        %2543 = vmatprep.mubr.bf16.mxu0 0
        %2544 = vmatmul.mubr.bf16.gmra.mrb[0].mxu0 %v2434
        %v2545 = vpop.f32.mrb[0].mxu0
        %v2546 = vadd.f32 %v2395, %v2545
        %v2547 = vpop.f32.mrb[0].mxu0
        %v2548 = vadd.f32 %v2395, %v2547
        %v2549 = vpop.f32.mrb[0].mxu0
        %v2550 = vadd.f32 %v2400, %v2549
        %v2551 = vpop.f32.mrb[0].mxu0
        %v2552 = vadd.f32 %v2400, %v2551
        %2553 = vdwg.mxu0
        %v2554 = vmax.f32 %v2483, 0.0
        %v2555 = vmax.f32 %v2485, 0.0
        %v2556 = vmax.f32 %v2536, 0.0
        %v2557 = vmax.f32 %v2538, 0.0
        %v2558 = vmax.f32 %v2487, 0.0
        %v2559 = vmax.f32 %v2489, 0.0
        %v2560 = vmax.f32 %v2540, 0.0
        %v2561 = vmax.f32 %v2542, 0.0
        %v2562 = vmax.f32 %v2493, 0.0
        %v2563 = vmax.f32 %v2495, 0.0
        %v2564 = vmax.f32 %v2546, 0.0
        %v2565 = vmax.f32 %v2548, 0.0
        %v2566 = vmax.f32 %v2497, 0.0
        %v2567 = vmax.f32 %v2499, 0.0
        %v2568 = vmax.f32 %v2550, 0.0
        %v2569 = vmax.f32 %v2552, 0.0
        %v2570 = vld [vmem:[%s3] sm:$0xf]
        %v2571 = vld [vmem:[%s3 + $0x4] sm:$0xf]
        %v2572 = vld [vmem:[%s3 + $0x8] sm:$0xf]
        %v2573 = vld [vmem:[%s3 + $0xc] sm:$0xf]
        %v2574 = vpack.c.bf16 %v2558, %v2554
        %v2575 = vpack.c.bf16 %v2559, %v2555
        %v2576 = vpack.c.bf16 %v2560, %v2556
        %v2577 = vpack.c.bf16 %v2561, %v2557
        %v2578 = vpack.c.bf16 %v2566, %v2562
        %v2579 = vpack.c.bf16 %v2567, %v2563
        %v2580 = vpack.c.bf16 %v2568, %v2564
        %v2581 = vpack.c.bf16 %v2569, %v2565
        %v2582 = vld [vmem:[%s4] sm:$0xff]
        %v2583 = vld [vmem:[%s4 + $0x8] sm:$0xff]
        %v2584 = vld [vmem:[%s4 + $0x10] sm:$0xff]
        %v2585 = vld [vmem:[%s4 + $0x18] sm:$0xff]
        %2587 = vset.pattern.permute.xlu0 0
        %2588 = vperm.xlu0 %2587, %v2582
        %v2589 = vpop.permute.xlu0 %2588
        %2592 = vset.pattern.permute.xlu0 0
        %2593 = vperm.xlu0 %2592, %v2583
        %v2594 = vpop.permute.xlu0 %2593
        %2597 = vset.pattern.permute.xlu0 0
        %2598 = vperm.xlu0 %2597, %v2584
        %v2599 = vpop.permute.xlu0 %2598
        %2602 = vset.pattern.permute.xlu0 0
        %2603 = vperm.xlu0 %2602, %v2585
        %v2604 = vpop.permute.xlu0 %2603
        %v2610 = vunpack.c.l.b16 %v2570
        %v2611 = vunpack.c.l.b16 %v2571
        %v2612 = vunpack.c.l.b16 %v2572
        %v2613 = vunpack.c.l.b16 %v2573
        %v2614 = vpack.c.b16 %v2611, %v2610
        %v2615 = vpack.c.b16 %v2613, %v2612
        %v2617 = vsel %vm616, %v2614, 0
        %v2620 = vsel %vm616, %v2615, 0
        %2622 = vmatprep.subr.bf16.mxu0 %v2575
        %2623 = vmatpush1.bf16.msra.mxu0 %v2574
        %2624 = vmatprep.subr.bf16.mxu0 %v2579
        %2625 = vmatpush1.bf16.msra.mxu0 %v2578
        %2626 = vmatprep.subr.bf16.mxu0 0
        %2627 = vmatpush1.bf16.msra.mxu0 0
        %2628 = vmatprep.subr.bf16.mxu0 0
        %2629 = vmatpush1.bf16.msra.mxu0 0
        %2630 = vmatprep.subr.bf16.mxu0 0
        %2631 = vmatpush1.bf16.msra.mxu0 0
        %2632 = vmatprep.subr.bf16.mxu0 0
        %2633 = vmatpush1.bf16.msra.mxu0 0
        %2634 = vmatprep.subr.bf16.mxu0 0
        %2635 = vmatpush1.bf16.msra.mxu0 0
        %2636 = vmatprep.subr.bf16.mxu0 0
        %2637 = vmatpush1.bf16.msra.mxu0 0
        %2638 = vmatprep.subr.bf16.mxu0 0
        %2639 = vmatpush1.bf16.msra.mxu0 0
        %2640 = vmatprep.subr.bf16.mxu0 0
        %2641 = vmatpush1.bf16.msra.mxu0 0
        %2642 = vmatprep.subr.bf16.mxu0 0
        %2643 = vmatpush1.bf16.msra.mxu0 0
        %2644 = vmatprep.subr.bf16.mxu0 0
        %2645 = vmatpush1.bf16.msra.mxu0 0
        %2646 = vmatprep.subr.bf16.mxu0 0
        %2647 = vmatpush1.bf16.msra.mxu0 0
        %2648 = vmatprep.subr.bf16.mxu0 0
        %2649 = vmatpush1.bf16.msra.mxu0 0
        %2650 = vmatprep.subr.bf16.mxu0 0
        %2651 = vmatpush1.bf16.msra.mxu0 0
        %2652 = vmatprep.subr.bf16.mxu0 0
        %2653 = vmatpush1.bf16.msra.mxu0 0
        %2654 = vmatprep.mubr.bf16.mxu0 0
        %2655 = vmatmul.mubr.bf16.gmra.mrb[0].mxu0 %v2617
        %v2656 = vpop.f32.mrb[0].mxu0
        %v2657 = vadd.f32 %v2589, %v2656
        %v2658 = vpop.f32.mrb[0].mxu0
        %v2659 = vadd.f32 %v2589, %v2658
        %v2660 = vpop.f32.mrb[0].mxu0
        %v2661 = vadd.f32 %v2594, %v2660
        %v2662 = vpop.f32.mrb[0].mxu0
        %v2663 = vadd.f32 %v2594, %v2662
        %2664 = vmatprep.mubr.bf16.mxu0 0
        %2665 = vmatmul.mubr.bf16.gmra.mrb[0].mxu0 %v2620
        %v2666 = vpop.f32.mrb[0].mxu0
        %v2667 = vadd.f32 %v2599, %v2666
        %v2668 = vpop.f32.mrb[0].mxu0
        %v2669 = vadd.f32 %v2599, %v2668
        %v2670 = vpop.f32.mrb[0].mxu0
        %v2671 = vadd.f32 %v2604, %v2670
        %v2672 = vpop.f32.mrb[0].mxu0
        %v2673 = vadd.f32 %v2604, %v2672
        %2674 = vdwg.mxu0
        %2675 = vmatprep.subr.bf16.mxu0 %v2577
        %2676 = vmatpush1.bf16.msra.mxu0 %v2576
        %2677 = vmatprep.subr.bf16.mxu0 %v2581
        %2678 = vmatpush1.bf16.msra.mxu0 %v2580
        %2679 = vmatprep.subr.bf16.mxu0 0
        %2680 = vmatpush1.bf16.msra.mxu0 0
        %2681 = vmatprep.subr.bf16.mxu0 0
        %2682 = vmatpush1.bf16.msra.mxu0 0
        %2683 = vmatprep.subr.bf16.mxu0 0
        %2684 = vmatpush1.bf16.msra.mxu0 0
        %2685 = vmatprep.subr.bf16.mxu0 0
        %2686 = vmatpush1.bf16.msra.mxu0 0
        %2687 = vmatprep.subr.bf16.mxu0 0
        %2688 = vmatpush1.bf16.msra.mxu0 0
        %2689 = vmatprep.subr.bf16.mxu0 0
        %2690 = vmatpush1.bf16.msra.mxu0 0
        %2691 = vmatprep.subr.bf16.mxu0 0
        %2692 = vmatpush1.bf16.msra.mxu0 0
        %2693 = vmatprep.subr.bf16.mxu0 0
        %2694 = vmatpush1.bf16.msra.mxu0 0
        %2695 = vmatprep.subr.bf16.mxu0 0
        %2696 = vmatpush1.bf16.msra.mxu0 0
        %2697 = vmatprep.subr.bf16.mxu0 0
        %2698 = vmatpush1.bf16.msra.mxu0 0
        %2699 = vmatprep.subr.bf16.mxu0 0
        %2700 = vmatpush1.bf16.msra.mxu0 0
        %2701 = vmatprep.subr.bf16.mxu0 0
        %2702 = vmatpush1.bf16.msra.mxu0 0
        %2703 = vmatprep.subr.bf16.mxu0 0
        %2704 = vmatpush1.bf16.msra.mxu0 0
        %2705 = vmatprep.subr.bf16.mxu0 0
        %2706 = vmatpush1.bf16.msra.mxu0 0
        %2707 = vmatprep.mubr.bf16.mxu0 0
        %2708 = vmatmul.mubr.bf16.gmra.mrb[0].mxu0 %v2617
        %v2709 = vpop.f32.mrb[0].mxu0
        %v2710 = vadd.f32 %v2589, %v2709
        %v2711 = vpop.f32.mrb[0].mxu0
        %v2712 = vadd.f32 %v2589, %v2711
        %v2713 = vpop.f32.mrb[0].mxu0
        %v2714 = vadd.f32 %v2594, %v2713
        %v2715 = vpop.f32.mrb[0].mxu0
        %v2716 = vadd.f32 %v2594, %v2715
        %2717 = vmatprep.mubr.bf16.mxu0 0
        %2718 = vmatmul.mubr.bf16.gmra.mrb[0].mxu0 %v2620
        %v2719 = vpop.f32.mrb[0].mxu0
        %v2720 = vadd.f32 %v2599, %v2719
        %v2721 = vpop.f32.mrb[0].mxu0
        %v2722 = vadd.f32 %v2599, %v2721
        %v2723 = vpop.f32.mrb[0].mxu0
        %v2724 = vadd.f32 %v2604, %v2723
        %v2725 = vpop.f32.mrb[0].mxu0
        %v2726 = vadd.f32 %v2604, %v2725
        %2727 = vdwg.mxu0
        %v2728 = vmax.f32 %v2657, 0.0
        %v2729 = vmax.f32 %v2659, 0.0
        %v2730 = vmax.f32 %v2710, 0.0
        %v2731 = vmax.f32 %v2712, 0.0
        %v2732 = vmax.f32 %v2661, 0.0
        %v2733 = vmax.f32 %v2663, 0.0
        %v2734 = vmax.f32 %v2714, 0.0
        %v2735 = vmax.f32 %v2716, 0.0
        %v2736 = vmax.f32 %v2667, 0.0
        %v2737 = vmax.f32 %v2669, 0.0
        %v2738 = vmax.f32 %v2720, 0.0
        %v2739 = vmax.f32 %v2722, 0.0
        %v2740 = vmax.f32 %v2671, 0.0
        %v2741 = vmax.f32 %v2673, 0.0
        %v2742 = vmax.f32 %v2724, 0.0
        %v2743 = vmax.f32 %v2726, 0.0
        %v2744 = vld [vmem:[%s5] sm:$0xf]
        %v2745 = vld [vmem:[%s5 + $0x4] sm:$0xf]
        %v2746 = vld [vmem:[%s5 + $0x8] sm:$0xf]
        %v2747 = vld [vmem:[%s5 + $0xc] sm:$0xf]
        %v2748 = vpack.c.bf16 %v2732, %v2728
        %v2749 = vpack.c.bf16 %v2733, %v2729
        %v2750 = vpack.c.bf16 %v2734, %v2730
        %v2751 = vpack.c.bf16 %v2735, %v2731
        %v2752 = vpack.c.bf16 %v2740, %v2736
        %v2753 = vpack.c.bf16 %v2741, %v2737
        %v2754 = vpack.c.bf16 %v2742, %v2738
        %v2755 = vpack.c.bf16 %v2743, %v2739
        %v2756 = vld [vmem:[%s6] sm:$0xff]
        %v2757 = vld [vmem:[%s6 + $0x8] sm:$0xff]
        %v2758 = vld [vmem:[%s6 + $0x10] sm:$0xff]
        %v2759 = vld [vmem:[%s6 + $0x18] sm:$0xff]
        %2761 = vset.pattern.permute.xlu0 0
        %2762 = vperm.xlu0 %2761, %v2756
        %v2763 = vpop.permute.xlu0 %2762
        %2766 = vset.pattern.permute.xlu0 0
        %2767 = vperm.xlu0 %2766, %v2757
        %v2768 = vpop.permute.xlu0 %2767
        %2771 = vset.pattern.permute.xlu0 0
        %2772 = vperm.xlu0 %2771, %v2758
        %v2773 = vpop.permute.xlu0 %2772
        %2776 = vset.pattern.permute.xlu0 0
        %2777 = vperm.xlu0 %2776, %v2759
        %v2778 = vpop.permute.xlu0 %2777
        %v2784 = vunpack.c.l.b16 %v2744
        %v2785 = vunpack.c.l.b16 %v2745
        %v2786 = vunpack.c.l.b16 %v2746
        %v2787 = vunpack.c.l.b16 %v2747
        %v2788 = vpack.c.b16 %v2785, %v2784
        %v2789 = vpack.c.b16 %v2787, %v2786
        %v2791 = vsel %vm616, %v2788, 0
        %v2794 = vsel %vm616, %v2789, 0
        %2796 = vmatprep.subr.bf16.mxu0 %v2749
        %2797 = vmatpush1.bf16.msra.mxu0 %v2748
        %2798 = vmatprep.subr.bf16.mxu0 %v2753
        %2799 = vmatpush1.bf16.msra.mxu0 %v2752
        %2800 = vmatprep.subr.bf16.mxu0 0
        %2801 = vmatpush1.bf16.msra.mxu0 0
        %2802 = vmatprep.subr.bf16.mxu0 0
        %2803 = vmatpush1.bf16.msra.mxu0 0
        %2804 = vmatprep.subr.bf16.mxu0 0
        %2805 = vmatpush1.bf16.msra.mxu0 0
        %2806 = vmatprep.subr.bf16.mxu0 0
        %2807 = vmatpush1.bf16.msra.mxu0 0
        %2808 = vmatprep.subr.bf16.mxu0 0
        %2809 = vmatpush1.bf16.msra.mxu0 0
        %2810 = vmatprep.subr.bf16.mxu0 0
        %2811 = vmatpush1.bf16.msra.mxu0 0
        %2812 = vmatprep.subr.bf16.mxu0 0
        %2813 = vmatpush1.bf16.msra.mxu0 0
        %2814 = vmatprep.subr.bf16.mxu0 0
        %2815 = vmatpush1.bf16.msra.mxu0 0
        %2816 = vmatprep.subr.bf16.mxu0 0
        %2817 = vmatpush1.bf16.msra.mxu0 0
        %2818 = vmatprep.subr.bf16.mxu0 0
        %2819 = vmatpush1.bf16.msra.mxu0 0
        %2820 = vmatprep.subr.bf16.mxu0 0
        %2821 = vmatpush1.bf16.msra.mxu0 0
        %2822 = vmatprep.subr.bf16.mxu0 0
        %2823 = vmatpush1.bf16.msra.mxu0 0
        %2824 = vmatprep.subr.bf16.mxu0 0
        %2825 = vmatpush1.bf16.msra.mxu0 0
        %2826 = vmatprep.subr.bf16.mxu0 0
        %2827 = vmatpush1.bf16.msra.mxu0 0
        %2828 = vmatprep.mubr.bf16.mxu0 0
        %2829 = vmatmul.mubr.bf16.gmra.mrb[0].mxu0 %v2791
        %v2830 = vpop.f32.mrb[0].mxu0
        %v2831 = vadd.f32 %v2763, %v2830
        %v2832 = vpop.f32.mrb[0].mxu0
        %v2833 = vadd.f32 %v2763, %v2832
        %v2834 = vpop.f32.mrb[0].mxu0
        %v2835 = vadd.f32 %v2768, %v2834
        %v2836 = vpop.f32.mrb[0].mxu0
        %v2837 = vadd.f32 %v2768, %v2836
        %2838 = vmatprep.mubr.bf16.mxu0 0
        %2839 = vmatmul.mubr.bf16.gmra.mrb[0].mxu0 %v2794
        %v2840 = vpop.f32.mrb[0].mxu0
        %v2841 = vadd.f32 %v2773, %v2840
        %v2842 = vpop.f32.mrb[0].mxu0
        %v2843 = vadd.f32 %v2773, %v2842
        %v2844 = vpop.f32.mrb[0].mxu0
        %v2845 = vadd.f32 %v2778, %v2844
        %v2846 = vpop.f32.mrb[0].mxu0
        %v2847 = vadd.f32 %v2778, %v2846
        %2848 = vdwg.mxu0
        %2849 = vmatprep.subr.bf16.mxu0 %v2751
        %2850 = vmatpush1.bf16.msra.mxu0 %v2750
        %2851 = vmatprep.subr.bf16.mxu0 %v2755
        %2852 = vmatpush1.bf16.msra.mxu0 %v2754
        %2853 = vmatprep.subr.bf16.mxu0 0
        %2854 = vmatpush1.bf16.msra.mxu0 0
        %2855 = vmatprep.subr.bf16.mxu0 0
        %2856 = vmatpush1.bf16.msra.mxu0 0
        %2857 = vmatprep.subr.bf16.mxu0 0
        %2858 = vmatpush1.bf16.msra.mxu0 0
        %2859 = vmatprep.subr.bf16.mxu0 0
        %2860 = vmatpush1.bf16.msra.mxu0 0
        %2861 = vmatprep.subr.bf16.mxu0 0
        %2862 = vmatpush1.bf16.msra.mxu0 0
        %2863 = vmatprep.subr.bf16.mxu0 0
        %2864 = vmatpush1.bf16.msra.mxu0 0
        %2865 = vmatprep.subr.bf16.mxu0 0
        %2866 = vmatpush1.bf16.msra.mxu0 0
        %2867 = vmatprep.subr.bf16.mxu0 0
        %2868 = vmatpush1.bf16.msra.mxu0 0
        %2869 = vmatprep.subr.bf16.mxu0 0
        %2870 = vmatpush1.bf16.msra.mxu0 0
        %2871 = vmatprep.subr.bf16.mxu0 0
        %2872 = vmatpush1.bf16.msra.mxu0 0
        %2873 = vmatprep.subr.bf16.mxu0 0
        %2874 = vmatpush1.bf16.msra.mxu0 0
        %2875 = vmatprep.subr.bf16.mxu0 0
        %2876 = vmatpush1.bf16.msra.mxu0 0
        %2877 = vmatprep.subr.bf16.mxu0 0
        %2878 = vmatpush1.bf16.msra.mxu0 0
        %2879 = vmatprep.subr.bf16.mxu0 0
        %2880 = vmatpush1.bf16.msra.mxu0 0
        %2881 = vmatprep.mubr.bf16.mxu0 0
        %2882 = vmatmul.mubr.bf16.gmra.mrb[0].mxu0 %v2791
        %v2883 = vpop.f32.mrb[0].mxu0
        %v2884 = vadd.f32 %v2763, %v2883
        %v2885 = vpop.f32.mrb[0].mxu0
        %v2886 = vadd.f32 %v2763, %v2885
        %v2887 = vpop.f32.mrb[0].mxu0
        %v2888 = vadd.f32 %v2768, %v2887
        %v2889 = vpop.f32.mrb[0].mxu0
        %v2890 = vadd.f32 %v2768, %v2889
        %2891 = vmatprep.mubr.bf16.mxu0 0
        %2892 = vmatmul.mubr.bf16.gmra.mrb[0].mxu0 %v2794
        %v2893 = vpop.f32.mrb[0].mxu0
        %v2894 = vadd.f32 %v2773, %v2893
        %v2895 = vpop.f32.mrb[0].mxu0
        %v2896 = vadd.f32 %v2773, %v2895
        %v2897 = vpop.f32.mrb[0].mxu0
        %v2898 = vadd.f32 %v2778, %v2897
        %v2899 = vpop.f32.mrb[0].mxu0
        %v2900 = vadd.f32 %v2778, %v2899
        %2901 = vdwg.mxu0
        %v2902 = vmax.f32 %v2831, 0.0
        %v2903 = vmax.f32 %v2833, 0.0
        %v2904 = vmax.f32 %v2884, 0.0
        %v2905 = vmax.f32 %v2886, 0.0
        %v2906 = vmax.f32 %v2835, 0.0
        %v2907 = vmax.f32 %v2837, 0.0
        %v2908 = vmax.f32 %v2888, 0.0
        %v2909 = vmax.f32 %v2890, 0.0
        %v2910 = vmax.f32 %v2841, 0.0
        %v2911 = vmax.f32 %v2843, 0.0
        %v2912 = vmax.f32 %v2894, 0.0
        %v2913 = vmax.f32 %v2896, 0.0
        %v2914 = vmax.f32 %v2845, 0.0
        %v2915 = vmax.f32 %v2847, 0.0
        %v2916 = vmax.f32 %v2898, 0.0
        %v2917 = vmax.f32 %v2900, 0.0
        %v2918 = vld [vmem:[%s7] sm:$0xff]
        %v2919 = vld [vmem:[%s7 + $0x8] sm:$0xff]
        %v2920 = vld [vmem:[%s7 + $0x10] sm:$0xff]
        %v2921 = vld [vmem:[%s7 + $0x18] sm:$0xff]
        %2923 = vset.pattern.permute.xlu0 0
        %2924 = vperm.xlu0 %2923, %v2918
        %v2925 = vpop.permute.xlu0 %2924
        %2928 = vset.pattern.permute.xlu0 0
        %2929 = vperm.xlu0 %2928, %v2919
        %v2930 = vpop.permute.xlu0 %2929
        %2933 = vset.pattern.permute.xlu0 0
        %2934 = vperm.xlu0 %2933, %v2920
        %v2935 = vpop.permute.xlu0 %2934
        %2938 = vset.pattern.permute.xlu0 0
        %2939 = vperm.xlu0 %2938, %v2921
        %v2940 = vpop.permute.xlu0 %2939
        %v2942 = vmul.f32 %v2925, %v2902
        %v2943 = vmul.f32 %v2925, %v2903
        %v2944 = vmul.f32 %v2925, %v2904
        %v2945 = vmul.f32 %v2925, %v2905
        %v2946 = vmul.f32 %v2930, %v2906
        %v2947 = vmul.f32 %v2930, %v2907
        %v2948 = vmul.f32 %v2930, %v2908
        %v2949 = vmul.f32 %v2930, %v2909
        %v2950 = vmul.f32 %v2935, %v2910
        %v2951 = vmul.f32 %v2935, %v2911
        %v2952 = vmul.f32 %v2935, %v2912
        %v2953 = vmul.f32 %v2935, %v2913
        %v2954 = vmul.f32 %v2940, %v2914
        %v2955 = vmul.f32 %v2940, %v2915
        %v2956 = vmul.f32 %v2940, %v2916
        %v2957 = vmul.f32 %v2940, %v2917
        %v2958 = vadd.f32 %v2942, %v2946
        %v2959 = vadd.f32 %v2958, %v2950
        %v2960 = vadd.f32 %v2959, %v2954
        %v2961 = vrot.slane %v2960, 4
        %v2962 = vadd.f32 %v2960, %v2961
        %v2963 = vrot.slane %v2962, 2
        %v2964 = vadd.f32 %v2962, %v2963
        %v2965 = vrot.slane %v2964, 1
        %v2966 = vadd.f32 %v2964, %v2965
        %v2967 = vadd.f32 %v2943, %v2947
        %v2968 = vadd.f32 %v2967, %v2951
        %v2969 = vadd.f32 %v2968, %v2955
        %v2970 = vrot.slane %v2969, 4
        %v2971 = vadd.f32 %v2969, %v2970
        %v2972 = vrot.slane %v2971, 2
        %v2973 = vadd.f32 %v2971, %v2972
        %v2974 = vrot.slane %v2973, 1
        %v2975 = vadd.f32 %v2973, %v2974
        %v2976 = vadd.f32 %v2944, %v2948
        %v2977 = vadd.f32 %v2976, %v2952
        %v2978 = vadd.f32 %v2977, %v2956
        %v2979 = vrot.slane %v2978, 4
        %v2980 = vadd.f32 %v2978, %v2979
        %v2981 = vrot.slane %v2980, 2
        %v2982 = vadd.f32 %v2980, %v2981
        %v2983 = vrot.slane %v2982, 1
        %v2984 = vadd.f32 %v2982, %v2983
        %v2985 = vadd.f32 %v2945, %v2949
        %v2986 = vadd.f32 %v2985, %v2953
        %v2987 = vadd.f32 %v2986, %v2957
        %v2988 = vrot.slane %v2987, 4
        %v2989 = vadd.f32 %v2987, %v2988
        %v2990 = vrot.slane %v2989, 2
        %v2991 = vadd.f32 %v2989, %v2990
        %v2992 = vrot.slane %v2991, 1
        %v2993 = vadd.f32 %v2991, %v2992
        %v2994 = vld [vmem:[#allocation2] sm:$0x1]
        %2996 = vset.pattern.permute.xlu0 0
        %2997 = vperm.xlu0 %2996, %v2994
        %v2998 = vpop.permute.xlu0 %2997
        %v3000 = vlaneseq
        %v3001 = vshrl.u32 %v3000, 7
        %v3002 = vsub.s32 0, %v3001
        %v3003 = vrot.slane %v2998, %v3002
        %v3004 = vadd.f32 %v2966, %v3003
        %v3005 = vadd.f32 %v2975, %v3003
        %v3006 = vadd.f32 %v2984, %v3003
        %v3007 = vadd.f32 %v2993, %v3003
        %v3012 = vcombine.low %v3004, %v3005
        %v3013 = vcombine.low %v3006, %v3007
        %v3015 = vunpack.c.l.s4 1966171168
        %v3016 = vunpack.c.0.s8 %v3015
        %v3017 = vlaneseq
        %v3018 = vshrl.u32 %v3017, 7
        %v3019 = vsub.s32 %v3016, %v3018
        %v3020 = vrot.slane %v3012, %v3019
        %v3022 = vunpack.c.l.s4 1966171168
        %v3023 = vunpack.c.0.s8 %v3022
        %v3024 = vlaneseq
        %v3025 = vshrl.u32 %v3024, 7
        %v3026 = vsub.s32 %v3023, %v3025
        %v3027 = vrot.slane %v3013, %v3026
        %v3028 = vcombine.low %v3020, %v3027
        %v3030 = vunpack.c.l.s4 1966171168
        %v3031 = vunpack.c.0.s8 %v3030
        %v3032 = vlaneseq
        %v3033 = vshrl.u32 %v3032, 7
        %v3034 = vsub.s32 %v3031, %v3033
        %v3035 = vrot.slane %v3028, %v3034
        %3037 = vst.msk [vmem:[%s356 + $0xc] sm:$0xf] %vm1041, %v3035
        %s3038 = sand.u32 %s230, 1
        %s3039 = scalar_lea.sflag [#allocation5], %s3038
        %s3040 = sand.u32 %s230, 1
        %s3041 = smul.addr %s3040, 16
        %s3042 = scalar_lea.vmem [#allocation6], %s3041
        // Predicated region
        $region61: #{tpu_custom_call.1} parent=55 // pred_check
          %p3043 = pneg %p240
        $region62: #{tpu_custom_call.1} parent=55 // pred_check_branch
          %3045 = sbr.rel (%p3043) target = $region64
        $region63: #{tpu_custom_call.1} parent=55 // pred_region
          %s3046 = smul.u32 16, %s28
          %s3047 = ssub.s32 79, %s3046
          %p3048 = scmp.lt.s32.totalorder %s3047, 16
          %s3049 = scalar_select %p3048, %s3047, 16
          %s3050 = smul.u32 16, %s3049
          %s3052 = ssub.s32 256, %s3050
          %3053 = vsyncadd %s3039, %s3052
          %p3054 = scmp.ne.s32.totalorder 0, %s3050
          %s3055 = smul.addr %s3046, 16
          %s3056 = scalar_lea.hbm %s9, %s3055
          %s3057 = sshll.u32 %s3049, 4
          %s3058 = sshll.u32 %s3042, 4
          %s3059 = int_to_ptr.vmem [resolvable:$true] %s3058
          %3061 = dma.vmem_to_hbm [thread:$0]  (%p3054), %s3059, %s3057, %s3056, %s3039
        $region64: #{tpu_custom_call.1} parent=55 // pred_fallthru
          _
      $region56: #{tpu_custom_call.1} parent=5 // pred_fallthru
        _
      %p3062 = scmp.le.s32.totalorder 2, %s23
      // Predicated region
      $region65: #{tpu_custom_call.1} parent=5 // pred_check
        %p3063 = pneg %p3062
      $region66: #{tpu_custom_call.1} parent=5 // pred_check_branch
        %3065 = sbr.rel (%p3063) target = $region68
      $region67: #{tpu_custom_call.1} parent=5 // pred_region
        %s3066 = ssub.s32 %s23, 2
        // Predicated region
        $region69: #{tpu_custom_call.1} parent=67 // pred_check
          %p3067 = pneg %p246
        $region70: #{tpu_custom_call.1} parent=67 // pred_check_branch
          %3069 = sbr.rel (%p3067) target = $region72
        $region71: #{tpu_custom_call.1} parent=67 // pred_region
          %s3070 = sand.u32 %s231, 1
          %s3071 = scalar_lea.sflag [#allocation5], %s3070
          %s3072 = sand.u32 %s231, 1
          %s3073 = smul.addr %s3072, 16
          %s3074 = scalar_lea.vmem [#allocation6], %s3073
          %3075 = dma.done %s3071, 256
        $region72: #{tpu_custom_call.1} parent=67 // pred_fallthru
          _
      $region68: #{tpu_custom_call.1} parent=5 // pred_fallthru
        _
    $region6: #{tpu_custom_call.1} parent=1 // loop_footer
      %s27 = sadd.s32 1, %s23
    $region7: #{tpu_custom_call.1} parent=1 // loop_footer_branch
      %22 = sbr.rel target = $region3
    $region8: #{tpu_custom_call.1} parent=1 // loop_exit
      _
    %3076 = vsyncpa [#allocation4], 1
    %s3077 = scalar_lea.sflag [#allocation4], 1
    %3078 = vsyncpa %s3077, 1
    %3079 = vsyncpa [#allocation5], 1
    %s3080 = scalar_lea.sflag [#allocation5], 1
    %3081 = vsyncpa %s3080, 1

</llo_original>
